<compile_context>
chip_gen: v7x
topology: tpu7x:2x2x1
jax: 0.10.0
libtpu: 0.0.40
codegen_flags: <defaults>
</compile_context>

<pallas_src>
import math

import jax
import jax.numpy as jnp
from jax import lax
from jax.experimental import pallas as pl
from jax.experimental.pallas import tpu as pltpu


def _round_up(x, m):
    return (x + m - 1) // m * m


# -----------------------------------------------------------------------------
# Kernel
# -----------------------------------------------------------------------------
def _make_decoder_kernel(*, S, V, B, Hp, tile_v, n_layers):
    assert n_layers == 2, "kernel specialized to the module's n_layers = 2"
    f32 = jnp.float32
    bf16 = jnp.bfloat16

    def kernel(wi_ref,                                   # SMEM (B,) int32 token ids (scalar prefetch)
               emb_hbm,                                  # ANY  (V, Hp) f32 embedding table (HBM)
               enc_ref,                                  # VMEM (Bp, Sp, Hp) encoder outputs, batch-major
               h0_ref, c0_ref,                           # VMEM (L, Bp, Hp)
               waq_ref,                                  # VMEM (Hp, Hp)  == Wa^T (padded)
               w0_hbm, w1_hbm,                           # ANY  (3Hp,4Hp)/(2Hp,4Hp) stacked LSTM weights (HBM)
               b0_ref, b1_ref,                           # VMEM (1, 4Hp)
               wout_ref,                                 # VMEM (2Hp, tile_v) bf16, streamed over V
               bo_ref,                                   # VMEM (1, tile_v)
               logits_ref, lse_ref, hN_ref, cN_ref, attn_ref,            # outputs
               emb_buf, w0_buf, w1_buf, x0_s, x1_s, oc_s, m_s, l_s,      # scratch
               sem_e, sem_w):
        j = pl.program_id(0)

        @pl.when(j == 0)
        def _recurrent_step():
            # ---- kick off all HBM fetches so they overlap the attention math ----
            w0_cp = pltpu.make_async_copy(w0_hbm, w0_buf, sem_w.at[0])
            w1_cp = pltpu.make_async_copy(w1_hbm, w1_buf, sem_w.at[1])
            w0_cp.start()
            w1_cp.start()
            emb_cps = [
                pltpu.make_async_copy(emb_hbm.at[pl.ds(wi_ref[b], 1)],
                                      emb_buf.at[pl.ds(b, 1)],
                                      sem_e.at[b])
                for b in range(B)]                       # only the B real rows
            for cp in emb_cps:
                cp.start()
            # TODO(synk): nn.Dropout on the embedding and the inter-layer LSTM
            # dropout are identity here (inference-mode semantics).

            # ---- Attn('general') while the DMAs fly ----
            # energy[b,s] = h_top[b].(Wa enc[b,s] + ba); the h_top.ba term is
            # constant over s and cancels in the softmax -> dropped.
            enc = enc_ref[...]                                            # (Bp, Sp, Hp)
            h_top = h0_ref[n_layers - 1]                                  # (Bp, Hp)
            q = jnp.dot(h_top, waq_ref[...], preferred_element_type=f32)  # (Bp, Hp)
            en = jnp.sum(enc * q[:, None, :], axis=-1)                    # (Bp, Sp)
            smask = lax.broadcasted_iota(jnp.int32, en.shape, 1) < S
            en = jnp.where(smask, en, -1e30)                              # mask seq padding
            en_max = jnp.max(en, axis=-1, keepdims=True)                  # (Bp, 1)
            p = jnp.exp(en - en_max)
            denom = jnp.sum(p, axis=-1, keepdims=True)                    # (Bp, 1)
            alpha = p * pl.reciprocal(denom)                              # exact divide
            attn_ref[...] = alpha                                         # lane-dense (Bp, Sp)
            ctx = jnp.sum(alpha[:, :, None] * enc, axis=1)                # (Bp, Hp)

            # ---- 2-layer LSTM, one step (torch gate order i, f, g, o) ----
            def lstm_cell(gates, c_prev):
                i_g = jax.nn.sigmoid(gates[:, 0 * Hp:1 * Hp])
                f_g = jax.nn.sigmoid(gates[:, 1 * Hp:2 * Hp])
                g_g = jnp.tanh(gates[:, 2 * Hp:3 * Hp])
                o_g = jax.nn.sigmoid(gates[:, 3 * Hp:4 * Hp])
                c_new = f_g * c_prev + i_g * g_g
                return o_g * jnp.tanh(c_new), c_new

            for cp in emb_cps:
                cp.wait()
            emb = emb_buf[...]
            brow = lax.broadcasted_iota(jnp.int32, emb.shape, 0) < B
            emb = jnp.where(brow, emb, 0.0)               # padded batch rows -> 0
            x0_s[:, 0 * Hp:1 * Hp] = emb
            x0_s[:, 1 * Hp:2 * Hp] = ctx
            x0_s[:, 2 * Hp:3 * Hp] = h0_ref[0]

            w0_cp.wait()
            g0 = (jnp.dot(x0_s[...], w0_buf[...], preferred_element_type=f32)
                  + b0_ref[...])
            h1, c1 = lstm_cell(g0, c0_ref[0])
            hN_ref[0] = h1
            cN_ref[0] = c1

            x1_s[:, 0 * Hp:1 * Hp] = h1
            x1_s[:, 1 * Hp:2 * Hp] = h0_ref[1]
            w1_cp.wait()
            g1 = (jnp.dot(x1_s[...], w1_buf[...], preferred_element_type=f32)
                  + b1_ref[...])
            h2, c2 = lstm_cell(g1, c0_ref[1])
            hN_ref[1] = h2
            cN_ref[1] = c2

            # bf16 LHS for the vocab projection (matches the bf16 w_out stream)
            oc_s[:, :Hp] = h2.astype(bf16)
            oc_s[:, Hp:] = ctx.astype(bf16)

            # init online log-sum-exp accumulators
            m_s[...] = jnp.full(m_s.shape, -1e30, f32)
            l_s[...] = jnp.zeros(l_s.shape, f32)

        # ---- vocab-tiled output projection: runs on every grid step ----
        logits = (jnp.dot(oc_s[...], wout_ref[...], preferred_element_type=f32)
                  + bo_ref[...])                                          # (Bp, tile_v)
        col = j * tile_v + lax.broadcasted_iota(jnp.int32, logits.shape, 1)
        logits = jnp.where(col < V, logits, -1e30)                        # mask vocab padding
        logits_ref[...] = logits

        # online log-sum-exp across vocab tiles
        tile_max = jnp.max(logits, axis=-1, keepdims=True)                # (Bp, 1)
        m_prev = m_s[...]
        m_new = jnp.maximum(m_prev, tile_max)
        l_s[...] = (l_s[...] * jnp.exp(m_prev - m_new)
                    + jnp.sum(jnp.exp(logits - m_new), axis=-1, keepdims=True))
        m_s[...] = m_new

        @pl.when(j == pl.num_programs(0) - 1)
        def _finalize():
            lse_ref[...] = m_s[...] + jnp.log(l_s[...])

    return kernel


# -----------------------------------------------------------------------------
# One-time parameter preparation: pad / stack / cast into kernel layout
# -----------------------------------------------------------------------------
def prepare_kernel_params(params, tile_v=512):
    assert tile_v % 128 == 0
    V, H = params["emb"].shape
    Hp = _round_up(H, 128)
    Vp = _round_up(V, tile_v)

    def pad_to(x, shape):
        return jnp.pad(x, [(0, s - d) for d, s in zip(x.shape, shape)])

    def pad_gate_w(w):                         # (H, 4H) -> (Hp, 4Hp), per-gate padding
        out = jnp.zeros((Hp, 4 * Hp), jnp.float32)
        for g in range(4):
            out = out.at[:H, g * Hp:g * Hp + H].set(w[:, g * H:(g + 1) * H])
        return out

    def pad_gate_b(b):                         # (4H,) -> (1, 4Hp)
        out = jnp.zeros((1, 4 * Hp), jnp.float32)
        for g in range(4):
            out = out.at[0, g * Hp:g * Hp + H].set(b[g * H:(g + 1) * H])
        return out

    w_ih0 = params["w_ih0"]
    w_out = params["w_out"]
    # Stacked layouts -> one fused matmul per LSTM layer / vocab tile.
    w0_stack = jnp.concatenate([pad_gate_w(w_ih0[:H]),          # embedding half
                                pad_gate_w(w_ih0[H:]),          # context half
                                pad_gate_w(params["w_hh0"])], axis=0)   # (3Hp, 4Hp)
    w1_stack = jnp.concatenate([pad_gate_w(params["w_ih1"]),
                                pad_gate_w(params["w_hh1"])], axis=0)   # (2Hp, 4Hp)
    w_out_stack = jnp.concatenate([pad_to(w_out[:H], (Hp, Vp)),         # h half
                                   pad_to(w_out[H:], (Hp, Vp))], axis=0)  # (2Hp, Vp)
    return {
        "H": H, "Hp": Hp, "V": V, "Vp": Vp, "tile_v": tile_v,
        "emb": pad_to(params["emb"], (V, Hp)),             # row-gathered in-kernel, V unpadded
        "waq": pad_to(params["wa"].T, (Hp, Hp)),           # q = h_top @ Wa^T
        "w0": w0_stack,                                    # HBM-resident, DMA'd once
        "b0": pad_gate_b(params["b_ih0"] + params["b_hh0"]),
        "w1": w1_stack,
        "b1": pad_gate_b(params["b_ih1"] + params["b_hh1"]),
        "w_out": w_out_stack.astype(jnp.bfloat16),         # dominant HBM stream -> bf16
        "b_out": pad_to(params["b_out"][None, :], (1, Vp)),
    }


# -----------------------------------------------------------------------------
# Wrapper (one decoder step; mirrors BahdanauAttnDecoderRNN.forward)
# -----------------------------------------------------------------------------
def bahdanau_attn_decoder_step(word_input, last_hidden, encoder_outputs, kparams):
    h0, c0 = last_hidden
    L, B, H = h0.shape
    S = encoder_outputs.shape[0]
    assert L == 2 and H == kparams["H"]
    Hp, V, Vp, tile_v = kparams["Hp"], kparams["V"], kparams["Vp"], kparams["tile_v"]
    Bp = _round_up(B, 8)
    Sp = _round_up(S, 8)

    # Pad runtime activations to sublane/lane-aligned shapes.  Zero padding is
    # inert: padded weight rows/cols are zero and padded seq positions masked.
    wi = word_input.astype(jnp.int32)                                   # (B,)
    h0_p = jnp.zeros((L, Bp, Hp), jnp.float32).at[:, :B, :H].set(h0)
    c0_p = jnp.zeros((L, Bp, Hp), jnp.float32).at[:, :B, :H].set(c0)
    # batch-major encoder outputs -> lane-dense attention output, no in-kernel transpose
    enc_p = jnp.zeros((Bp, Sp, Hp), jnp.float32).at[:B, :S, :H].set(
        jnp.transpose(encoder_outputs, (1, 0, 2)))

    n_tiles = Vp // tile_v
    kernel = _make_decoder_kernel(S=S, V=V, B=B, Hp=Hp, tile_v=tile_v, n_layers=L)

    c2 = lambda j, wi_ref: (0, 0)
    c3 = lambda j, wi_ref: (0, 0, 0)
    vtile = lambda j, wi_ref: (0, j)

    grid_spec = pltpu.PrefetchScalarGridSpec(
        num_scalar_prefetch=1,
        grid=(n_tiles,),
        in_specs=[
            pl.BlockSpec(memory_space=pl.ANY),              # embedding table stays in HBM
            pl.BlockSpec((Bp, Sp, Hp), c3),                 # encoder outputs (batch-major)
            pl.BlockSpec((L, Bp, Hp), c3),                  # h0
            pl.BlockSpec((L, Bp, Hp), c3),                  # c0
            pl.BlockSpec((Hp, Hp), c2),                     # Wa^T
            pl.BlockSpec(memory_space=pl.ANY),              # stacked LSTM layer-0 weights (HBM)
            pl.BlockSpec(memory_space=pl.ANY),              # stacked LSTM layer-1 weights (HBM)
            pl.BlockSpec((1, 4 * Hp), c2),                  # b0
            pl.BlockSpec((1, 4 * Hp), c2),                  # b1
            pl.BlockSpec((2 * Hp, tile_v), vtile),          # stacked w_out (bf16), streamed over V
            pl.BlockSpec((1, tile_v), vtile),               # b_out
        ],
        out_specs=[
            pl.BlockSpec((Bp, tile_v), vtile),              # raw logits, lane-dense tiles
            pl.BlockSpec((Bp, 1), c2),                      # log-sum-exp
            pl.BlockSpec((L, Bp, Hp), c3),                  # new h
            pl.BlockSpec((L, Bp, Hp), c3),                  # new c
            pl.BlockSpec((Bp, Sp), c2),                     # attention weights (lane-dense)
        ],
        scratch_shapes=[
            pltpu.VMEM((Bp, Hp), jnp.float32),              # gathered embeddings
            pltpu.VMEM((3 * Hp, 4 * Hp), jnp.float32),      # LSTM layer-0 weights (single buffer)
            pltpu.VMEM((2 * Hp, 4 * Hp), jnp.float32),      # LSTM layer-1 weights (single buffer)
            pltpu.VMEM((Bp, 3 * Hp), jnp.float32),          # [emb | ctx | h0[0]]
            pltpu.VMEM((Bp, 2 * Hp), jnp.float32),          # [h1  | h0[1]]
            pltpu.VMEM((Bp, 2 * Hp), jnp.bfloat16),         # [h2  | ctx] bf16 LHS for vocab proj
            pltpu.VMEM((Bp, 1), jnp.float32),               # running max
            pltpu.VMEM((Bp, 1), jnp.float32),               # running sum-exp
            pltpu.SemaphoreType.DMA((B,)),                  # embedding row gathers
            pltpu.SemaphoreType.DMA((2,)),                  # LSTM weight fetches
        ],
    )

    out_shape = [
        jax.ShapeDtypeStruct((Bp, Vp), jnp.float32),
        jax.ShapeDtypeStruct((Bp, 1), jnp.float32),
        jax.ShapeDtypeStruct((L, Bp, Hp), jnp.float32),
        jax.ShapeDtypeStruct((L, Bp, Hp), jnp.float32),
        jax.ShapeDtypeStruct((Bp, Sp), jnp.float32),
    ]

    logits, lse, hN, cN, attn_bs = pl.pallas_call(
        kernel,
        grid_spec=grid_spec,
        out_shape=out_shape,
        compiler_params=pltpu.CompilerParams(
            dimension_semantics=("arbitrary",),   # scratch carry (online lse) across V tiles
            # 48 MiB fits v7x's 64 MiB VMEM per TC with headroom; can be raised
            # toward ~96 MiB on v5e/v6e (128 MiB physical) for larger tile_v.
            vmem_limit_bytes=48 * 1024 * 1024,
        ),
    )(wi, kparams["emb"], enc_p, h0_p, c0_p, kparams["waq"],
      kparams["w0"], kparams["w1"], kparams["b0"], kparams["b1"],
      kparams["w_out"], kparams["b_out"])

    # two-pass log-softmax finalization (tiny elementwise op) + unpad
    logp = (logits - lse)[:B, :V]
    output = logp[None, :, :]                                # (1, B, V)
    hidden = (hN[:, :B, :H], cN[:, :B, :H])                  # (L, B, H) each
    attn_weights = attn_bs[:B, :S][:, None, :]               # (B, 1, S)
    return output, hidden, attn_weights


# -----------------------------------------------------------------------------
# Logical (torch-layout-equivalent) params and pure-JAX reference
# -----------------------------------------------------------------------------
def init_params(key, H, V):
    ks = jax.random.split(key, 12)
    s = 1.0 / math.sqrt(H)

    def u(k, shape, scale):
        return jax.random.uniform(k, shape, jnp.float32, -scale, scale)

    return {
        "emb":   jax.random.normal(ks[0], (V, H), jnp.float32),
        "wa":    u(ks[1], (H, H), s),            # Attn('general') linear, (in, out)
        "ba":    u(ks[2], (H,), s),
        "w_ih0": u(ks[3], (2 * H, 4 * H), s),    # LSTM layer 0 (input 2H), (in, out)
        "w_hh0": u(ks[4], (H, 4 * H), s),
        "b_ih0": u(ks[5], (4 * H,), s),
        "b_hh0": u(ks[6], (4 * H,), s),
        "w_ih1": u(ks[7], (H, 4 * H), s),        # LSTM layer 1 (input H)
        "w_hh1": u(ks[8], (H, 4 * H), s),
        "b_ih1": u(ks[9], (4 * H,), s),
        "b_hh1": u(ks[10], (4 * H,), s),
        "w_out": u(ks[11], (2 * H, V), 1.0 / math.sqrt(2 * H)),
        "b_out": jnp.zeros((V,), jnp.float32),
    }


def reference_step(word_input, last_hidden, encoder_outputs, params):
    """Pure-JAX reference of the same forward pass (dropout = identity)."""
    h0, c0 = last_hidden
    H = h0.shape[-1]
    emb = params["emb"][word_input]                                  # (B, H)
    h_top = h0[-1]
    enc = jnp.transpose(encoder_outputs, (1, 0, 2))                  # (B, S, H)
    e = enc @ params["wa"] + params["ba"]
    energies = jnp.einsum("bh,bsh->bs", h_top, e)
    alpha = jax.nn.softmax(energies, axis=-1)
    context = jnp.einsum("bs,bsh->bh", alpha, enc)
    x = jnp.concatenate([emb, context], axis=-1)
    lstm = ((params["w_ih0"], params["w_hh0"], params["b_ih0"], params["b_hh0"]),
            (params["w_ih1"], params["w_hh1"], params["b_ih1"], params["b_hh1"]))
    hs, cs = [], []
    for l, (w_ih, w_hh, b_ih, b_hh) in enumerate(lstm):
        gates = x @ w_ih + h0[l] @ w_hh + b_ih + b_hh
        i = jax.nn.sigmoid(gates[:, :H])
        f = jax.nn.sigmoid(gates[:, H:2 * H])
        g = jnp.tanh(gates[:, 2 * H:3 * H])
        o = jax.nn.sigmoid(gates[:, 3 * H:])
        c = f * c0[l] + i * g
        h = o * jnp.tanh(c)
        hs.append(h)
        cs.append(c)
        x = h
    out_in = jnp.concatenate([x, context], axis=-1)
    logits = out_in @ params["w_out"] + params["b_out"]
    logp = jax.nn.log_softmax(logits, axis=-1)
    return logp[None], (jnp.stack(hs), jnp.stack(cs)), alpha[:, None, :]


if __name__ == "__main__":
    hidden = 64       # small stand-in for hidden_size = 500 (pads to 128)
    vocab = 600       # output_size (pads to 1024 -> 2 vocab tiles of 512)
    seq_len = 10
    batch = 2
    n_layers = 2

    key = jax.random.PRNGKey(0)
    k_par, k_w, k_h, k_c, k_e = jax.random.split(key, 5)
    params = init_params(k_par, hidden, vocab)
    kparams = prepare_kernel_params(params, tile_v=512)

    word_input = jax.random.randint(k_w, (batch,), 0, vocab, dtype=jnp.int32)
    h0 = jax.random.normal(k_h, (n_layers, batch, hidden), jnp.float32)
    c0 = jax.random.normal(k_c, (n_layers, batch, hidden), jnp.float32)
    encoder_outputs = jax.random.normal(
        k_e, (seq_len, batch, hidden), jnp.float32)

    out, (hN, cN), attn = bahdanau_attn_decoder_step(
        word_input, (h0, c0), encoder_outputs, kparams)
    jax.block_until_ready((out, hN, cN, attn))

    ref_out, (ref_h, ref_c), ref_attn = reference_step(
        word_input, (h0, c0), encoder_outputs, params)

    # h/c/attn are f32 end-to-end with an exact softmax divide; the log-probs
    # intentionally use a bf16 w_out stream (mem-bound optimization), so they
    # get a looser tolerance.
    tol_state = dict(atol=5e-3, rtol=5e-3)
    tol_logp = dict(atol=2e-2, rtol=2e-2)
    assert jnp.allclose(out, ref_out, **tol_logp), float(jnp.max(jnp.abs(out - ref_out)))
    assert jnp.allclose(hN, ref_h, **tol_state), float(jnp.max(jnp.abs(hN - ref_h)))
    assert jnp.allclose(cN, ref_c, **tol_state), float(jnp.max(jnp.abs(cN - ref_c)))
    assert jnp.allclose(attn, ref_attn, **tol_state), float(jnp.max(jnp.abs(attn - ref_attn)))

    print("KERNEL_OK")
</pallas_src>

<mosaic_0001>
module attributes {stable_mosaic.version = 11 : i64} {
  func.func @kernel(%arg0: i32, %arg1: memref<2xi32, #tpu.memory_space<smem>>, %arg2: memref<600x128xf32, #tpu.memory_space<any>>, %arg3: memref<8x16x128xf32, #tpu.memory_space<vmem>>, %arg4: memref<2x8x128xf32, #tpu.memory_space<vmem>>, %arg5: memref<2x8x128xf32, #tpu.memory_space<vmem>>, %arg6: memref<128x128xf32, #tpu.memory_space<vmem>>, %arg7: memref<384x512xf32, #tpu.memory_space<any>>, %arg8: memref<256x512xf32, #tpu.memory_space<any>>, %arg9: memref<1x512xf32, #tpu.memory_space<vmem>>, %arg10: memref<1x512xf32, #tpu.memory_space<vmem>>, %arg11: memref<256x512xbf16, #tpu.memory_space<vmem>>, %arg12: memref<1x512xf32, #tpu.memory_space<vmem>>, %arg13: memref<8x512xf32, #tpu.memory_space<vmem>>, %arg14: memref<8x1xf32, #tpu.memory_space<vmem>>, %arg15: memref<2x8x128xf32, #tpu.memory_space<vmem>>, %arg16: memref<2x8x128xf32, #tpu.memory_space<vmem>>, %arg17: memref<8x16xf32, #tpu.memory_space<vmem>>, %arg18: memref<8x128xf32, #tpu.memory_space<vmem>>, %arg19: memref<384x512xf32, #tpu.memory_space<vmem>>, %arg20: memref<256x512xf32, #tpu.memory_space<vmem>>, %arg21: memref<8x384xf32, #tpu.memory_space<vmem>>, %arg22: memref<8x256xf32, #tpu.memory_space<vmem>>, %arg23: memref<8x256xbf16, #tpu.memory_space<vmem>>, %arg24: memref<8x1xf32, #tpu.memory_space<vmem>>, %arg25: memref<8x1xf32, #tpu.memory_space<vmem>>, %arg26: memref<2x!tpu.dma_semaphore, #tpu.memory_space<semaphore_mem>>, %arg27: memref<2x!tpu.dma_semaphore, #tpu.memory_space<semaphore_mem>>) attributes {dimension_semantics = [#tpu.dimension_semantics<arbitrary>], iteration_bounds = array<i64: 2>, scalar_prefetch = 1 : i64, scratch_operands = 10 : i64, tpu.core_type = #tpu.core_type<tc>, window_params = [{}, {pipeline_mode = #tpu.pipeline_mode<synchronous>, transform_indices = @transform_1, window_bounds = array<i64: 8, 16, 128>}, {pipeline_mode = #tpu.pipeline_mode<synchronous>, transform_indices = @transform_2, window_bounds = array<i64: 2, 8, 128>}, {pipeline_mode = #tpu.pipeline_mode<synchronous>, transform_indices = @transform_3, window_bounds = array<i64: 2, 8, 128>}, {pipeline_mode = #tpu.pipeline_mode<synchronous>, transform_indices = @transform_4, window_bounds = array<i64: 128, 128>}, {}, {}, {pipeline_mode = #tpu.pipeline_mode<synchronous>, transform_indices = @transform_7, window_bounds = array<i64: 1, 512>}, {pipeline_mode = #tpu.pipeline_mode<synchronous>, transform_indices = @transform_8, window_bounds = array<i64: 1, 512>}, {transform_indices = @transform_9, window_bounds = array<i64: 256, 512>}, {transform_indices = @transform_10, window_bounds = array<i64: 1, 512>}, {transform_indices = @transform_11, window_bounds = array<i64: 8, 512>}, {pipeline_mode = #tpu.pipeline_mode<synchronous>, transform_indices = @transform_12, window_bounds = array<i64: 8, 1>}, {pipeline_mode = #tpu.pipeline_mode<synchronous>, transform_indices = @transform_13, window_bounds = array<i64: 2, 8, 128>}, {pipeline_mode = #tpu.pipeline_mode<synchronous>, transform_indices = @transform_14, window_bounds = array<i64: 2, 8, 128>}, {pipeline_mode = #tpu.pipeline_mode<synchronous>, transform_indices = @transform_15, window_bounds = array<i64: 8, 16>}]} {
    %c0_i32 = arith.constant 0 : i32
    %0 = arith.cmpi eq, %arg0, %c0_i32 : i32
    %1 = arith.extui %0 : i1 to i32
    %c0_i32_0 = arith.constant 0 : i32
    %2 = arith.cmpi ne, %1, %c0_i32_0 : i32
    scf.if %2 {
      %c0_i32_20 = arith.constant 0 : i32
      %37 = tpu.memref_slice %arg27[%c0_i32_20] : memref<2x!tpu.dma_semaphore, #tpu.memory_space<semaphore_mem>> -> memref<1x!tpu.dma_semaphore, #tpu.memory_space<semaphore_mem>>
      %38 = tpu.memref_squeeze %37 : memref<1x!tpu.dma_semaphore, #tpu.memory_space<semaphore_mem>> -> memref<!tpu.dma_semaphore, #tpu.memory_space<semaphore_mem>>
      tpu.enqueue_dma source(%arg7 : memref<384x512xf32, #tpu.memory_space<any>>) target(%arg19 : memref<384x512xf32, #tpu.memory_space<vmem>>) target_semaphore(%38 : memref<!tpu.dma_semaphore, #tpu.memory_space<semaphore_mem>>)
      %c1_i32_21 = arith.constant 1 : i32
      %39 = tpu.memref_slice %arg27[%c1_i32_21] : memref<2x!tpu.dma_semaphore, #tpu.memory_space<semaphore_mem>> -> memref<1x!tpu.dma_semaphore, #tpu.memory_space<semaphore_mem>>
      %40 = tpu.memref_squeeze %39 : memref<1x!tpu.dma_semaphore, #tpu.memory_space<semaphore_mem>> -> memref<!tpu.dma_semaphore, #tpu.memory_space<semaphore_mem>>
      tpu.enqueue_dma source(%arg8 : memref<256x512xf32, #tpu.memory_space<any>>) target(%arg20 : memref<256x512xf32, #tpu.memory_space<vmem>>) target_semaphore(%40 : memref<!tpu.dma_semaphore, #tpu.memory_space<semaphore_mem>>)
      %c0_22 = arith.constant 0 : index
      %41 = memref.load %arg1[%c0_22] : memref<2xi32, #tpu.memory_space<smem>>
      %c1 = arith.constant 1 : index
      %42 = memref.load %arg1[%c1] : memref<2xi32, #tpu.memory_space<smem>>
      %c0_i32_23 = arith.constant 0 : i32
      %c0_i32_24 = arith.constant 0 : i32
      %43 = tpu.memref_slice %arg2[%41, %c0_i32_24] : memref<600x128xf32, #tpu.memory_space<any>> -> memref<1x128xf32, #tpu.memory_space<any>>
      %c0_i32_25 = arith.constant 0 : i32
      %c0_i32_26 = arith.constant 0 : i32
      %44 = tpu.memref_slice %arg18[%c0_i32_25, %c0_i32_26] : memref<8x128xf32, #tpu.memory_space<vmem>> -> memref<1x128xf32, #tpu.memory_space<vmem>>
      %45 = tpu.memref_slice %arg26[%c0_i32_23] : memref<2x!tpu.dma_semaphore, #tpu.memory_space<semaphore_mem>> -> memref<1x!tpu.dma_semaphore, #tpu.memory_space<semaphore_mem>>
      %46 = tpu.memref_squeeze %45 : memref<1x!tpu.dma_semaphore, #tpu.memory_space<semaphore_mem>> -> memref<!tpu.dma_semaphore, #tpu.memory_space<semaphore_mem>>
      tpu.enqueue_dma source(%43 : memref<1x128xf32, #tpu.memory_space<any>>) target(%44 : memref<1x128xf32, #tpu.memory_space<vmem>>) target_semaphore(%46 : memref<!tpu.dma_semaphore, #tpu.memory_space<semaphore_mem>>)
      %c1_i32_27 = arith.constant 1 : i32
      %c0_i32_28 = arith.constant 0 : i32
      %47 = tpu.memref_slice %arg2[%42, %c0_i32_28] : memref<600x128xf32, #tpu.memory_space<any>> -> memref<1x128xf32, #tpu.memory_space<any>>
      %c1_i32_29 = arith.constant 1 : i32
      %c0_i32_30 = arith.constant 0 : i32
      %48 = tpu.memref_slice %arg18[%c1_i32_29, %c0_i32_30] : memref<8x128xf32, #tpu.memory_space<vmem>> -> memref<1x128xf32, #tpu.memory_space<vmem>>
      %49 = tpu.memref_slice %arg26[%c1_i32_27] : memref<2x!tpu.dma_semaphore, #tpu.memory_space<semaphore_mem>> -> memref<1x!tpu.dma_semaphore, #tpu.memory_space<semaphore_mem>>
      %50 = tpu.memref_squeeze %49 : memref<1x!tpu.dma_semaphore, #tpu.memory_space<semaphore_mem>> -> memref<!tpu.dma_semaphore, #tpu.memory_space<semaphore_mem>>
      tpu.enqueue_dma source(%47 : memref<1x128xf32, #tpu.memory_space<any>>) target(%48 : memref<1x128xf32, #tpu.memory_space<vmem>>) target_semaphore(%50 : memref<!tpu.dma_semaphore, #tpu.memory_space<semaphore_mem>>)
      %c0_31 = arith.constant 0 : index
      %c0_32 = arith.constant 0 : index
      %c0_33 = arith.constant 0 : index
      %51 = vector.load %arg3[%c0_31, %c0_32, %c0_33] : memref<8x16x128xf32, #tpu.memory_space<vmem>>, vector<8x16x128xf32>
      %c1_34 = arith.constant 1 : index
      %c0_35 = arith.constant 0 : index
      %c0_36 = arith.constant 0 : index
      %52 = vector.load %arg4[%c1_34, %c0_35, %c0_36] : memref<2x8x128xf32, #tpu.memory_space<vmem>>, vector<1x8x128xf32>
      %53 = vector.shape_cast %52 : vector<1x8x128xf32> to vector<8x128xf32>
      %c0_37 = arith.constant 0 : index
      %c0_38 = arith.constant 0 : index
      %54 = vector.load %arg6[%c0_37, %c0_38] : memref<128x128xf32, #tpu.memory_space<vmem>>, vector<128x128xf32>
      %cst_39 = arith.constant dense<0.000000e+00> : vector<8x128xf32>
      %55 = tpu.matmul %53, %54, %cst_39 {dimension_numbers = #tpu.dot_dimension_numbers<[1], [0], [0], [1], [0, 0, 1, 1], [], []>} : vector<8x128xf32>, vector<128x128xf32>, vector<8x128xf32> -> vector<8x128xf32>
      %56 = vector.shape_cast %55 : vector<8x128xf32> to vector<8x1x128xf32>
      %57 = vector.broadcast %56 : vector<8x1x128xf32> to vector<8x16x128xf32>
      %58 = arith.mulf %51, %57 : vector<8x16x128xf32>
      %cst_40 = arith.constant dense<0.000000e+00> : vector<8x16xf32>
      %59 = vector.multi_reduction <add>, %58, %cst_40 [2] : vector<8x16x128xf32> to vector<8x16xf32>
      %60 = tpu.iota {dimensions = array<i32: 1>} : vector<8x16xi32>
      %c10_i32 = arith.constant 10 : i32
      %61 = vector.broadcast %c10_i32 : i32 to vector<8x16xi32>
      %62 = arith.cmpi slt, %60, %61 : vector<8x16xi32>
      %cst_41 = arith.constant -1.000000e+30 : f32
      %63 = vector.broadcast %cst_41 : f32 to vector<8x16xf32>
      %64 = arith.select %62, %59, %63 : vector<8x16xi1>, vector<8x16xf32>
      %cst_42 = arith.constant dense<0xFF800000> : vector<8xf32>
      %65 = vector.multi_reduction <maximumf>, %64, %cst_42 [1] : vector<8x16xf32> to vector<8xf32>
      %66 = vector.shape_cast %65 : vector<8xf32> to vector<8x1xf32>
      %67 = vector.broadcast %66 : vector<8x1xf32> to vector<8x16xf32>
      %68 = arith.subf %64, %67 : vector<8x16xf32>
      %69 = math.exp %68 : vector<8x16xf32>
      %cst_43 = arith.constant dense<0.000000e+00> : vector<8xf32>
      %70 = vector.multi_reduction <add>, %69, %cst_43 [1] : vector<8x16xf32> to vector<8xf32>
      %71 = vector.shape_cast %70 : vector<8xf32> to vector<8x1xf32>
      %72 = tpu.reciprocal %71 : vector<8x1xf32> -> vector<8x1xf32>
      %73 = vector.broadcast %72 : vector<8x1xf32> to vector<8x16xf32>
      %74 = arith.mulf %69, %73 : vector<8x16xf32>
      %c0_44 = arith.constant 0 : index
      %c0_45 = arith.constant 0 : index
      %75 = vector.load %arg17[%c0_44, %c0_45] : memref<8x16xf32, #tpu.memory_space<vmem>>, vector<8x16xf32>
      tpu.vector_store %arg17[%c0_44, %c0_45], %74 {strides = array<i32>} : memref<8x16xf32, #tpu.memory_space<vmem>>, vector<8x16xf32>,
      %76 = vector.shape_cast %74 : vector<8x16xf32> to vector<8x16x1xf32>
      %77 = vector.broadcast %76 : vector<8x16x1xf32> to vector<8x16x128xf32>
      %78 = arith.mulf %77, %51 : vector<8x16x128xf32>
      %cst_46 = arith.constant dense<0.000000e+00> : vector<8x128xf32>
      %79 = vector.multi_reduction <add>, %78, %cst_46 [1] : vector<8x16x128xf32> to vector<8x128xf32>
      %c0_i32_47 = arith.constant 0 : i32
      %c0_i32_48 = arith.constant 0 : i32
      %80 = tpu.memref_slice %arg2[%41, %c0_i32_48] : memref<600x128xf32, #tpu.memory_space<any>> -> memref<1x128xf32, #tpu.memory_space<any>>
      %c0_i32_49 = arith.constant 0 : i32
      %c0_i32_50 = arith.constant 0 : i32
      %81 = tpu.memref_slice %arg18[%c0_i32_49, %c0_i32_50] : memref<8x128xf32, #tpu.memory_space<vmem>> -> memref<1x128xf32, #tpu.memory_space<vmem>>
      %82 = tpu.memref_slice %arg26[%c0_i32_47] : memref<2x!tpu.dma_semaphore, #tpu.memory_space<semaphore_mem>> -> memref<1x!tpu.dma_semaphore, #tpu.memory_space<semaphore_mem>>
      %83 = tpu.memref_squeeze %82 : memref<1x!tpu.dma_semaphore, #tpu.memory_space<semaphore_mem>> -> memref<!tpu.dma_semaphore, #tpu.memory_space<semaphore_mem>>
      tpu.wait_dma2 semaphore(%83 : memref<!tpu.dma_semaphore, #tpu.memory_space<semaphore_mem>>) src(%80 : memref<1x128xf32, #tpu.memory_space<any>>) dst(%81 : memref<1x128xf32, #tpu.memory_space<vmem>>)
      %c1_i32_51 = arith.constant 1 : i32
      %c0_i32_52 = arith.constant 0 : i32
      %84 = tpu.memref_slice %arg2[%42, %c0_i32_52] : memref<600x128xf32, #tpu.memory_space<any>> -> memref<1x128xf32, #tpu.memory_space<any>>
      %c1_i32_53 = arith.constant 1 : i32
      %c0_i32_54 = arith.constant 0 : i32
      %85 = tpu.memref_slice %arg18[%c1_i32_53, %c0_i32_54] : memref<8x128xf32, #tpu.memory_space<vmem>> -> memref<1x128xf32, #tpu.memory_space<vmem>>
      %86 = tpu.memref_slice %arg26[%c1_i32_51] : memref<2x!tpu.dma_semaphore, #tpu.memory_space<semaphore_mem>> -> memref<1x!tpu.dma_semaphore, #tpu.memory_space<semaphore_mem>>
      %87 = tpu.memref_squeeze %86 : memref<1x!tpu.dma_semaphore, #tpu.memory_space<semaphore_mem>> -> memref<!tpu.dma_semaphore, #tpu.memory_space<semaphore_mem>>
      tpu.wait_dma2 semaphore(%87 : memref<!tpu.dma_semaphore, #tpu.memory_space<semaphore_mem>>) src(%84 : memref<1x128xf32, #tpu.memory_space<any>>) dst(%85 : memref<1x128xf32, #tpu.memory_space<vmem>>)
      %c0_55 = arith.constant 0 : index
      %c0_56 = arith.constant 0 : index
      %88 = vector.load %arg18[%c0_55, %c0_56] : memref<8x128xf32, #tpu.memory_space<vmem>>, vector<8x128xf32>
      %89 = tpu.iota {dimensions = array<i32: 0>} : vector<8x128xi32>
      %c2_i32 = arith.constant 2 : i32
      %90 = vector.broadcast %c2_i32 : i32 to vector<8x128xi32>
      %91 = arith.cmpi slt, %89, %90 : vector<8x128xi32>
      %cst_57 = arith.constant 0.000000e+00 : f32
      %92 = vector.broadcast %cst_57 : f32 to vector<8x128xf32>
      %93 = arith.select %91, %88, %92 : vector<8x128xi1>, vector<8x128xf32>
      %c0_58 = arith.constant 0 : index
      %c0_59 = arith.constant 0 : index
      %94 = vector.load %arg21[%c0_58, %c0_59] : memref<8x384xf32, #tpu.memory_space<vmem>>, vector<8x128xf32>
      tpu.vector_store %arg21[%c0_58, %c0_59], %93 {strides = array<i32>} : memref<8x384xf32, #tpu.memory_space<vmem>>, vector<8x128xf32>,
      %c0_60 = arith.constant 0 : index
      %c128 = arith.constant 128 : index
      %95 = vector.load %arg21[%c0_60, %c128] : memref<8x384xf32, #tpu.memory_space<vmem>>, vector<8x128xf32>
      tpu.vector_store %arg21[%c0_60, %c128], %79 {strides = array<i32>} : memref<8x384xf32, #tpu.memory_space<vmem>>, vector<8x128xf32>,
      %c0_61 = arith.constant 0 : index
      %c0_62 = arith.constant 0 : index
      %c0_63 = arith.constant 0 : index
      %96 = vector.load %arg4[%c0_61, %c0_62, %c0_63] : memref<2x8x128xf32, #tpu.memory_space<vmem>>, vector<1x8x128xf32>
      %97 = vector.shape_cast %96 : vector<1x8x128xf32> to vector<8x128xf32>
      %c0_64 = arith.constant 0 : index
      %c256 = arith.constant 256 : index
      %98 = vector.load %arg21[%c0_64, %c256] : memref<8x384xf32, #tpu.memory_space<vmem>>, vector<8x128xf32>
      tpu.vector_store %arg21[%c0_64, %c256], %97 {strides = array<i32>} : memref<8x384xf32, #tpu.memory_space<vmem>>, vector<8x128xf32>,
      %c0_i32_65 = arith.constant 0 : i32
      %99 = tpu.memref_slice %arg27[%c0_i32_65] : memref<2x!tpu.dma_semaphore, #tpu.memory_space<semaphore_mem>> -> memref<1x!tpu.dma_semaphore, #tpu.memory_space<semaphore_mem>>
      %100 = tpu.memref_squeeze %99 : memref<1x!tpu.dma_semaphore, #tpu.memory_space<semaphore_mem>> -> memref<!tpu.dma_semaphore, #tpu.memory_space<semaphore_mem>>
      tpu.wait_dma2 semaphore(%100 : memref<!tpu.dma_semaphore, #tpu.memory_space<semaphore_mem>>) src(%arg7 : memref<384x512xf32, #tpu.memory_space<any>>) dst(%arg19 : memref<384x512xf32, #tpu.memory_space<vmem>>)
      %c0_66 = arith.constant 0 : index
      %c0_67 = arith.constant 0 : index
      %101 = vector.load %arg21[%c0_66, %c0_67] : memref<8x384xf32, #tpu.memory_space<vmem>>, vector<8x384xf32>
      %c0_68 = arith.constant 0 : index
      %c0_69 = arith.constant 0 : index
      %102 = vector.load %arg19[%c0_68, %c0_69] : memref<384x512xf32, #tpu.memory_space<vmem>>, vector<384x512xf32>
      %cst_70 = arith.constant dense<0.000000e+00> : vector<8x512xf32>
      %103 = tpu.matmul %101, %102, %cst_70 {dimension_numbers = #tpu.dot_dimension_numbers<[1], [0], [0], [1], [0, 0, 1, 1], [], []>} : vector<8x384xf32>, vector<384x512xf32>, vector<8x512xf32> -> vector<8x512xf32>
      %c0_71 = arith.constant 0 : index
      %c0_72 = arith.constant 0 : index
      %104 = vector.load %arg9[%c0_71, %c0_72] : memref<1x512xf32, #tpu.memory_space<vmem>>, vector<1x512xf32>
      %105 = vector.broadcast %104 : vector<1x512xf32> to vector<8x512xf32>
      %106 = arith.addf %103, %105 : vector<8x512xf32>
      %c0_73 = arith.constant 0 : index
      %c0_74 = arith.constant 0 : index
      %c0_75 = arith.constant 0 : index
      %107 = vector.load %arg5[%c0_73, %c0_74, %c0_75] : memref<2x8x128xf32, #tpu.memory_space<vmem>>, vector<1x8x128xf32>
      %108 = vector.shape_cast %107 : vector<1x8x128xf32> to vector<8x128xf32>
      %109 = vector.extract_strided_slice %106 {offsets = [0, 0], sizes = [8, 128], strides = [1, 1]} : vector<8x512xf32> to vector<8x128xf32>
      %110 = arith.negf %109 : vector<8x128xf32>
      %111 = math.exp %110 : vector<8x128xf32>
      %cst_76 = arith.constant 1.000000e+00 : f32
      %112 = vector.broadcast %cst_76 : f32 to vector<8x128xf32>
      %113 = arith.addf %112, %111 : vector<8x128xf32>
      %114 = arith.divf %112, %113 : vector<8x128xf32>
      %115 = vector.extract_strided_slice %106 {offsets = [0, 128], sizes = [8, 128], strides = [1, 1]} : vector<8x512xf32> to vector<8x128xf32>
      %116 = arith.negf %115 : vector<8x128xf32>
      %117 = math.exp %116 : vector<8x128xf32>
      %cst_77 = arith.constant 1.000000e+00 : f32
      %118 = vector.broadcast %cst_77 : f32 to vector<8x128xf32>
      %119 = arith.addf %118, %117 : vector<8x128xf32>
      %120 = arith.divf %118, %119 : vector<8x128xf32>
      %121 = vector.extract_strided_slice %106 {offsets = [0, 256], sizes = [8, 128], strides = [1, 1]} : vector<8x512xf32> to vector<8x128xf32>
      %122 = math.tanh %121 : vector<8x128xf32>
      %123 = vector.extract_strided_slice %106 {offsets = [0, 384], sizes = [8, 128], strides = [1, 1]} : vector<8x512xf32> to vector<8x128xf32>
      %124 = arith.negf %123 : vector<8x128xf32>
      %125 = math.exp %124 : vector<8x128xf32>
      %cst_78 = arith.constant 1.000000e+00 : f32
      %126 = vector.broadcast %cst_78 : f32 to vector<8x128xf32>
      %127 = arith.addf %126, %125 : vector<8x128xf32>
      %128 = arith.divf %126, %127 : vector<8x128xf32>
      %129 = arith.mulf %120, %108 : vector<8x128xf32>
      %130 = arith.mulf %114, %122 : vector<8x128xf32>
      %131 = arith.addf %129, %130 : vector<8x128xf32>
      %132 = math.tanh %131 : vector<8x128xf32>
      %133 = arith.mulf %128, %132 : vector<8x128xf32>
      %c0_79 = arith.constant 0 : index
      %c0_80 = arith.constant 0 : index
      %c0_81 = arith.constant 0 : index
      %134 = vector.load %arg15[%c0_79, %c0_80, %c0_81] : memref<2x8x128xf32, #tpu.memory_space<vmem>>, vector<1x8x128xf32>
      %135 = vector.shape_cast %134 : vector<1x8x128xf32> to vector<8x128xf32>
      %136 = vector.shape_cast %133 : vector<8x128xf32> to vector<1x8x128xf32>
      tpu.vector_store %arg15[%c0_79, %c0_80, %c0_81], %136 {strides = array<i32>} : memref<2x8x128xf32, #tpu.memory_space<vmem>>, vector<1x8x128xf32>,
      %c0_82 = arith.constant 0 : index
      %c0_83 = arith.constant 0 : index
      %c0_84 = arith.constant 0 : index
      %137 = vector.load %arg16[%c0_82, %c0_83, %c0_84] : memref<2x8x128xf32, #tpu.memory_space<vmem>>, vector<1x8x128xf32>
      %138 = vector.shape_cast %137 : vector<1x8x128xf32> to vector<8x128xf32>
      %139 = vector.shape_cast %131 : vector<8x128xf32> to vector<1x8x128xf32>
      tpu.vector_store %arg16[%c0_82, %c0_83, %c0_84], %139 {strides = array<i32>} : memref<2x8x128xf32, #tpu.memory_space<vmem>>, vector<1x8x128xf32>,
      %c0_85 = arith.constant 0 : index
      %c0_86 = arith.constant 0 : index
      %140 = vector.load %arg22[%c0_85, %c0_86] : memref<8x256xf32, #tpu.memory_space<vmem>>, vector<8x128xf32>
      tpu.vector_store %arg22[%c0_85, %c0_86], %133 {strides = array<i32>} : memref<8x256xf32, #tpu.memory_space<vmem>>, vector<8x128xf32>,
      %c1_87 = arith.constant 1 : index
      %c0_88 = arith.constant 0 : index
      %c0_89 = arith.constant 0 : index
      %141 = vector.load %arg4[%c1_87, %c0_88, %c0_89] : memref<2x8x128xf32, #tpu.memory_space<vmem>>, vector<1x8x128xf32>
      %142 = vector.shape_cast %141 : vector<1x8x128xf32> to vector<8x128xf32>
      %c0_90 = arith.constant 0 : index
      %c128_91 = arith.constant 128 : index
      %143 = vector.load %arg22[%c0_90, %c128_91] : memref<8x256xf32, #tpu.memory_space<vmem>>, vector<8x128xf32>
      tpu.vector_store %arg22[%c0_90, %c128_91], %142 {strides = array<i32>} : memref<8x256xf32, #tpu.memory_space<vmem>>, vector<8x128xf32>,
      %c1_i32_92 = arith.constant 1 : i32
      %144 = tpu.memref_slice %arg27[%c1_i32_92] : memref<2x!tpu.dma_semaphore, #tpu.memory_space<semaphore_mem>> -> memref<1x!tpu.dma_semaphore, #tpu.memory_space<semaphore_mem>>
      %145 = tpu.memref_squeeze %144 : memref<1x!tpu.dma_semaphore, #tpu.memory_space<semaphore_mem>> -> memref<!tpu.dma_semaphore, #tpu.memory_space<semaphore_mem>>
      tpu.wait_dma2 semaphore(%145 : memref<!tpu.dma_semaphore, #tpu.memory_space<semaphore_mem>>) src(%arg8 : memref<256x512xf32, #tpu.memory_space<any>>) dst(%arg20 : memref<256x512xf32, #tpu.memory_space<vmem>>)
      %c0_93 = arith.constant 0 : index
      %c0_94 = arith.constant 0 : index
      %146 = vector.load %arg22[%c0_93, %c0_94] : memref<8x256xf32, #tpu.memory_space<vmem>>, vector<8x256xf32>
      %c0_95 = arith.constant 0 : index
      %c0_96 = arith.constant 0 : index
      %147 = vector.load %arg20[%c0_95, %c0_96] : memref<256x512xf32, #tpu.memory_space<vmem>>, vector<256x512xf32>
      %cst_97 = arith.constant dense<0.000000e+00> : vector<8x512xf32>
      %148 = tpu.matmul %146, %147, %cst_97 {dimension_numbers = #tpu.dot_dimension_numbers<[1], [0], [0], [1], [0, 0, 1, 1], [], []>} : vector<8x256xf32>, vector<256x512xf32>, vector<8x512xf32> -> vector<8x512xf32>
      %c0_98 = arith.constant 0 : index
      %c0_99 = arith.constant 0 : index
      %149 = vector.load %arg10[%c0_98, %c0_99] : memref<1x512xf32, #tpu.memory_space<vmem>>, vector<1x512xf32>
      %150 = vector.broadcast %149 : vector<1x512xf32> to vector<8x512xf32>
      %151 = arith.addf %148, %150 : vector<8x512xf32>
      %c1_100 = arith.constant 1 : index
      %c0_101 = arith.constant 0 : index
      %c0_102 = arith.constant 0 : index
      %152 = vector.load %arg5[%c1_100, %c0_101, %c0_102] : memref<2x8x128xf32, #tpu.memory_space<vmem>>, vector<1x8x128xf32>
      %153 = vector.shape_cast %152 : vector<1x8x128xf32> to vector<8x128xf32>
      %154 = vector.extract_strided_slice %151 {offsets = [0, 0], sizes = [8, 128], strides = [1, 1]} : vector<8x512xf32> to vector<8x128xf32>
      %155 = arith.negf %154 : vector<8x128xf32>
      %156 = math.exp %155 : vector<8x128xf32>
      %cst_103 = arith.constant 1.000000e+00 : f32
      %157 = vector.broadcast %cst_103 : f32 to vector<8x128xf32>
      %158 = arith.addf %157, %156 : vector<8x128xf32>
      %159 = arith.divf %157, %158 : vector<8x128xf32>
      %160 = vector.extract_strided_slice %151 {offsets = [0, 128], sizes = [8, 128], strides = [1, 1]} : vector<8x512xf32> to vector<8x128xf32>
      %161 = arith.negf %160 : vector<8x128xf32>
      %162 = math.exp %161 : vector<8x128xf32>
      %cst_104 = arith.constant 1.000000e+00 : f32
      %163 = vector.broadcast %cst_104 : f32 to vector<8x128xf32>
      %164 = arith.addf %163, %162 : vector<8x128xf32>
      %165 = arith.divf %163, %164 : vector<8x128xf32>
      %166 = vector.extract_strided_slice %151 {offsets = [0, 256], sizes = [8, 128], strides = [1, 1]} : vector<8x512xf32> to vector<8x128xf32>
      %167 = math.tanh %166 : vector<8x128xf32>
      %168 = vector.extract_strided_slice %151 {offsets = [0, 384], sizes = [8, 128], strides = [1, 1]} : vector<8x512xf32> to vector<8x128xf32>
      %169 = arith.negf %168 : vector<8x128xf32>
      %170 = math.exp %169 : vector<8x128xf32>
      %cst_105 = arith.constant 1.000000e+00 : f32
      %171 = vector.broadcast %cst_105 : f32 to vector<8x128xf32>
      %172 = arith.addf %171, %170 : vector<8x128xf32>
      %173 = arith.divf %171, %172 : vector<8x128xf32>
      %174 = arith.mulf %165, %153 : vector<8x128xf32>
      %175 = arith.mulf %159, %167 : vector<8x128xf32>
      %176 = arith.addf %174, %175 : vector<8x128xf32>
      %177 = math.tanh %176 : vector<8x128xf32>
      %178 = arith.mulf %173, %177 : vector<8x128xf32>
      %c1_106 = arith.constant 1 : index
      %c0_107 = arith.constant 0 : index
      %c0_108 = arith.constant 0 : index
      %179 = vector.load %arg15[%c1_106, %c0_107, %c0_108] : memref<2x8x128xf32, #tpu.memory_space<vmem>>, vector<1x8x128xf32>
      %180 = vector.shape_cast %179 : vector<1x8x128xf32> to vector<8x128xf32>
      %181 = vector.shape_cast %178 : vector<8x128xf32> to vector<1x8x128xf32>
      tpu.vector_store %arg15[%c1_106, %c0_107, %c0_108], %181 {strides = array<i32>} : memref<2x8x128xf32, #tpu.memory_space<vmem>>, vector<1x8x128xf32>,
      %c1_109 = arith.constant 1 : index
      %c0_110 = arith.constant 0 : index
      %c0_111 = arith.constant 0 : index
      %182 = vector.load %arg16[%c1_109, %c0_110, %c0_111] : memref<2x8x128xf32, #tpu.memory_space<vmem>>, vector<1x8x128xf32>
      %183 = vector.shape_cast %182 : vector<1x8x128xf32> to vector<8x128xf32>
      %184 = vector.shape_cast %176 : vector<8x128xf32> to vector<1x8x128xf32>
      tpu.vector_store %arg16[%c1_109, %c0_110, %c0_111], %184 {strides = array<i32>} : memref<2x8x128xf32, #tpu.memory_space<vmem>>, vector<1x8x128xf32>,
      %185 = arith.truncf %178 : vector<8x128xf32> to vector<8x128xbf16>
      %c0_112 = arith.constant 0 : index
      %c0_113 = arith.constant 0 : index
      %186 = vector.load %arg23[%c0_112, %c0_113] : memref<8x256xbf16, #tpu.memory_space<vmem>>, vector<8x128xbf16>
      tpu.vector_store %arg23[%c0_112, %c0_113], %185 {strides = array<i32>} : memref<8x256xbf16, #tpu.memory_space<vmem>>, vector<8x128xbf16>,
      %187 = arith.truncf %79 : vector<8x128xf32> to vector<8x128xbf16>
      %c0_114 = arith.constant 0 : index
      %c128_115 = arith.constant 128 : index
      %188 = vector.load %arg23[%c0_114, %c128_115] : memref<8x256xbf16, #tpu.memory_space<vmem>>, vector<8x128xbf16>
      tpu.vector_store %arg23[%c0_114, %c128_115], %187 {strides = array<i32>} : memref<8x256xbf16, #tpu.memory_space<vmem>>, vector<8x128xbf16>,
      %cst_116 = arith.constant -1.000000e+30 : f32
      %189 = vector.broadcast %cst_116 : f32 to vector<8x1xf32>
      %c0_117 = arith.constant 0 : index
      %c0_118 = arith.constant 0 : index
      %190 = vector.load %arg24[%c0_117, %c0_118] : memref<8x1xf32, #tpu.memory_space<vmem>>, vector<8x1xf32>
      tpu.vector_store %arg24[%c0_117, %c0_118], %189 {strides = array<i32>} : memref<8x1xf32, #tpu.memory_space<vmem>>, vector<8x1xf32>,
      %cst_119 = arith.constant 0.000000e+00 : f32
      %191 = vector.broadcast %cst_119 : f32 to vector<8x1xf32>
      %c0_120 = arith.constant 0 : index
      %c0_121 = arith.constant 0 : index
      %192 = vector.load %arg25[%c0_120, %c0_121] : memref<8x1xf32, #tpu.memory_space<vmem>>, vector<8x1xf32>
      tpu.vector_store %arg25[%c0_120, %c0_121], %191 {strides = array<i32>} : memref<8x1xf32, #tpu.memory_space<vmem>>, vector<8x1xf32>,
    } else {
    }
    %c0 = arith.constant 0 : index
    %c0_1 = arith.constant 0 : index
    %3 = vector.load %arg23[%c0, %c0_1] : memref<8x256xbf16, #tpu.memory_space<vmem>>, vector<8x256xbf16>
    %c0_2 = arith.constant 0 : index
    %c0_3 = arith.constant 0 : index
    %4 = vector.load %arg11[%c0_2, %c0_3] : memref<256x512xbf16, #tpu.memory_space<vmem>>, vector<256x512xbf16>
    %cst = arith.constant dense<0.000000e+00> : vector<8x512xf32>
    %5 = tpu.matmul %3, %4, %cst {dimension_numbers = #tpu.dot_dimension_numbers<[1], [0], [0], [1], [0, 0, 1, 1], [], []>} : vector<8x256xbf16>, vector<256x512xbf16>, vector<8x512xf32> -> vector<8x512xf32>
    %c0_4 = arith.constant 0 : index
    %c0_5 = arith.constant 0 : index
    %6 = vector.load %arg12[%c0_4, %c0_5] : memref<1x512xf32, #tpu.memory_space<vmem>>, vector<1x512xf32>
    %7 = vector.broadcast %6 : vector<1x512xf32> to vector<8x512xf32>
    %8 = arith.addf %5, %7 : vector<8x512xf32>
    %c512_i32 = arith.constant 512 : i32
    %9 = arith.muli %arg0, %c512_i32 : i32
    %10 = tpu.iota {dimensions = array<i32: 1>} : vector<8x512xi32>
    %11 = vector.broadcast %9 : i32 to vector<8x512xi32>
    %12 = arith.addi %11, %10 : vector<8x512xi32>
    %c600_i32 = arith.constant 600 : i32
    %13 = vector.broadcast %c600_i32 : i32 to vector<8x512xi32>
    %14 = arith.cmpi slt, %12, %13 : vector<8x512xi32>
    %cst_6 = arith.constant -1.000000e+30 : f32
    %15 = vector.broadcast %cst_6 : f32 to vector<8x512xf32>
    %16 = arith.select %14, %8, %15 : vector<8x512xi1>, vector<8x512xf32>
    %c0_7 = arith.constant 0 : index
    %c0_8 = arith.constant 0 : index
    %17 = vector.load %arg13[%c0_7, %c0_8] : memref<8x512xf32, #tpu.memory_space<vmem>>, vector<8x512xf32>
    tpu.vector_store %arg13[%c0_7, %c0_8], %16 {strides = array<i32>} : memref<8x512xf32, #tpu.memory_space<vmem>>, vector<8x512xf32>,
    %cst_9 = arith.constant dense<0xFF800000> : vector<8xf32>
    %18 = vector.multi_reduction <maximumf>, %16, %cst_9 [1] : vector<8x512xf32> to vector<8xf32>
    %19 = vector.shape_cast %18 : vector<8xf32> to vector<8x1xf32>
    %c0_10 = arith.constant 0 : index
    %c0_11 = arith.constant 0 : index
    %20 = vector.load %arg24[%c0_10, %c0_11] : memref<8x1xf32, #tpu.memory_space<vmem>>, vector<8x1xf32>
    %21 = arith.maximumf %20, %19 : vector<8x1xf32>
    %c0_12 = arith.constant 0 : index
    %c0_13 = arith.constant 0 : index
    %22 = vector.load %arg25[%c0_12, %c0_13] : memref<8x1xf32, #tpu.memory_space<vmem>>, vector<8x1xf32>
    %23 = arith.subf %20, %21 : vector<8x1xf32>
    %24 = math.exp %23 : vector<8x1xf32>
    %25 = arith.mulf %22, %24 : vector<8x1xf32>
    %26 = vector.broadcast %21 : vector<8x1xf32> to vector<8x512xf32>
    %27 = arith.subf %16, %26 : vector<8x512xf32>
    %28 = math.exp %27 : vector<8x512xf32>
    %cst_14 = arith.constant dense<0.000000e+00> : vector<8xf32>
    %29 = vector.multi_reduction <add>, %28, %cst_14 [1] : vector<8x512xf32> to vector<8xf32>
    %30 = vector.shape_cast %29 : vector<8xf32> to vector<8x1xf32>
    %31 = arith.addf %25, %30 : vector<8x1xf32>
    %c0_15 = arith.constant 0 : index
    %c0_16 = arith.constant 0 : index
    %32 = vector.load %arg25[%c0_15, %c0_16] : memref<8x1xf32, #tpu.memory_space<vmem>>, vector<8x1xf32>
    tpu.vector_store %arg25[%c0_15, %c0_16], %31 {strides = array<i32>} : memref<8x1xf32, #tpu.memory_space<vmem>>, vector<8x1xf32>,
    %c0_17 = arith.constant 0 : index
    %c0_18 = arith.constant 0 : index
    %33 = vector.load %arg24[%c0_17, %c0_18] : memref<8x1xf32, #tpu.memory_space<vmem>>, vector<8x1xf32>
    tpu.vector_store %arg24[%c0_17, %c0_18], %21 {strides = array<i32>} : memref<8x1xf32, #tpu.memory_space<vmem>>, vector<8x1xf32>,
    %c1_i32 = arith.constant 1 : i32
    %34 = arith.cmpi eq, %arg0, %c1_i32 : i32
    %35 = arith.extui %34 : i1 to i32
    %c0_i32_19 = arith.constant 0 : i32
    %36 = arith.cmpi ne, %35, %c0_i32_19 : i32
    scf.if %36 {
      %c0_20 = arith.constant 0 : index
      %c0_21 = arith.constant 0 : index
      %37 = vector.load %arg24[%c0_20, %c0_21] : memref<8x1xf32, #tpu.memory_space<vmem>>, vector<8x1xf32>
      %c0_22 = arith.constant 0 : index
      %c0_23 = arith.constant 0 : index
      %38 = vector.load %arg25[%c0_22, %c0_23] : memref<8x1xf32, #tpu.memory_space<vmem>>, vector<8x1xf32>
      %39 = math.log %38 : vector<8x1xf32>
      %40 = arith.addf %37, %39 : vector<8x1xf32>
      %c0_24 = arith.constant 0 : index
      %c0_25 = arith.constant 0 : index
      %41 = vector.load %arg14[%c0_24, %c0_25] : memref<8x1xf32, #tpu.memory_space<vmem>>, vector<8x1xf32>
      tpu.vector_store %arg14[%c0_24, %c0_25], %40 {strides = array<i32>} : memref<8x1xf32, #tpu.memory_space<vmem>>, vector<8x1xf32>,
    } else {
    }
    return
  }
  func.func @transform_1(%arg0: i32, %arg1: memref<2xi32, #tpu.memory_space<smem>>) -> (i32, i32, i32) {
    %c0_i32 = arith.constant 0 : i32
    %c0_i32_0 = arith.constant 0 : i32
    %c0_i32_1 = arith.constant 0 : i32
    %c0_i32_2 = arith.constant 0 : i32
    return %c0_i32, %c0_i32_0, %c0_i32_1 : i32, i32, i32
  }
  func.func @transform_2(%arg0: i32, %arg1: memref<2xi32, #tpu.memory_space<smem>>) -> (i32, i32, i32) {
    %c0_i32 = arith.constant 0 : i32
    %c0_i32_0 = arith.constant 0 : i32
    %c0_i32_1 = arith.constant 0 : i32
    %c0_i32_2 = arith.constant 0 : i32
    return %c0_i32, %c0_i32_0, %c0_i32_1 : i32, i32, i32
  }
  func.func @transform_3(%arg0: i32, %arg1: memref<2xi32, #tpu.memory_space<smem>>) -> (i32, i32, i32) {
    %c0_i32 = arith.constant 0 : i32
    %c0_i32_0 = arith.constant 0 : i32
    %c0_i32_1 = arith.constant 0 : i32
    %c0_i32_2 = arith.constant 0 : i32
    return %c0_i32, %c0_i32_0, %c0_i32_1 : i32, i32, i32
  }
  func.func @transform_4(%arg0: i32, %arg1: memref<2xi32, #tpu.memory_space<smem>>) -> (i32, i32) {
    %c0_i32 = arith.constant 0 : i32
    %c0_i32_0 = arith.constant 0 : i32
    %c0_i32_1 = arith.constant 0 : i32
    return %c0_i32, %c0_i32_0 : i32, i32
  }
  func.func @transform_7(%arg0: i32, %arg1: memref<2xi32, #tpu.memory_space<smem>>) -> (i32, i32) {
    %c0_i32 = arith.constant 0 : i32
    %c0_i32_0 = arith.constant 0 : i32
    %c0_i32_1 = arith.constant 0 : i32
    return %c0_i32, %c0_i32_0 : i32, i32
  }
  func.func @transform_8(%arg0: i32, %arg1: memref<2xi32, #tpu.memory_space<smem>>) -> (i32, i32) {
    %c0_i32 = arith.constant 0 : i32
    %c0_i32_0 = arith.constant 0 : i32
    %c0_i32_1 = arith.constant 0 : i32
    return %c0_i32, %c0_i32_0 : i32, i32
  }
  func.func @transform_9(%arg0: i32, %arg1: memref<2xi32, #tpu.memory_space<smem>>) -> (i32, i32) {
    %c0_i32 = arith.constant 0 : i32
    %c0_i32_0 = arith.constant 0 : i32
    return %c0_i32, %arg0 : i32, i32
  }
  func.func @transform_10(%arg0: i32, %arg1: memref<2xi32, #tpu.memory_space<smem>>) -> (i32, i32) {
    %c0_i32 = arith.constant 0 : i32
    %c0_i32_0 = arith.constant 0 : i32
    return %c0_i32, %arg0 : i32, i32
  }
  func.func @transform_11(%arg0: i32, %arg1: memref<2xi32, #tpu.memory_space<smem>>) -> (i32, i32) {
    %c0_i32 = arith.constant 0 : i32
    %c0_i32_0 = arith.constant 0 : i32
    return %c0_i32, %arg0 : i32, i32
  }
  func.func @transform_12(%arg0: i32, %arg1: memref<2xi32, #tpu.memory_space<smem>>) -> (i32, i32) {
    %c0_i32 = arith.constant 0 : i32
    %c0_i32_0 = arith.constant 0 : i32
    %c0_i32_1 = arith.constant 0 : i32
    return %c0_i32, %c0_i32_0 : i32, i32
  }
  func.func @transform_13(%arg0: i32, %arg1: memref<2xi32, #tpu.memory_space<smem>>) -> (i32, i32, i32) {
    %c0_i32 = arith.constant 0 : i32
    %c0_i32_0 = arith.constant 0 : i32
    %c0_i32_1 = arith.constant 0 : i32
    %c0_i32_2 = arith.constant 0 : i32
    return %c0_i32, %c0_i32_0, %c0_i32_1 : i32, i32, i32
  }
  func.func @transform_14(%arg0: i32, %arg1: memref<2xi32, #tpu.memory_space<smem>>) -> (i32, i32, i32) {
    %c0_i32 = arith.constant 0 : i32
    %c0_i32_0 = arith.constant 0 : i32
    %c0_i32_1 = arith.constant 0 : i32
    %c0_i32_2 = arith.constant 0 : i32
    return %c0_i32, %c0_i32_0, %c0_i32_1 : i32, i32, i32
  }
  func.func @transform_15(%arg0: i32, %arg1: memref<2xi32, #tpu.memory_space<smem>>) -> (i32, i32) {
    %c0_i32 = arith.constant 0 : i32
    %c0_i32_0 = arith.constant 0 : i32
    %c0_i32_1 = arith.constant 0 : i32
    return %c0_i32, %c0_i32_0 : i32, i32
  }
}

</mosaic_0001>

<llo_original>
// kernel: tpu_custom_call.1
$region0: #{tpu_custom_call.1}
  #allocation0 [shape = 'u32[]', space=smem, size = 0x4, offset = 0x4, fixed_abs, tag = 'smem constant byte address 0x4 - core index']
  #allocation1 [shape = 'u32[144,128]{1,0:T(1,128)}', space=vmem, size = 0x12000, scoped, tag = 'internal scratch']
  #allocation2 [shape = 'f32[8,128]{1,0:T(8,128)}', space=vmem, size = 0x1000, scoped, tag = 'scratch operand']
  #allocation3 [shape = 'f32[384,512]{1,0:T(8,128)}', space=vmem, size = 0xc0000, scoped, tag = 'scratch operand']
  #allocation4 [shape = 'f32[256,512]{1,0:T(8,128)}', space=vmem, size = 0x80000, scoped, tag = 'scratch operand']
  #allocation5 [shape = 'f32[8,384]{1,0:T(8,128)}', space=vmem, size = 0x3000, scoped, tag = 'scratch operand']
  #allocation6 [shape = 'f32[8,256]{1,0:T(8,128)}', space=vmem, size = 0x2000, scoped, tag = 'scratch operand']
  #allocation7 [shape = 'bf16[8,256]{1,0:T(8,128)(2,1)}', space=vmem, size = 0x1000, scoped, tag = 'scratch operand']
  #allocation8 [shape = 'f32[8,1]{1,0:T(8,128)}', space=vmem, size = 0x1000, scoped, tag = 'scratch operand']
  #allocation9 [shape = 'f32[8,1]{1,0:T(8,128)}', space=vmem, size = 0x1000, scoped, tag = 'scratch operand']
  #allocation10 [shape = 's32[2]{0}', space=sflag, size = 0x8, scoped, tag = 'scratch operand']
  #allocation11 [shape = 's32[2]{0}', space=sflag, size = 0x8, scoped, tag = 'scratch operand']
  #allocation12 [shape = 's32[1]{0}', space=sflag, size = 0x4, scoped, tag = 'scoped memory for tpu_custom_call.1']
  #allocation13 [shape = 'u8[512]{0}', space=smem, size = 0x200, scoped, tag = 'prefetched SMEM operand 0']
  #allocation29 [shape = 's32[]', space=sflag, size = 0x4, offset = 0, fixed_abs, tag = 'sflag constant byte address 0x0 - dummy sync flag']
  #allocation30 [shape = 's32[]', space=sflag, size = 0x4, offset = 0, fixed_abs, tag = 'sflag constant byte address 0x0 - dummy sync flag']
  #allocation31 [shape = 'u32[]', space=smem, size = 0x4, offset = 0x44, fixed_abs, tag = 'smem constant byte address 0x44 - assertion arg 0']
  #allocation32 [shape = 'u32[]', space=smem, size = 0x4, offset = 0x48, fixed_abs, tag = 'smem constant byte address 0x48 - assertion arg 1']
  #allocation33 [shape = 's32[]', space=sflag, size = 0x4, offset = 0, fixed_abs, tag = 'sflag constant byte address 0x0 - dummy sync flag']
  #allocation34 [shape = 's32[]', space=sflag, size = 0x4, offset = 0, fixed_abs, tag = 'sflag constant byte address 0x0 - dummy sync flag']
  #allocation35 [shape = 's32[]', space=sflag, size = 0x4, offset = 0, fixed_abs, tag = 'sflag constant byte address 0x0 - dummy sync flag']
  #allocation36 [shape = 's32[]', space=sflag, size = 0x4, offset = 0, fixed_abs, tag = 'sflag constant byte address 0x0 - dummy sync flag']
  #allocation37 [shape = 's32[]', space=sflag, size = 0x4, offset = 0, fixed_abs, tag = 'sflag constant byte address 0x0 - dummy sync flag']
  #allocation38 [shape = 's32[]', space=sflag, size = 0x4, offset = 0, fixed_abs, tag = 'sflag constant byte address 0x0 - dummy sync flag']
  %s0 = inlined_call_operand.hbm [shape: s32[2], index: 0, kind: input, shape index: {}]
  %s1 = inlined_call_operand.hbm [shape: f32[600,128], index: 1, kind: input, shape index: {}]
  %s2 = inlined_call_operand.hbm [shape: f32[8,16,128], index: 2, kind: input, shape index: {}]
  %s3 = inlined_call_operand.hbm [shape: f32[2,8,128], index: 3, kind: input, shape index: {}]
  %s4 = inlined_call_operand.hbm [shape: f32[2,8,128], index: 4, kind: input, shape index: {}]
  %s5 = inlined_call_operand.hbm [shape: f32[128,128], index: 5, kind: input, shape index: {}]
  %s6 = inlined_call_operand.hbm [shape: f32[384,512], index: 6, kind: input, shape index: {}]
  %s7 = inlined_call_operand.hbm [shape: f32[256,512], index: 7, kind: input, shape index: {}]
  %s8 = inlined_call_operand.vmem [shape: f32[1,512], index: 8, kind: input, shape index: {}]
  %s9 = inlined_call_operand.vmem [shape: f32[1,512], index: 9, kind: input, shape index: {}]
  %s10 = inlined_call_operand.hbm [shape: bf16[256,1024], index: 10, kind: input, shape index: {}]
  %s11 = inlined_call_operand.vmem [shape: f32[1,1024], index: 11, kind: input, shape index: {}]
  %s12 = inlined_call_operand.hbm [shape: f32[8,1024], index: 12, kind: output, shape index: {0}]
  %s13 = inlined_call_operand.vmem [shape: f32[8,1], index: 13, kind: output, shape index: {1}]
  %s14 = inlined_call_operand.hbm [shape: f32[2,8,128], index: 14, kind: output, shape index: {2}]
  %s15 = inlined_call_operand.hbm [shape: f32[2,8,128], index: 15, kind: output, shape index: {3}]
  %s16 = inlined_call_operand.hbm [shape: f32[8,16], index: 16, kind: output, shape index: {4}]
  %17 = xla_tuple %s12, %s13, %s14, %s15, %s16
  %s18 = sld [smem:[#allocation0]]
  $region141: #{tpu_custom_call.1} parent=0
    _
  %s20 = ssub.s32 1, %s18
  %s21 = scalar_select 0, %s20, %s18
  %23 = dma.hbm_to_smem %s0, 16, [#allocation13], [#allocation12]
  %24 = dma.done [#allocation12], 16
  %25 = sfence
  $region1: #{tpu_custom_call.1} parent=0
    #allocation14 [shape = 'u8[65536]{0}', space=vmem, size = 0x10000, scoped, tag = 'input window, operand 2, single buffered']
    #allocation15 [shape = 's32[2]{0}', space=sflag, size = 0x8, scoped, tag = 'scoped memory for tpu_custom_call.1']
    #allocation16 [shape = 's32[2]{0}', space=sflag, size = 0x8, scoped, tag = 'scoped memory for tpu_custom_call.1']
    #allocation17 [shape = 'u8[8192]{0}', space=vmem, size = 0x2000, scoped, tag = 'input window, operand 3, single buffered']
    #allocation18 [shape = 's32[1]{0}', space=sflag, size = 0x4, scoped, tag = 'scoped memory for tpu_custom_call.1']
    #allocation19 [shape = 'u8[8192]{0}', space=vmem, size = 0x2000, scoped, tag = 'input window, operand 4, single buffered']
    #allocation20 [shape = 'u8[65536]{0}', space=vmem, size = 0x10000, scoped, tag = 'input window, operand 5, single buffered']
    #allocation21 [shape = 's32[1]{0}', space=sflag, size = 0x4, scoped, tag = 'scoped memory for tpu_custom_call.1']
    #allocation22 [shape = 'u8[524288]{0}', space=vmem, size = 0x80000, scoped, tag = 'input window, operand 10']
    #allocation23 [shape = 'u8[32768]{0}', space=vmem, size = 0x8000, scoped, tag = 'output window, operand 0']
    #allocation24 [shape = 'u8[8192]{0}', space=vmem, size = 0x2000, scoped, tag = 'output window, operand 2, single buffered']
    #allocation25 [shape = 's32[1]{0}', space=sflag, size = 0x4, scoped, tag = 'scoped memory for tpu_custom_call.1']
    #allocation26 [shape = 'u8[8192]{0}', space=vmem, size = 0x2000, scoped, tag = 'output window, operand 3, single buffered']
    #allocation27 [shape = 'u8[4096]{0}', space=vmem, size = 0x1000, scoped, tag = 'output window, operand 4, single buffered']
    #allocation28 [shape = 's32[1]{0}', space=sflag, size = 0x4, scoped, tag = 'scoped memory for tpu_custom_call.1']
    %26 = vsyncpa [#allocation15], 0
    %27 = vsyncpa [#allocation18], 0
    %28 = vsyncpa [#allocation21], 0
    %29 = vsyncpa [#allocation16], 0
    %s30 = scalar_lea.sflag [#allocation16], 1
    %31 = vsyncpa %s30, 0
    %32 = vsyncpa [#allocation25], 0
    %33 = vsyncpa [#allocation28], 0
    loop: start=0, step=1, limit=4
    $region2: #{tpu_custom_call.1} parent=1 // loop_pre_header
      _
    $region3: #{tpu_custom_call.1} parent=1 // loop_header
      %s35 = sphi 0, %s39
      %p36 = scmp.ge.s32.totalorder %s35, 4
      %s43 = sphi 0, %s43
      %s45 = sphi 0, %s43
      %s46 = sphi 0, %s45
      %s60 = sphi 0, %s46
      %s64 = sphi 0, %s64
      %s66 = sphi 0, %s64
      %s67 = sphi 0, %s66
      %s81 = sphi 0, %s67
      %s85 = sphi 0, %s85
      %s87 = sphi 0, %s85
      %s88 = sphi 0, %s87
      %s102 = sphi 0, %s88
      %s106 = sphi 0, %s106
      %s108 = sphi 0, %s106
      %s109 = sphi 0, %s108
      %s123 = sphi 0, %s109
      %s127 = sphi 0, %s127
      %s129 = sphi 0, %s127
      %s130 = sphi 0, %s129
      %s144 = sphi 0, %s130
      %s148 = sphi 0, %s148
      %s150 = sphi 0, %s148
      %s151 = sphi 0, %s150
      %s165 = sphi 0, %s151
      %s171 = sphi 0, %s173
      %s174 = sphi 0, %s171
      %s175 = sphi 0, %s174
      %s191 = sphi 0, %s175
      %s197 = sphi 0, %s199
      %s200 = sphi 0, %s197
      %s201 = sphi 0, %s200
      %s217 = sphi 0, %s201
      %s223 = sphi 0, %s225
      %s226 = sphi 0, %s223
      %s227 = sphi 0, %s226
      %s243 = sphi 0, %s227
      %s247 = sphi 0, %s247
      %s249 = sphi 0, %s247
      %s250 = sphi 0, %s249
      %s264 = sphi 0, %s250
      %s268 = sphi 0, %s268
      %s270 = sphi 0, %s268
      %s271 = sphi 0, %s270
      %s285 = sphi 0, %s271
      %s289 = sphi 0, %s289
      %s291 = sphi 0, %s289
      %s292 = sphi 0, %s291
      %s306 = sphi 0, %s292
      %s310 = sphi 0, %s310
      %s312 = sphi 0, %s310
      %s313 = sphi 0, %s312
      %s327 = sphi 0, %s313
    $region4: #{tpu_custom_call.1} parent=1 // loop_header_branch
      %38 = sbr.rel (%p36) target = $region8
    $region5: #{tpu_custom_call.1} parent=1 // loop_body
      %s40 = ssub.s32 %s35, 1
      %s41 = ssub.s32 %s35, 2
      %s42 = sadd.s32 %s35, 1
      %s44 = sadd.s32 %s43, 1
      %p47 = scmp.eq.s32.totalorder %s35, 1
      %p48 = scmp.ne.s32.totalorder %s43, %s45
      %p49 = scmp.eq.s32.totalorder %s35, 0
      %p50 = por %p48, %p49
      %p51 = scmp.ne.s32.totalorder %s43, %s45
      %p52 = scmp.eq.s32.totalorder %s40, 1
      %p53 = por %p51, %p52
      %p54 = scmp.ne.s32.totalorder %s45, %s46
      %p55 = scmp.eq.s32.totalorder %s40, 0
      %p56 = por %p54, %p55
      %p57 = scmp.ne.s32.totalorder %s45, %s46
      %p58 = scmp.eq.s32.totalorder %s41, 1
      %p59 = por %p57, %p58
      %p61 = scmp.ne.s32.totalorder %s46, %s60
      %p62 = scmp.eq.s32.totalorder %s41, 0
      %p63 = por %p61, %p62
      %s65 = sadd.s32 %s64, 1
      %p68 = scmp.eq.s32.totalorder %s35, 1
      %p69 = scmp.ne.s32.totalorder %s64, %s66
      %p70 = scmp.eq.s32.totalorder %s35, 0
      %p71 = por %p69, %p70
      %p72 = scmp.ne.s32.totalorder %s64, %s66
      %p73 = scmp.eq.s32.totalorder %s40, 1
      %p74 = por %p72, %p73
      %p75 = scmp.ne.s32.totalorder %s66, %s67
      %p76 = scmp.eq.s32.totalorder %s40, 0
      %p77 = por %p75, %p76
      %p78 = scmp.ne.s32.totalorder %s66, %s67
      %p79 = scmp.eq.s32.totalorder %s41, 1
      %p80 = por %p78, %p79
      %p82 = scmp.ne.s32.totalorder %s67, %s81
      %p83 = scmp.eq.s32.totalorder %s41, 0
      %p84 = por %p82, %p83
      %s86 = sadd.s32 %s85, 1
      %p89 = scmp.eq.s32.totalorder %s35, 1
      %p90 = scmp.ne.s32.totalorder %s85, %s87
      %p91 = scmp.eq.s32.totalorder %s35, 0
      %p92 = por %p90, %p91
      %p93 = scmp.ne.s32.totalorder %s85, %s87
      %p94 = scmp.eq.s32.totalorder %s40, 1
      %p95 = por %p93, %p94
      %p96 = scmp.ne.s32.totalorder %s87, %s88
      %p97 = scmp.eq.s32.totalorder %s40, 0
      %p98 = por %p96, %p97
      %p99 = scmp.ne.s32.totalorder %s87, %s88
      %p100 = scmp.eq.s32.totalorder %s41, 1
      %p101 = por %p99, %p100
      %p103 = scmp.ne.s32.totalorder %s88, %s102
      %p104 = scmp.eq.s32.totalorder %s41, 0
      %p105 = por %p103, %p104
      %s107 = sadd.s32 %s106, 1
      %p110 = scmp.eq.s32.totalorder %s35, 1
      %p111 = scmp.ne.s32.totalorder %s106, %s108
      %p112 = scmp.eq.s32.totalorder %s35, 0
      %p113 = por %p111, %p112
      %p114 = scmp.ne.s32.totalorder %s106, %s108
      %p115 = scmp.eq.s32.totalorder %s40, 1
      %p116 = por %p114, %p115
      %p117 = scmp.ne.s32.totalorder %s108, %s109
      %p118 = scmp.eq.s32.totalorder %s40, 0
      %p119 = por %p117, %p118
      %p120 = scmp.ne.s32.totalorder %s108, %s109
      %p121 = scmp.eq.s32.totalorder %s41, 1
      %p122 = por %p120, %p121
      %p124 = scmp.ne.s32.totalorder %s109, %s123
      %p125 = scmp.eq.s32.totalorder %s41, 0
      %p126 = por %p124, %p125
      %s128 = sadd.s32 %s127, 1
      %p131 = scmp.eq.s32.totalorder %s35, 1
      %p132 = scmp.ne.s32.totalorder %s127, %s129
      %p133 = scmp.eq.s32.totalorder %s35, 0
      %p134 = por %p132, %p133
      %p135 = scmp.ne.s32.totalorder %s127, %s129
      %p136 = scmp.eq.s32.totalorder %s40, 1
      %p137 = por %p135, %p136
      %p138 = scmp.ne.s32.totalorder %s129, %s130
      %p139 = scmp.eq.s32.totalorder %s40, 0
      %p140 = por %p138, %p139
      %p141 = scmp.ne.s32.totalorder %s129, %s130
      %p142 = scmp.eq.s32.totalorder %s41, 1
      %p143 = por %p141, %p142
      %p145 = scmp.ne.s32.totalorder %s130, %s144
      %p146 = scmp.eq.s32.totalorder %s41, 0
      %p147 = por %p145, %p146
      %s149 = sadd.s32 %s148, 1
      %p152 = scmp.eq.s32.totalorder %s35, 1
      %p153 = scmp.ne.s32.totalorder %s148, %s150
      %p154 = scmp.eq.s32.totalorder %s35, 0
      %p155 = por %p153, %p154
      %p156 = scmp.ne.s32.totalorder %s148, %s150
      %p157 = scmp.eq.s32.totalorder %s40, 1
      %p158 = por %p156, %p157
      %p159 = scmp.ne.s32.totalorder %s150, %s151
      %p160 = scmp.eq.s32.totalorder %s40, 0
      %p161 = por %p159, %p160
      %p162 = scmp.ne.s32.totalorder %s150, %s151
      %p163 = scmp.eq.s32.totalorder %s41, 1
      %p164 = por %p162, %p163
      %p166 = scmp.ne.s32.totalorder %s151, %s165
      %p167 = scmp.eq.s32.totalorder %s41, 0
      %p168 = por %p166, %p167
      %s169 = ssub.s32 %s35, %s42
      %p170 = scmp.eq.s32.totalorder %s169, 0
      %s172 = sadd.s32 %s171, 1
      %s173 = scalar_select %p170, %s171, %s172
      %p176 = pneg %p170
      %p177 = scmp.eq.s32.totalorder %s35, 1
      %p178 = por %p176, %p177
      %p179 = scmp.ne.s32.totalorder %s171, %s174
      %p180 = scmp.eq.s32.totalorder %s35, 0
      %p181 = por %p179, %p180
      %p182 = scmp.ne.s32.totalorder %s171, %s174
      %p183 = scmp.eq.s32.totalorder %s40, 1
      %p184 = por %p182, %p183
      %p185 = scmp.ne.s32.totalorder %s174, %s175
      %p186 = scmp.eq.s32.totalorder %s40, 0
      %p187 = por %p185, %p186
      %p188 = scmp.ne.s32.totalorder %s174, %s175
      %p189 = scmp.eq.s32.totalorder %s41, 1
      %p190 = por %p188, %p189
      %p192 = scmp.ne.s32.totalorder %s175, %s191
      %p193 = scmp.eq.s32.totalorder %s41, 0
      %p194 = por %p192, %p193
      %s195 = ssub.s32 %s35, %s42
      %p196 = scmp.eq.s32.totalorder %s195, 0
      %s198 = sadd.s32 %s197, 1
      %s199 = scalar_select %p196, %s197, %s198
      %p202 = pneg %p196
      %p203 = scmp.eq.s32.totalorder %s35, 1
      %p204 = por %p202, %p203
      %p205 = scmp.ne.s32.totalorder %s197, %s200
      %p206 = scmp.eq.s32.totalorder %s35, 0
      %p207 = por %p205, %p206
      %p208 = scmp.ne.s32.totalorder %s197, %s200
      %p209 = scmp.eq.s32.totalorder %s40, 1
      %p210 = por %p208, %p209
      %p211 = scmp.ne.s32.totalorder %s200, %s201
      %p212 = scmp.eq.s32.totalorder %s40, 0
      %p213 = por %p211, %p212
      %p214 = scmp.ne.s32.totalorder %s200, %s201
      %p215 = scmp.eq.s32.totalorder %s41, 1
      %p216 = por %p214, %p215
      %p218 = scmp.ne.s32.totalorder %s201, %s217
      %p219 = scmp.eq.s32.totalorder %s41, 0
      %p220 = por %p218, %p219
      %s221 = ssub.s32 %s35, %s42
      %p222 = scmp.eq.s32.totalorder %s221, 0
      %s224 = sadd.s32 %s223, 1
      %s225 = scalar_select %p222, %s223, %s224
      %p228 = pneg %p222
      %p229 = scmp.eq.s32.totalorder %s35, 1
      %p230 = por %p228, %p229
      %p231 = scmp.ne.s32.totalorder %s223, %s226
      %p232 = scmp.eq.s32.totalorder %s35, 0
      %p233 = por %p231, %p232
      %p234 = scmp.ne.s32.totalorder %s223, %s226
      %p235 = scmp.eq.s32.totalorder %s40, 1
      %p236 = por %p234, %p235
      %p237 = scmp.ne.s32.totalorder %s226, %s227
      %p238 = scmp.eq.s32.totalorder %s40, 0
      %p239 = por %p237, %p238
      %p240 = scmp.ne.s32.totalorder %s226, %s227
      %p241 = scmp.eq.s32.totalorder %s41, 1
      %p242 = por %p240, %p241
      %p244 = scmp.ne.s32.totalorder %s227, %s243
      %p245 = scmp.eq.s32.totalorder %s41, 0
      %p246 = por %p244, %p245
      %s248 = sadd.s32 %s247, 1
      %p251 = scmp.eq.s32.totalorder %s35, 1
      %p252 = scmp.ne.s32.totalorder %s247, %s249
      %p253 = scmp.eq.s32.totalorder %s35, 0
      %p254 = por %p252, %p253
      %p255 = scmp.ne.s32.totalorder %s247, %s249
      %p256 = scmp.eq.s32.totalorder %s40, 1
      %p257 = por %p255, %p256
      %p258 = scmp.ne.s32.totalorder %s249, %s250
      %p259 = scmp.eq.s32.totalorder %s40, 0
      %p260 = por %p258, %p259
      %p261 = scmp.ne.s32.totalorder %s249, %s250
      %p262 = scmp.eq.s32.totalorder %s41, 1
      %p263 = por %p261, %p262
      %p265 = scmp.ne.s32.totalorder %s250, %s264
      %p266 = scmp.eq.s32.totalorder %s41, 0
      %p267 = por %p265, %p266
      %s269 = sadd.s32 %s268, 1
      %p272 = scmp.eq.s32.totalorder %s35, 1
      %p273 = scmp.ne.s32.totalorder %s268, %s270
      %p274 = scmp.eq.s32.totalorder %s35, 0
      %p275 = por %p273, %p274
      %p276 = scmp.ne.s32.totalorder %s268, %s270
      %p277 = scmp.eq.s32.totalorder %s40, 1
      %p278 = por %p276, %p277
      %p279 = scmp.ne.s32.totalorder %s270, %s271
      %p280 = scmp.eq.s32.totalorder %s40, 0
      %p281 = por %p279, %p280
      %p282 = scmp.ne.s32.totalorder %s270, %s271
      %p283 = scmp.eq.s32.totalorder %s41, 1
      %p284 = por %p282, %p283
      %p286 = scmp.ne.s32.totalorder %s271, %s285
      %p287 = scmp.eq.s32.totalorder %s41, 0
      %p288 = por %p286, %p287
      %s290 = sadd.s32 %s289, 1
      %p293 = scmp.eq.s32.totalorder %s35, 1
      %p294 = scmp.ne.s32.totalorder %s289, %s291
      %p295 = scmp.eq.s32.totalorder %s35, 0
      %p296 = por %p294, %p295
      %p297 = scmp.ne.s32.totalorder %s289, %s291
      %p298 = scmp.eq.s32.totalorder %s40, 1
      %p299 = por %p297, %p298
      %p300 = scmp.ne.s32.totalorder %s291, %s292
      %p301 = scmp.eq.s32.totalorder %s40, 0
      %p302 = por %p300, %p301
      %p303 = scmp.ne.s32.totalorder %s291, %s292
      %p304 = scmp.eq.s32.totalorder %s41, 1
      %p305 = por %p303, %p304
      %p307 = scmp.ne.s32.totalorder %s292, %s306
      %p308 = scmp.eq.s32.totalorder %s41, 0
      %p309 = por %p307, %p308
      %s311 = sadd.s32 %s310, 1
      %p314 = scmp.eq.s32.totalorder %s35, 1
      %p315 = scmp.ne.s32.totalorder %s310, %s312
      %p316 = scmp.eq.s32.totalorder %s35, 0
      %p317 = por %p315, %p316
      %p318 = scmp.ne.s32.totalorder %s310, %s312
      %p319 = scmp.eq.s32.totalorder %s40, 1
      %p320 = por %p318, %p319
      %p321 = scmp.ne.s32.totalorder %s312, %s313
      %p322 = scmp.eq.s32.totalorder %s40, 0
      %p323 = por %p321, %p322
      %p324 = scmp.ne.s32.totalorder %s312, %s313
      %p325 = scmp.eq.s32.totalorder %s41, 1
      %p326 = por %p324, %p325
      %p328 = scmp.ne.s32.totalorder %s313, %s327
      %p329 = scmp.eq.s32.totalorder %s41, 0
      %p330 = por %p328, %p329
      %p331 = scmp.le.s32.totalorder 1, %s35
      %p332 = scmp.lt.s32.totalorder %s35, 3
      %p333 = pnand %p331, %p332
      %p334 = pneg %p333
      // Predicated region
      $region9: #{tpu_custom_call.1} parent=5 // pred_check
        _
      $region10: #{tpu_custom_call.1} parent=5 // pred_check_branch
        %336 = sbr.rel (%p333) target = $region12
      $region11: #{tpu_custom_call.1} parent=5 // pred_region
        %s337 = ssub.s32 %s35, 1
        // Predicated region
        $region13: #{tpu_custom_call.1} parent=11 // pred_check
          %p338 = pneg %p56
        $region14: #{tpu_custom_call.1} parent=11 // pred_check_branch
          %340 = sbr.rel (%p338) target = $region16
        $region15: #{tpu_custom_call.1} parent=11 // pred_region
          %s342 = ssub.s32 2048, 2048
          %343 = vsyncadd [#allocation15], %s342
          %s344 = sshll.u32 [#allocation14], 4
          %s345 = int_to_ptr.vmem [resolvable:$true] %s344
          %350 = dma.hbm_to_vmem [thread:$0]  %s2, 2048, %s345, [#allocation15], 128, 128, 8
        $region16: #{tpu_custom_call.1} parent=11 // pred_fallthru
          _
        // Predicated region
        $region17: #{tpu_custom_call.1} parent=11 // pred_check
          %p351 = pneg %p77
        $region18: #{tpu_custom_call.1} parent=11 // pred_check_branch
          %353 = sbr.rel (%p351) target = $region20
        $region19: #{tpu_custom_call.1} parent=11 // pred_region
          %s355 = ssub.s32 256, 256
          %356 = vsyncadd [#allocation18], %s355
          %s357 = sshll.u32 [#allocation17], 4
          %s358 = int_to_ptr.vmem [resolvable:$true] %s357
          %363 = dma.hbm_to_vmem [thread:$0]  %s3, 256, %s358, [#allocation18], 128, 128, 8
        $region20: #{tpu_custom_call.1} parent=11 // pred_fallthru
          _
        // Predicated region
        $region21: #{tpu_custom_call.1} parent=11 // pred_check
          %p364 = pneg %p98
        $region22: #{tpu_custom_call.1} parent=11 // pred_check_branch
          %366 = sbr.rel (%p364) target = $region24
        $region23: #{tpu_custom_call.1} parent=11 // pred_region
          %s368 = ssub.s32 256, 256
          %369 = vsyncadd [#allocation18], %s368
          %s370 = sshll.u32 [#allocation19], 4
          %s371 = int_to_ptr.vmem [resolvable:$true] %s370
          %376 = dma.hbm_to_vmem [thread:$0]  %s4, 256, %s371, [#allocation18], 128, 128, 8
        $region24: #{tpu_custom_call.1} parent=11 // pred_fallthru
          _
        // Predicated region
        $region25: #{tpu_custom_call.1} parent=11 // pred_check
          %p377 = pneg %p119
        $region26: #{tpu_custom_call.1} parent=11 // pred_check_branch
          %379 = sbr.rel (%p377) target = $region28
        $region27: #{tpu_custom_call.1} parent=11 // pred_region
          %s381 = ssub.s32 2048, 2048
          %382 = vsyncadd [#allocation21], %s381
          %s383 = sshll.u32 [#allocation20], 4
          %s384 = int_to_ptr.vmem [resolvable:$true] %s383
          %389 = dma.hbm_to_vmem [thread:$0]  %s5, 2048, %s384, [#allocation21], 128, 128, 8
        $region28: #{tpu_custom_call.1} parent=11 // pred_fallthru
          _
        // Predicated region
        $region29: #{tpu_custom_call.1} parent=11 // pred_check
          %p390 = pneg %p140
        $region30: #{tpu_custom_call.1} parent=11 // pred_check_branch
          %392 = sbr.rel (%p390) target = $region32
        $region31: #{tpu_custom_call.1} parent=11 // pred_region
          _
        $region32: #{tpu_custom_call.1} parent=11 // pred_fallthru
          _
        // Predicated region
        $region33: #{tpu_custom_call.1} parent=11 // pred_check
          %p393 = pneg %p161
        $region34: #{tpu_custom_call.1} parent=11 // pred_check_branch
          %395 = sbr.rel (%p393) target = $region36
        $region35: #{tpu_custom_call.1} parent=11 // pred_region
          _
        $region36: #{tpu_custom_call.1} parent=11 // pred_fallthru
          _
      $region12: #{tpu_custom_call.1} parent=5 // pred_fallthru
        _
      %p396 = scmp.lt.s32.totalorder %s35, 2
      // Predicated region
      $region37: #{tpu_custom_call.1} parent=5 // pred_check
        %p397 = pneg %p396
      $region38: #{tpu_custom_call.1} parent=5 // pred_check_branch
        %399 = sbr.rel (%p397) target = $region40
      $region39: #{tpu_custom_call.1} parent=5 // pred_region
        // Predicated region
        $region41: #{tpu_custom_call.1} parent=39 // pred_check
          %p400 = pneg %p181
        $region42: #{tpu_custom_call.1} parent=39 // pred_check_branch
          %402 = sbr.rel (%p400) target = $region44
        $region43: #{tpu_custom_call.1} parent=39 // pred_region
          %s403 = sand.u32 %s35, 1
          %s404 = scalar_lea.sflag [#allocation15], %s403
          %s405 = sand.u32 %s171, 1
          %s406 = smul.addr %s405, 512
          %s407 = scalar_lea.vmem [#allocation22], %s406
          %s408 = smul.u32 4, %s35
          %s410 = ssub.s32 8192, 8192
          %411 = vsyncadd %s404, %s410
          %s412 = smul.addr %s408, 64
          %s413 = scalar_lea.hbm %s10, %s412
          %s414 = sshll.u32 %s407, 4
          %s415 = int_to_ptr.vmem [resolvable:$true] %s414
          %420 = dma.hbm_to_vmem [thread:$0]  %s413, 8192, %s415, %s404, 512, 256, 16
        $region44: #{tpu_custom_call.1} parent=39 // pred_fallthru
          _
        // Predicated region
        $region45: #{tpu_custom_call.1} parent=39 // pred_check
          %p421 = pneg %p207
        $region46: #{tpu_custom_call.1} parent=39 // pred_check_branch
          %423 = sbr.rel (%p421) target = $region48
        $region47: #{tpu_custom_call.1} parent=39 // pred_region
          %s424 = smul.u32 4, %s35
          %p425 = scmp.lt.s32.totalorder %s424, 7
          %s426 = scalar_select %p425, %s424, 7
          %s427 = scalar_lea.vmem %s11, %s426
          %s428 = smul.u32 4, %s35
        $region48: #{tpu_custom_call.1} parent=39 // pred_fallthru
          _
      $region40: #{tpu_custom_call.1} parent=5 // pred_fallthru
        _
      %p429 = scmp.le.s32.totalorder 1, %s35
      %p430 = scmp.lt.s32.totalorder %s35, 3
      %p431 = pnand %p429, %p430
      %p432 = pneg %p431
      // Predicated region
      $region49: #{tpu_custom_call.1} parent=5 // pred_check
        _
      $region50: #{tpu_custom_call.1} parent=5 // pred_check_branch
        %434 = sbr.rel (%p431) target = $region52
      $region51: #{tpu_custom_call.1} parent=5 // pred_region
        %s435 = ssub.s32 %s35, 1
        // Predicated region
        $region53: #{tpu_custom_call.1} parent=51 // pred_check
          %p436 = pneg %p56
        $region54: #{tpu_custom_call.1} parent=51 // pred_check_branch
          %438 = sbr.rel (%p436) target = $region56
        $region55: #{tpu_custom_call.1} parent=51 // pred_region
          %439 = dma.done [#allocation15], 2048
        $region56: #{tpu_custom_call.1} parent=51 // pred_fallthru
          _
        // Predicated region
        $region57: #{tpu_custom_call.1} parent=51 // pred_check
          %p440 = pneg %p77
        $region58: #{tpu_custom_call.1} parent=51 // pred_check_branch
          %442 = sbr.rel (%p440) target = $region60
        $region59: #{tpu_custom_call.1} parent=51 // pred_region
          %443 = dma.done [#allocation18], 256
        $region60: #{tpu_custom_call.1} parent=51 // pred_fallthru
          _
        // Predicated region
        $region61: #{tpu_custom_call.1} parent=51 // pred_check
          %p444 = pneg %p98
        $region62: #{tpu_custom_call.1} parent=51 // pred_check_branch
          %446 = sbr.rel (%p444) target = $region64
        $region63: #{tpu_custom_call.1} parent=51 // pred_region
          %447 = dma.done [#allocation18], 256
        $region64: #{tpu_custom_call.1} parent=51 // pred_fallthru
          _
        // Predicated region
        $region65: #{tpu_custom_call.1} parent=51 // pred_check
          %p448 = pneg %p119
        $region66: #{tpu_custom_call.1} parent=51 // pred_check_branch
          %450 = sbr.rel (%p448) target = $region68
        $region67: #{tpu_custom_call.1} parent=51 // pred_region
          %451 = dma.done [#allocation21], 2048
        $region68: #{tpu_custom_call.1} parent=51 // pred_fallthru
          _
        %s452 = sand.u32 %s40, 1
        %s453 = scalar_lea.sflag [#allocation15], %s452
        %s454 = sand.u32 %s174, 1
        %s455 = smul.addr %s454, 512
        %s456 = scalar_lea.vmem [#allocation22], %s455
        // Predicated region
        $region69: #{tpu_custom_call.1} parent=51 // pred_check
          %p457 = pneg %p187
        $region70: #{tpu_custom_call.1} parent=51 // pred_check_branch
          %459 = sbr.rel (%p457) target = $region72
        $region71: #{tpu_custom_call.1} parent=51 // pred_region
          %460 = dma.done %s453, 8192
        $region72: #{tpu_custom_call.1} parent=51 // pred_fallthru
          _
        %p461 = pneg %p56
        %p462 = pneg %p53
        %p463 = pneg %p77
        %p464 = pneg %p74
        %p465 = pneg %p98
        %p466 = pneg %p95
        %p467 = pneg %p119
        %p468 = pneg %p116
        %p469 = pneg %p140
        %p470 = pneg %p137
        %p471 = pneg %p161
        %p472 = pneg %p158
        %s473 = sand.u32 %s40, 1
        %s474 = scalar_lea.sflag [#allocation15], %s473
        %s475 = sand.u32 %s174, 1
        %s476 = smul.addr %s475, 512
        %s477 = scalar_lea.vmem [#allocation22], %s476
        %p478 = pneg %p187
        %p479 = pneg %p184
        %s480 = smul.u32 4, %s40
        %p481 = scmp.lt.s32.totalorder %s480, 7
        %s482 = scalar_select %p481, %s480, 7
        %s483 = scalar_lea.vmem %s11, %s482
        %p484 = pneg %p213
        %p485 = pneg %p210
        %p486 = pneg %p239
        %p487 = pneg %p236
        %s488 = sand.u32 %s226, 1
        %s489 = scalar_lea.sflag [#allocation16], %s488
        %s490 = sand.u32 %s226, 1
        %s491 = smul.addr %s490, 32
        %s492 = scalar_lea.vmem [#allocation23], %s491
        %p493 = pneg %p260
        %p494 = pneg %p257
        %p495 = pneg %p281
        %p496 = pneg %p278
        %p497 = pneg %p302
        %p498 = pneg %p299
        %p499 = pneg %p323
        %p500 = pneg %p320
        %s501 = smul.u32 4, %s40
        %s502 = smul.u32 4, %s40
        %p503 = scmp.lt.s32.totalorder %s502, 7
        %s504 = scalar_select %p503, %s502, 7
        %s505 = scalar_lea.vmem %s11, %s504
        %s506 = smul.u32 4, %s40
        %s507 = smul.u32 4, %s40
        %p508 = scmp.eq.s32.totalorder %s40, 0
        // Predicated region
        $region73: #{tpu_custom_call.1} parent=51 // pred_check
          %p509 = pneg %p508
        $region74: #{tpu_custom_call.1} parent=51 // pred_check_branch
          %511 = sbr.rel (%p509) target = $region76
        $region75: #{tpu_custom_call.1} parent=51 // pred_region
          // Predicated region
          $region77: #{tpu_custom_call.1} parent=75 // pred_check
            _
          $region78: #{tpu_custom_call.1} parent=75 // pred_check_branch
            %513 = sbr.rel target = $region80
          $region79: #{tpu_custom_call.1} parent=75 // pred_region
            %514 = sst [smem:[#allocation31]] [#allocation30]
            %515 = sst [smem:[#allocation32]] [#allocation29]
          $region80: #{tpu_custom_call.1} parent=75 // pred_fallthru
            _
          %517 = shalt.err (0)
          %s519 = sshll.u32 [#allocation3], 4
          %s520 = int_to_ptr.vmem [resolvable:$true] %s519
          %522 = dma.hbm_to_vmem [thread:$0]  %s6, 24576, %s520, [#allocation11]
          %s523 = scalar_lea.sflag [#allocation11], 1
          // Predicated region
          $region81: #{tpu_custom_call.1} parent=75 // pred_check
            _
          $region82: #{tpu_custom_call.1} parent=75 // pred_check_branch
            %525 = sbr.rel target = $region84
          $region83: #{tpu_custom_call.1} parent=75 // pred_region
            %526 = sst [smem:[#allocation31]] [#allocation34]
            %527 = sst [smem:[#allocation32]] [#allocation33]
          $region84: #{tpu_custom_call.1} parent=75 // pred_fallthru
            _
          %529 = shalt.err (0)
          %s531 = sshll.u32 [#allocation4], 4
          %s532 = int_to_ptr.vmem [resolvable:$true] %s531
          %534 = dma.hbm_to_vmem [thread:$0]  %s7, 16384, %s532, %s523
          %s535 = sld [smem:[#allocation13]]
          %s536 = sld [smem:[#allocation13 + $0x1]]
          %s537 = smul.addr %s535, 16
          %s538 = scalar_lea.hbm %s1, %s537
          // Predicated region
          $region85: #{tpu_custom_call.1} parent=75 // pred_check
            _
          $region86: #{tpu_custom_call.1} parent=75 // pred_check_branch
            %540 = sbr.rel target = $region88
          $region87: #{tpu_custom_call.1} parent=75 // pred_region
            %541 = sst [smem:[#allocation31]] [#allocation36]
            %542 = sst [smem:[#allocation32]] [#allocation35]
          $region88: #{tpu_custom_call.1} parent=75 // pred_fallthru
            _
          %544 = shalt.err (0)
          %s546 = sshll.u32 [#allocation2], 4
          %s547 = int_to_ptr.vmem [resolvable:$true] %s546
          %549 = dma.hbm_to_vmem [thread:$0]  %s538, 16, %s547, [#allocation10]
          %s550 = smul.addr %s536, 16
          %s551 = scalar_lea.hbm %s1, %s550
          %s552 = scalar_lea.vmem [#allocation2], 1
          %s553 = scalar_lea.sflag [#allocation10], 1
          // Predicated region
          $region89: #{tpu_custom_call.1} parent=75 // pred_check
            _
          $region90: #{tpu_custom_call.1} parent=75 // pred_check_branch
            %555 = sbr.rel target = $region92
          $region91: #{tpu_custom_call.1} parent=75 // pred_region
            %556 = sst [smem:[#allocation31]] [#allocation38]
            %557 = sst [smem:[#allocation32]] [#allocation37]
          $region92: #{tpu_custom_call.1} parent=75 // pred_fallthru
            _
          %559 = shalt.err (0)
          %s561 = sshll.u32 %s552, 4
          %s562 = int_to_ptr.vmem [resolvable:$true] %s561
          %564 = dma.hbm_to_vmem [thread:$0]  %s551, 16, %s562, %s553
          %v565 = vld [vmem:[#allocation14] sm:$0xff]
          %v566 = vld [vmem:[#allocation14 + $0x8] sm:$0xff]
          %v567 = vld [vmem:[#allocation14 + $0x10] sm:$0xff]
          %v568 = vld [vmem:[#allocation14 + $0x18] sm:$0xff]
          %v569 = vld [vmem:[#allocation14 + $0x20] sm:$0xff]
          %v570 = vld [vmem:[#allocation14 + $0x28] sm:$0xff]
          %v571 = vld [vmem:[#allocation14 + $0x30] sm:$0xff]
          %v572 = vld [vmem:[#allocation14 + $0x38] sm:$0xff]
          %v573 = vld [vmem:[#allocation14 + $0x40] sm:$0xff]
          %v574 = vld [vmem:[#allocation14 + $0x48] sm:$0xff]
          %v575 = vld [vmem:[#allocation14 + $0x50] sm:$0xff]
          %v576 = vld [vmem:[#allocation14 + $0x58] sm:$0xff]
          %v577 = vld [vmem:[#allocation14 + $0x60] sm:$0xff]
          %v578 = vld [vmem:[#allocation14 + $0x68] sm:$0xff]
          %v579 = vld [vmem:[#allocation14 + $0x70] sm:$0xff]
          %v580 = vld [vmem:[#allocation14 + $0x78] sm:$0xff]
          %s581 = scalar_lea.vmem [#allocation17], 8
          %v582 = vld [vmem:[%s581] sm:$0xff]
          %v583 = vld [vmem:[#allocation20] sm:$0xff]
          %v584 = vld [vmem:[#allocation20 + $0x8] sm:$0xff]
          %v585 = vld [vmem:[#allocation20 + $0x10] sm:$0xff]
          %v586 = vld [vmem:[#allocation20 + $0x18] sm:$0xff]
          %v587 = vld [vmem:[#allocation20 + $0x20] sm:$0xff]
          %v588 = vld [vmem:[#allocation20 + $0x28] sm:$0xff]
          %v589 = vld [vmem:[#allocation20 + $0x30] sm:$0xff]
          %v590 = vld [vmem:[#allocation20 + $0x38] sm:$0xff]
          %v591 = vld [vmem:[#allocation20 + $0x40] sm:$0xff]
          %v592 = vld [vmem:[#allocation20 + $0x48] sm:$0xff]
          %v593 = vld [vmem:[#allocation20 + $0x50] sm:$0xff]
          %v594 = vld [vmem:[#allocation20 + $0x58] sm:$0xff]
          %v595 = vld [vmem:[#allocation20 + $0x60] sm:$0xff]
          %v596 = vld [vmem:[#allocation20 + $0x68] sm:$0xff]
          %v597 = vld [vmem:[#allocation20 + $0x70] sm:$0xff]
          %v598 = vld [vmem:[#allocation20 + $0x78] sm:$0xff]
          %599 = vmatprep.subr.mxu0 0.0
          %600 = vmatpush1.msra.mxu0 %v583
          %601 = vmatprep.subr.mxu0 0.0
          %602 = vmatpush1.msra.mxu0 %v584
          %603 = vmatprep.subr.mxu0 0.0
          %604 = vmatpush1.msra.mxu0 %v585
          %605 = vmatprep.subr.mxu0 0.0
          %606 = vmatpush1.msra.mxu0 %v586
          %607 = vmatprep.subr.mxu0 0.0
          %608 = vmatpush1.msra.mxu0 %v587
          %609 = vmatprep.subr.mxu0 0.0
          %610 = vmatpush1.msra.mxu0 %v588
          %611 = vmatprep.subr.mxu0 0.0
          %612 = vmatpush1.msra.mxu0 %v589
          %613 = vmatprep.subr.mxu0 0.0
          %614 = vmatpush1.msra.mxu0 %v590
          %615 = vmatprep.subr.mxu0 0.0
          %616 = vmatpush1.msra.mxu0 %v591
          %617 = vmatprep.subr.mxu0 0.0
          %618 = vmatpush1.msra.mxu0 %v592
          %619 = vmatprep.subr.mxu0 0.0
          %620 = vmatpush1.msra.mxu0 %v593
          %621 = vmatprep.subr.mxu0 0.0
          %622 = vmatpush1.msra.mxu0 %v594
          %623 = vmatprep.subr.mxu0 0.0
          %624 = vmatpush1.msra.mxu0 %v595
          %625 = vmatprep.subr.mxu0 0.0
          %626 = vmatpush1.msra.mxu0 %v596
          %627 = vmatprep.subr.mxu0 0.0
          %628 = vmatpush1.msra.mxu0 %v597
          %629 = vmatprep.subr.mxu0 0.0
          %630 = vmatpush1.msra.mxu0 %v598
          %631 = vmatprep.subr.mxu0 0.0
          %632 = vmatpush1.msra.mxu0 0.0
          %633 = vmatprep.subr.mxu0 0.0
          %634 = vmatpush1.msra.mxu0 0.0
          %635 = vmatprep.subr.mxu0 0.0
          %636 = vmatpush1.msra.mxu0 0.0
          %637 = vmatprep.subr.mxu0 0.0
          %638 = vmatpush1.msra.mxu0 0.0
          %639 = vmatprep.subr.mxu0 0.0
          %640 = vmatpush1.msra.mxu0 0.0
          %641 = vmatprep.subr.mxu0 0.0
          %642 = vmatpush1.msra.mxu0 0.0
          %643 = vmatprep.subr.mxu0 0.0
          %644 = vmatpush1.msra.mxu0 0.0
          %645 = vmatprep.subr.mxu0 0.0
          %646 = vmatpush1.msra.mxu0 0.0
          %647 = vmatprep.subr.mxu0 0.0
          %648 = vmatpush1.msra.mxu0 0.0
          %649 = vmatprep.subr.mxu0 0.0
          %650 = vmatpush1.msra.mxu0 0.0
          %651 = vmatprep.subr.mxu0 0.0
          %652 = vmatpush1.msra.mxu0 0.0
          %653 = vmatprep.subr.mxu0 0.0
          %654 = vmatpush1.msra.mxu0 0.0
          %655 = vmatprep.subr.mxu0 0.0
          %656 = vmatpush1.msra.mxu0 0.0
          %657 = vmatprep.subr.mxu0 0.0
          %658 = vmatpush1.msra.mxu0 0.0
          %659 = vmatprep.subr.mxu0 0.0
          %660 = vmatpush1.msra.mxu0 0.0
          %661 = vmatprep.subr.mxu0 0.0
          %662 = vmatpush1.msra.mxu0 0.0
          %663 = vmatprep.mubr.f32.mxu0 0.0
          %664 = vmatmul.mubr.f32.gmra.mrb[0].mxu0 %v582
          %v665 = vpop.f32.mrb[0].mxu0
          %v666 = vadd.f32 0.0, %v665
          %v667 = vpop.f32.mrb[0].mxu0
          %668 = vdwg.mxu0
          %v670 = vcombine.high %v666, %v666
          %v672 = vunpack.c.l.s4 1966171168
          %v673 = vunpack.c.0.s8 %v672
          %v674 = vlaneseq
          %v675 = vshrl.u32 %v674, 7
          %v676 = vsub.s32 %v673, %v675
          %v677 = vrot.slane %v666, %v676
          %v679 = vunpack.c.l.s4 1966171168
          %v680 = vunpack.c.0.s8 %v679
          %v681 = vlaneseq
          %v682 = vshrl.u32 %v681, 7
          %v683 = vsub.s32 %v680, %v682
          %v684 = vrot.slane %v670, %v683
          %v685 = vcombine.high %v677, %v677
          %v686 = vcombine.high %v684, %v684
          %v688 = vunpack.c.l.s4 1966171168
          %v689 = vunpack.c.0.s8 %v688
          %v690 = vlaneseq
          %v691 = vshrl.u32 %v690, 7
          %v692 = vsub.s32 %v689, %v691
          %v693 = vrot.slane %v677, %v692
          %v695 = vunpack.c.l.s4 1966171168
          %v696 = vunpack.c.0.s8 %v695
          %v697 = vlaneseq
          %v698 = vshrl.u32 %v697, 7
          %v699 = vsub.s32 %v696, %v698
          %v700 = vrot.slane %v684, %v699
          %v702 = vunpack.c.l.s4 1966171168
          %v703 = vunpack.c.0.s8 %v702
          %v704 = vlaneseq
          %v705 = vshrl.u32 %v704, 7
          %v706 = vsub.s32 %v703, %v705
          %v707 = vrot.slane %v685, %v706
          %v709 = vunpack.c.l.s4 1966171168
          %v710 = vunpack.c.0.s8 %v709
          %v711 = vlaneseq
          %v712 = vshrl.u32 %v711, 7
          %v713 = vsub.s32 %v710, %v712
          %v714 = vrot.slane %v686, %v713
          %v715 = vcombine.high %v693, %v693
          %v716 = vcombine.high %v700, %v700
          %v717 = vcombine.high %v707, %v707
          %v718 = vcombine.high %v714, %v714
          %v719 = vlaneseq
          %v720 = vshrl.u32 %v719, 7
          %v721 = vsub.s32 0, %v720
          %v722 = vrot.slane %v693, %v721
          %v723 = vlaneseq
          %v724 = vshrl.u32 %v723, 7
          %v725 = vsub.s32 0, %v724
          %v726 = vrot.slane %v707, %v725
          %v727 = vlaneseq
          %v728 = vshrl.u32 %v727, 7
          %v729 = vsub.s32 0, %v728
          %v730 = vrot.slane %v715, %v729
          %v731 = vlaneseq
          %v732 = vshrl.u32 %v731, 7
          %v733 = vsub.s32 0, %v732
          %v734 = vrot.slane %v717, %v733
          %v735 = vlaneseq
          %v736 = vshrl.u32 %v735, 7
          %v737 = vsub.s32 0, %v736
          %v738 = vrot.slane %v700, %v737
          %v739 = vlaneseq
          %v740 = vshrl.u32 %v739, 7
          %v741 = vsub.s32 0, %v740
          %v742 = vrot.slane %v714, %v741
          %v743 = vlaneseq
          %v744 = vshrl.u32 %v743, 7
          %v745 = vsub.s32 0, %v744
          %v746 = vrot.slane %v716, %v745
          %v747 = vlaneseq
          %v748 = vshrl.u32 %v747, 7
          %v749 = vsub.s32 0, %v748
          %v750 = vrot.slane %v718, %v749
          %v759 = vmul.f32 %v565, %v722
          %v760 = vmul.f32 %v566, %v722
          %v761 = vmul.f32 %v567, %v726
          %v762 = vmul.f32 %v568, %v726
          %v763 = vmul.f32 %v569, %v730
          %v764 = vmul.f32 %v570, %v730
          %v765 = vmul.f32 %v571, %v734
          %v766 = vmul.f32 %v572, %v734
          %v767 = vmul.f32 %v573, %v738
          %v768 = vmul.f32 %v574, %v738
          %v769 = vmul.f32 %v575, %v742
          %v770 = vmul.f32 %v576, %v742
          %v771 = vmul.f32 %v577, %v746
          %v772 = vmul.f32 %v578, %v746
          %v773 = vmul.f32 %v579, %v750
          %v774 = vmul.f32 %v580, %v750
          %775 = vadd.xlane.f32.xlu0 %v759
          %v776 = vpop.xlane.xlu0 %775
          %777 = vadd.xlane.f32.xlu0 %v760
          %v778 = vpop.xlane.xlu0 %777
          %779 = vadd.xlane.f32.xlu0 %v761
          %v780 = vpop.xlane.xlu0 %779
          %781 = vadd.xlane.f32.xlu0 %v762
          %v782 = vpop.xlane.xlu0 %781
          %783 = vadd.xlane.f32.xlu0 %v763
          %v784 = vpop.xlane.xlu0 %783
          %785 = vadd.xlane.f32.xlu0 %v764
          %v786 = vpop.xlane.xlu0 %785
          %787 = vadd.xlane.f32.xlu0 %v765
          %v788 = vpop.xlane.xlu0 %787
          %789 = vadd.xlane.f32.xlu0 %v766
          %v790 = vpop.xlane.xlu0 %789
          %791 = vadd.xlane.f32.xlu0 %v767
          %v792 = vpop.xlane.xlu0 %791
          %793 = vadd.xlane.f32.xlu0 %v768
          %v794 = vpop.xlane.xlu0 %793
          %795 = vadd.xlane.f32.xlu0 %v769
          %v796 = vpop.xlane.xlu0 %795
          %797 = vadd.xlane.f32.xlu0 %v770
          %v798 = vpop.xlane.xlu0 %797
          %799 = vadd.xlane.f32.xlu0 %v771
          %v800 = vpop.xlane.xlu0 %799
          %801 = vadd.xlane.f32.xlu0 %v772
          %v802 = vpop.xlane.xlu0 %801
          %803 = vadd.xlane.f32.xlu0 %v773
          %v804 = vpop.xlane.xlu0 %803
          %805 = vadd.xlane.f32.xlu0 %v774
          %v806 = vpop.xlane.xlu0 %805
          %v807 = vlaneseq
          %v808 = vand.u32 %v807, 127
          %vm809 = vcmp.lt.s32.totalorder %v808, 10
          %v826 = vlaneseq
          %v827 = vshrl.u32 %v826, 7
          %v828 = vsub.s32 %v808, %v827
          %v829 = vrot.slane %v776, %v828
          %v830 = vadd.s32 %v808, 4294967288
          %v831 = vlaneseq
          %v832 = vshrl.u32 %v831, 7
          %v833 = vsub.s32 %v830, %v832
          %v834 = vrot.slane %v778, %v833
          %vm835 = vcmask 130112
          %v836 = vsel %vm835, %v834, %v829
          %v837 = vlaneseq
          %v838 = vshrl.u32 %v837, 7
          %v839 = vsub.s32 %v808, %v838
          %v840 = vrot.slane %v780, %v839
          %v841 = vlaneseq
          %v842 = vshrl.u32 %v841, 7
          %v843 = vsub.s32 %v830, %v842
          %v844 = vrot.slane %v782, %v843
          %v845 = vsel %vm835, %v844, %v840
          %v846 = vlaneseq
          %v847 = vshrl.u32 %v846, 7
          %v848 = vsub.s32 %v808, %v847
          %v849 = vrot.slane %v784, %v848
          %v850 = vlaneseq
          %v851 = vshrl.u32 %v850, 7
          %v852 = vsub.s32 %v830, %v851
          %v853 = vrot.slane %v786, %v852
          %v854 = vsel %vm835, %v853, %v849
          %v855 = vlaneseq
          %v856 = vshrl.u32 %v855, 7
          %v857 = vsub.s32 %v808, %v856
          %v858 = vrot.slane %v788, %v857
          %v859 = vlaneseq
          %v860 = vshrl.u32 %v859, 7
          %v861 = vsub.s32 %v830, %v860
          %v862 = vrot.slane %v790, %v861
          %v863 = vsel %vm835, %v862, %v858
          %v864 = vlaneseq
          %v865 = vshrl.u32 %v864, 7
          %v866 = vsub.s32 %v808, %v865
          %v867 = vrot.slane %v792, %v866
          %v868 = vlaneseq
          %v869 = vshrl.u32 %v868, 7
          %v870 = vsub.s32 %v830, %v869
          %v871 = vrot.slane %v794, %v870
          %v872 = vsel %vm835, %v871, %v867
          %v873 = vlaneseq
          %v874 = vshrl.u32 %v873, 7
          %v875 = vsub.s32 %v808, %v874
          %v876 = vrot.slane %v796, %v875
          %v877 = vlaneseq
          %v878 = vshrl.u32 %v877, 7
          %v879 = vsub.s32 %v830, %v878
          %v880 = vrot.slane %v798, %v879
          %v881 = vsel %vm835, %v880, %v876
          %v882 = vlaneseq
          %v883 = vshrl.u32 %v882, 7
          %v884 = vsub.s32 %v808, %v883
          %v885 = vrot.slane %v800, %v884
          %v886 = vlaneseq
          %v887 = vshrl.u32 %v886, 7
          %v888 = vsub.s32 %v830, %v887
          %v889 = vrot.slane %v802, %v888
          %v890 = vsel %vm835, %v889, %v885
          %v891 = vlaneseq
          %v892 = vshrl.u32 %v891, 7
          %v893 = vsub.s32 %v808, %v892
          %v894 = vrot.slane %v804, %v893
          %v895 = vlaneseq
          %v896 = vshrl.u32 %v895, 7
          %v897 = vsub.s32 %v830, %v896
          %v898 = vrot.slane %v806, %v897
          %v899 = vsel %vm835, %v898, %v894
          %vm900 = vcmask 1041409
          %v901 = vsel %vm900, %v845, %v836
          %vm902 = vcmask 1042434
          %v903 = vsel %vm902, %v854, %v901
          %vm904 = vcmask 1043459
          %v905 = vsel %vm904, %v863, %v903
          %vm906 = vcmask 1044484
          %v907 = vsel %vm906, %v872, %v905
          %vm908 = vcmask 1045509
          %v909 = vsel %vm908, %v881, %v907
          %vm910 = vcmask 1046534
          %v911 = vsel %vm910, %v890, %v909
          %vm912 = vcmask 1047559
          %v913 = vsel %vm912, %v899, %v911
          %v915 = vsel %vm809, %v913, -1e+30
          %vm916 = vcmask 130048
          %v917 = vsel %vm916, %v915, -inf
          %918 = vmax.xlane.f32.xlu0 %v917
          %v919 = vpop.xlane.xlu0 %918
          %v920 = vsub.f32 %v915, %v919
          %v921 = vmul.f32 %v920, 1.442695
          %v922 = vpow.pop %v921
          %v923 = vsel %vm916, %v922, 0.0
          %924 = vadd.xlane.f32.xlu0 %v923
          %v925 = vpop.xlane.xlu0 %924
          %v926 = vrcp.pop %v925
          %v927 = vmul.f32 %v922, %v926
          %928 = vst.msk [vmem:[#allocation27] sm:$0xff] %vm916, %v927
          %v929 = vlaneseq
          %v930 = vshrl.u32 %v929, 7
          %v931 = vsub.s32 0, %v930
          %v932 = vrot.slane %v927, %v931
          %934 = vbcast.lane.b32.xlu0 %v932, 256
          %v935 = vpop.permute.xlu0 %934
          %s937 = sor.u32 256, 8
          %938 = vbcast.lane.b32.xlu0 %v932, %s937
          %v939 = vpop.permute.xlu0 %938
          %v940 = vlaneseq
          %v941 = vshrl.u32 %v940, 7
          %v942 = vsub.s32 1, %v941
          %v943 = vrot.slane %v927, %v942
          %945 = vbcast.lane.b32.xlu0 %v943, 256
          %v946 = vpop.permute.xlu0 %945
          %s948 = sor.u32 256, 8
          %949 = vbcast.lane.b32.xlu0 %v943, %s948
          %v950 = vpop.permute.xlu0 %949
          %v951 = vlaneseq
          %v952 = vshrl.u32 %v951, 7
          %v953 = vsub.s32 2, %v952
          %v954 = vrot.slane %v927, %v953
          %956 = vbcast.lane.b32.xlu0 %v954, 256
          %v957 = vpop.permute.xlu0 %956
          %s959 = sor.u32 256, 8
          %960 = vbcast.lane.b32.xlu0 %v954, %s959
          %v961 = vpop.permute.xlu0 %960
          %v962 = vlaneseq
          %v963 = vshrl.u32 %v962, 7
          %v964 = vsub.s32 3, %v963
          %v965 = vrot.slane %v927, %v964
          %967 = vbcast.lane.b32.xlu0 %v965, 256
          %v968 = vpop.permute.xlu0 %967
          %s970 = sor.u32 256, 8
          %971 = vbcast.lane.b32.xlu0 %v965, %s970
          %v972 = vpop.permute.xlu0 %971
          %v973 = vlaneseq
          %v974 = vshrl.u32 %v973, 7
          %v975 = vsub.s32 4, %v974
          %v976 = vrot.slane %v927, %v975
          %978 = vbcast.lane.b32.xlu0 %v976, 256
          %v979 = vpop.permute.xlu0 %978
          %s981 = sor.u32 256, 8
          %982 = vbcast.lane.b32.xlu0 %v976, %s981
          %v983 = vpop.permute.xlu0 %982
          %v984 = vlaneseq
          %v985 = vshrl.u32 %v984, 7
          %v986 = vsub.s32 5, %v985
          %v987 = vrot.slane %v927, %v986
          %989 = vbcast.lane.b32.xlu0 %v987, 256
          %v990 = vpop.permute.xlu0 %989
          %s992 = sor.u32 256, 8
          %993 = vbcast.lane.b32.xlu0 %v987, %s992
          %v994 = vpop.permute.xlu0 %993
          %v995 = vlaneseq
          %v996 = vshrl.u32 %v995, 7
          %v997 = vsub.s32 6, %v996
          %v998 = vrot.slane %v927, %v997
          %1000 = vbcast.lane.b32.xlu0 %v998, 256
          %v1001 = vpop.permute.xlu0 %1000
          %s1003 = sor.u32 256, 8
          %1004 = vbcast.lane.b32.xlu0 %v998, %s1003
          %v1005 = vpop.permute.xlu0 %1004
          %v1006 = vlaneseq
          %v1007 = vshrl.u32 %v1006, 7
          %v1008 = vsub.s32 7, %v1007
          %v1009 = vrot.slane %v927, %v1008
          %1011 = vbcast.lane.b32.xlu0 %v1009, 256
          %v1012 = vpop.permute.xlu0 %1011
          %s1014 = sor.u32 256, 8
          %1015 = vbcast.lane.b32.xlu0 %v1009, %s1014
          %v1016 = vpop.permute.xlu0 %1015
          %v1017 = vmul.f32 %v935, %v565
          %v1018 = vmul.f32 %v939, %v566
          %v1019 = vmul.f32 %v946, %v567
          %v1020 = vmul.f32 %v950, %v568
          %v1021 = vmul.f32 %v957, %v569
          %v1022 = vmul.f32 %v961, %v570
          %v1023 = vmul.f32 %v968, %v571
          %v1024 = vmul.f32 %v972, %v572
          %v1025 = vmul.f32 %v979, %v573
          %v1026 = vmul.f32 %v983, %v574
          %v1027 = vmul.f32 %v990, %v575
          %v1028 = vmul.f32 %v994, %v576
          %v1029 = vmul.f32 %v1001, %v577
          %v1030 = vmul.f32 %v1005, %v578
          %v1031 = vmul.f32 %v1012, %v579
          %v1032 = vmul.f32 %v1016, %v580
          %v1033 = vadd.f32 %v1017, %v1018
          %v1034 = vrot.slane %v1033, 4
          %v1035 = vadd.f32 %v1033, %v1034
          %v1036 = vrot.slane %v1035, 2
          %v1037 = vadd.f32 %v1035, %v1036
          %v1038 = vrot.slane %v1037, 1
          %v1039 = vadd.f32 %v1037, %v1038
          %v1040 = vadd.f32 %v1019, %v1020
          %v1041 = vrot.slane %v1040, 4
          %v1042 = vadd.f32 %v1040, %v1041
          %v1043 = vrot.slane %v1042, 2
          %v1044 = vadd.f32 %v1042, %v1043
          %v1045 = vrot.slane %v1044, 1
          %v1046 = vadd.f32 %v1044, %v1045
          %v1047 = vadd.f32 %v1021, %v1022
          %v1048 = vrot.slane %v1047, 4
          %v1049 = vadd.f32 %v1047, %v1048
          %v1050 = vrot.slane %v1049, 2
          %v1051 = vadd.f32 %v1049, %v1050
          %v1052 = vrot.slane %v1051, 1
          %v1053 = vadd.f32 %v1051, %v1052
          %v1054 = vadd.f32 %v1023, %v1024
          %v1055 = vrot.slane %v1054, 4
          %v1056 = vadd.f32 %v1054, %v1055
          %v1057 = vrot.slane %v1056, 2
          %v1058 = vadd.f32 %v1056, %v1057
          %v1059 = vrot.slane %v1058, 1
          %v1060 = vadd.f32 %v1058, %v1059
          %v1061 = vadd.f32 %v1025, %v1026
          %v1062 = vrot.slane %v1061, 4
          %v1063 = vadd.f32 %v1061, %v1062
          %v1064 = vrot.slane %v1063, 2
          %v1065 = vadd.f32 %v1063, %v1064
          %v1066 = vrot.slane %v1065, 1
          %v1067 = vadd.f32 %v1065, %v1066
          %v1068 = vadd.f32 %v1027, %v1028
          %v1069 = vrot.slane %v1068, 4
          %v1070 = vadd.f32 %v1068, %v1069
          %v1071 = vrot.slane %v1070, 2
          %v1072 = vadd.f32 %v1070, %v1071
          %v1073 = vrot.slane %v1072, 1
          %v1074 = vadd.f32 %v1072, %v1073
          %v1075 = vadd.f32 %v1029, %v1030
          %v1076 = vrot.slane %v1075, 4
          %v1077 = vadd.f32 %v1075, %v1076
          %v1078 = vrot.slane %v1077, 2
          %v1079 = vadd.f32 %v1077, %v1078
          %v1080 = vrot.slane %v1079, 1
          %v1081 = vadd.f32 %v1079, %v1080
          %v1082 = vadd.f32 %v1031, %v1032
          %v1083 = vrot.slane %v1082, 4
          %v1084 = vadd.f32 %v1082, %v1083
          %v1085 = vrot.slane %v1084, 2
          %v1086 = vadd.f32 %v1084, %v1085
          %v1087 = vrot.slane %v1086, 1
          %v1088 = vadd.f32 %v1086, %v1087
          %s1089 = smul.u32 1, 1
          %s1090 = sshll.u32 %s1089, 4
          %1091 = dma.done [#allocation10], %s1090
          %s1092 = sshll.u32 %s1089, 4
          %1093 = dma.done %s553, %s1092
          %v1094 = vld [vmem:[#allocation2] sm:$0xff]
          %v1095 = vlaneseq
          %v1096 = vshrl.u32 %v1095, 7
          %vm1097 = vcmp.lt.s32.totalorder %v1096, 2
          %v1098 = vsel %vm1097, %v1094, 0.0
          %1099 = vst [vmem:[#allocation5] sm:$0xff] %v1098
          %v1108 = vsel %vm900, %v1046, %v1039
          %v1109 = vsel %vm902, %v1053, %v1108
          %v1110 = vsel %vm904, %v1060, %v1109
          %v1111 = vsel %vm906, %v1067, %v1110
          %v1112 = vsel %vm908, %v1074, %v1111
          %v1113 = vsel %vm910, %v1081, %v1112
          %v1114 = vsel %vm912, %v1088, %v1113
          %1116 = vst [vmem:[#allocation5 + $0x8] sm:$0xff] %v1114
          %v1117 = vld [vmem:[#allocation17] sm:$0xff]
          %1118 = vst [vmem:[#allocation5 + $0x10] sm:$0xff] %v1117
          %s1119 = smul.u32 8, 48
          %s1120 = smul.u32 %s1119, 4
          %s1121 = sshll.u32 %s1120, 4
          %1122 = dma.done [#allocation11], %s1121
          %v1123 = vld [vmem:[#allocation5] sm:$0xff]
          %v1124 = vld [vmem:[#allocation5 + $0x8] sm:$0xff]
          %v1125 = vld [vmem:[#allocation5 + $0x10] sm:$0xff]
          %v1126 = vld [vmem:[#allocation3] sm:$0xff]
          %v1127 = vld [vmem:[#allocation3 + $0x8] sm:$0xff]
          %v1128 = vld [vmem:[#allocation3 + $0x10] sm:$0xff]
          %v1129 = vld [vmem:[#allocation3 + $0x18] sm:$0xff]
          %v1130 = vld [vmem:[#allocation3 + $0x20] sm:$0xff]
          %v1131 = vld [vmem:[#allocation3 + $0x28] sm:$0xff]
          %v1132 = vld [vmem:[#allocation3 + $0x30] sm:$0xff]
          %v1133 = vld [vmem:[#allocation3 + $0x38] sm:$0xff]
          %v1134 = vld [vmem:[#allocation3 + $0x40] sm:$0xff]
          %v1135 = vld [vmem:[#allocation3 + $0x48] sm:$0xff]
          %v1136 = vld [vmem:[#allocation3 + $0x50] sm:$0xff]
          %v1137 = vld [vmem:[#allocation3 + $0x58] sm:$0xff]
          %v1138 = vld [vmem:[#allocation3 + $0x60] sm:$0xff]
          %v1139 = vld [vmem:[#allocation3 + $0x68] sm:$0xff]
          %v1140 = vld [vmem:[#allocation3 + $0x70] sm:$0xff]
          %v1141 = vld [vmem:[#allocation3 + $0x78] sm:$0xff]
          %v1142 = vld [vmem:[#allocation3 + $0x80] sm:$0xff]
          %v1143 = vld [vmem:[#allocation3 + $0x88] sm:$0xff]
          %v1144 = vld [vmem:[#allocation3 + $0x90] sm:$0xff]
          %v1145 = vld [vmem:[#allocation3 + $0x98] sm:$0xff]
          %v1146 = vld [vmem:[#allocation3 + $0xa0] sm:$0xff]
          %v1147 = vld [vmem:[#allocation3 + $0xa8] sm:$0xff]
          %v1148 = vld [vmem:[#allocation3 + $0xb0] sm:$0xff]
          %v1149 = vld [vmem:[#allocation3 + $0xb8] sm:$0xff]
          %v1150 = vld [vmem:[#allocation3 + $0xc0] sm:$0xff]
          %v1151 = vld [vmem:[#allocation3 + $0xc8] sm:$0xff]
          %v1152 = vld [vmem:[#allocation3 + $0xd0] sm:$0xff]
          %v1153 = vld [vmem:[#allocation3 + $0xd8] sm:$0xff]
          %v1154 = vld [vmem:[#allocation3 + $0xe0] sm:$0xff]
          %v1155 = vld [vmem:[#allocation3 + $0xe8] sm:$0xff]
          %v1156 = vld [vmem:[#allocation3 + $0xf0] sm:$0xff]
          %v1157 = vld [vmem:[#allocation3 + $0xf8] sm:$0xff]
          %v1158 = vld [vmem:[#allocation3 + $0x100] sm:$0xff]
          %v1159 = vld [vmem:[#allocation3 + $0x108] sm:$0xff]
          %v1160 = vld [vmem:[#allocation3 + $0x110] sm:$0xff]
          %v1161 = vld [vmem:[#allocation3 + $0x118] sm:$0xff]
          %v1162 = vld [vmem:[#allocation3 + $0x120] sm:$0xff]
          %v1163 = vld [vmem:[#allocation3 + $0x128] sm:$0xff]
          %v1164 = vld [vmem:[#allocation3 + $0x130] sm:$0xff]
          %v1165 = vld [vmem:[#allocation3 + $0x138] sm:$0xff]
          %v1166 = vld [vmem:[#allocation3 + $0x140] sm:$0xff]
          %v1167 = vld [vmem:[#allocation3 + $0x148] sm:$0xff]
          %v1168 = vld [vmem:[#allocation3 + $0x150] sm:$0xff]
          %v1169 = vld [vmem:[#allocation3 + $0x158] sm:$0xff]
          %v1170 = vld [vmem:[#allocation3 + $0x160] sm:$0xff]
          %v1171 = vld [vmem:[#allocation3 + $0x168] sm:$0xff]
          %v1172 = vld [vmem:[#allocation3 + $0x170] sm:$0xff]
          %v1173 = vld [vmem:[#allocation3 + $0x178] sm:$0xff]
          %v1174 = vld [vmem:[#allocation3 + $0x180] sm:$0xff]
          %v1175 = vld [vmem:[#allocation3 + $0x188] sm:$0xff]
          %v1176 = vld [vmem:[#allocation3 + $0x190] sm:$0xff]
          %v1177 = vld [vmem:[#allocation3 + $0x198] sm:$0xff]
          %v1178 = vld [vmem:[#allocation3 + $0x1a0] sm:$0xff]
          %v1179 = vld [vmem:[#allocation3 + $0x1a8] sm:$0xff]
          %v1180 = vld [vmem:[#allocation3 + $0x1b0] sm:$0xff]
          %v1181 = vld [vmem:[#allocation3 + $0x1b8] sm:$0xff]
          %v1182 = vld [vmem:[#allocation3 + $0x1c0] sm:$0xff]
          %v1183 = vld [vmem:[#allocation3 + $0x1c8] sm:$0xff]
          %v1184 = vld [vmem:[#allocation3 + $0x1d0] sm:$0xff]
          %v1185 = vld [vmem:[#allocation3 + $0x1d8] sm:$0xff]
          %v1186 = vld [vmem:[#allocation3 + $0x1e0] sm:$0xff]
          %v1187 = vld [vmem:[#allocation3 + $0x1e8] sm:$0xff]
          %v1188 = vld [vmem:[#allocation3 + $0x1f0] sm:$0xff]
          %v1189 = vld [vmem:[#allocation3 + $0x1f8] sm:$0xff]
          %v1190 = vld [vmem:[#allocation3 + $0x200] sm:$0xff]
          %v1191 = vld [vmem:[#allocation3 + $0x208] sm:$0xff]
          %v1192 = vld [vmem:[#allocation3 + $0x210] sm:$0xff]
          %v1193 = vld [vmem:[#allocation3 + $0x218] sm:$0xff]
          %v1194 = vld [vmem:[#allocation3 + $0x220] sm:$0xff]
          %v1195 = vld [vmem:[#allocation3 + $0x228] sm:$0xff]
          %v1196 = vld [vmem:[#allocation3 + $0x230] sm:$0xff]
          %v1197 = vld [vmem:[#allocation3 + $0x238] sm:$0xff]
          %v1198 = vld [vmem:[#allocation3 + $0x240] sm:$0xff]
          %v1199 = vld [vmem:[#allocation3 + $0x248] sm:$0xff]
          %v1200 = vld [vmem:[#allocation3 + $0x250] sm:$0xff]
          %v1201 = vld [vmem:[#allocation3 + $0x258] sm:$0xff]
          %v1202 = vld [vmem:[#allocation3 + $0x260] sm:$0xff]
          %v1203 = vld [vmem:[#allocation3 + $0x268] sm:$0xff]
          %v1204 = vld [vmem:[#allocation3 + $0x270] sm:$0xff]
          %v1205 = vld [vmem:[#allocation3 + $0x278] sm:$0xff]
          %v1206 = vld [vmem:[#allocation3 + $0x280] sm:$0xff]
          %v1207 = vld [vmem:[#allocation3 + $0x288] sm:$0xff]
          %v1208 = vld [vmem:[#allocation3 + $0x290] sm:$0xff]
          %v1209 = vld [vmem:[#allocation3 + $0x298] sm:$0xff]
          %v1210 = vld [vmem:[#allocation3 + $0x2a0] sm:$0xff]
          %v1211 = vld [vmem:[#allocation3 + $0x2a8] sm:$0xff]
          %v1212 = vld [vmem:[#allocation3 + $0x2b0] sm:$0xff]
          %v1213 = vld [vmem:[#allocation3 + $0x2b8] sm:$0xff]
          %v1214 = vld [vmem:[#allocation3 + $0x2c0] sm:$0xff]
          %v1215 = vld [vmem:[#allocation3 + $0x2c8] sm:$0xff]
          %v1216 = vld [vmem:[#allocation3 + $0x2d0] sm:$0xff]
          %v1217 = vld [vmem:[#allocation3 + $0x2d8] sm:$0xff]
          %v1218 = vld [vmem:[#allocation3 + $0x2e0] sm:$0xff]
          %v1219 = vld [vmem:[#allocation3 + $0x2e8] sm:$0xff]
          %v1220 = vld [vmem:[#allocation3 + $0x2f0] sm:$0xff]
          %v1221 = vld [vmem:[#allocation3 + $0x2f8] sm:$0xff]
          %v1222 = vld [vmem:[#allocation3 + $0x300] sm:$0xff]
          %v1223 = vld [vmem:[#allocation3 + $0x308] sm:$0xff]
          %v1224 = vld [vmem:[#allocation3 + $0x310] sm:$0xff]
          %v1225 = vld [vmem:[#allocation3 + $0x318] sm:$0xff]
          %v1226 = vld [vmem:[#allocation3 + $0x320] sm:$0xff]
          %v1227 = vld [vmem:[#allocation3 + $0x328] sm:$0xff]
          %v1228 = vld [vmem:[#allocation3 + $0x330] sm:$0xff]
          %v1229 = vld [vmem:[#allocation3 + $0x338] sm:$0xff]
          %v1230 = vld [vmem:[#allocation3 + $0x340] sm:$0xff]
          %v1231 = vld [vmem:[#allocation3 + $0x348] sm:$0xff]
          %v1232 = vld [vmem:[#allocation3 + $0x350] sm:$0xff]
          %v1233 = vld [vmem:[#allocation3 + $0x358] sm:$0xff]
          %v1234 = vld [vmem:[#allocation3 + $0x360] sm:$0xff]
          %v1235 = vld [vmem:[#allocation3 + $0x368] sm:$0xff]
          %v1236 = vld [vmem:[#allocation3 + $0x370] sm:$0xff]
          %v1237 = vld [vmem:[#allocation3 + $0x378] sm:$0xff]
          %v1238 = vld [vmem:[#allocation3 + $0x380] sm:$0xff]
          %v1239 = vld [vmem:[#allocation3 + $0x388] sm:$0xff]
          %v1240 = vld [vmem:[#allocation3 + $0x390] sm:$0xff]
          %v1241 = vld [vmem:[#allocation3 + $0x398] sm:$0xff]
          %v1242 = vld [vmem:[#allocation3 + $0x3a0] sm:$0xff]
          %v1243 = vld [vmem:[#allocation3 + $0x3a8] sm:$0xff]
          %v1244 = vld [vmem:[#allocation3 + $0x3b0] sm:$0xff]
          %v1245 = vld [vmem:[#allocation3 + $0x3b8] sm:$0xff]
          %v1246 = vld [vmem:[#allocation3 + $0x3c0] sm:$0xff]
          %v1247 = vld [vmem:[#allocation3 + $0x3c8] sm:$0xff]
          %v1248 = vld [vmem:[#allocation3 + $0x3d0] sm:$0xff]
          %v1249 = vld [vmem:[#allocation3 + $0x3d8] sm:$0xff]
          %v1250 = vld [vmem:[#allocation3 + $0x3e0] sm:$0xff]
          %v1251 = vld [vmem:[#allocation3 + $0x3e8] sm:$0xff]
          %v1252 = vld [vmem:[#allocation3 + $0x3f0] sm:$0xff]
          %v1253 = vld [vmem:[#allocation3 + $0x3f8] sm:$0xff]
          %v1254 = vld [vmem:[#allocation3 + $0x400] sm:$0xff]
          %v1255 = vld [vmem:[#allocation3 + $0x408] sm:$0xff]
          %v1256 = vld [vmem:[#allocation3 + $0x410] sm:$0xff]
          %v1257 = vld [vmem:[#allocation3 + $0x418] sm:$0xff]
          %v1258 = vld [vmem:[#allocation3 + $0x420] sm:$0xff]
          %v1259 = vld [vmem:[#allocation3 + $0x428] sm:$0xff]
          %v1260 = vld [vmem:[#allocation3 + $0x430] sm:$0xff]
          %v1261 = vld [vmem:[#allocation3 + $0x438] sm:$0xff]
          %v1262 = vld [vmem:[#allocation3 + $0x440] sm:$0xff]
          %v1263 = vld [vmem:[#allocation3 + $0x448] sm:$0xff]
          %v1264 = vld [vmem:[#allocation3 + $0x450] sm:$0xff]
          %v1265 = vld [vmem:[#allocation3 + $0x458] sm:$0xff]
          %v1266 = vld [vmem:[#allocation3 + $0x460] sm:$0xff]
          %v1267 = vld [vmem:[#allocation3 + $0x468] sm:$0xff]
          %v1268 = vld [vmem:[#allocation3 + $0x470] sm:$0xff]
          %v1269 = vld [vmem:[#allocation3 + $0x478] sm:$0xff]
          %v1270 = vld [vmem:[#allocation3 + $0x480] sm:$0xff]
          %v1271 = vld [vmem:[#allocation3 + $0x488] sm:$0xff]
          %v1272 = vld [vmem:[#allocation3 + $0x490] sm:$0xff]
          %v1273 = vld [vmem:[#allocation3 + $0x498] sm:$0xff]
          %v1274 = vld [vmem:[#allocation3 + $0x4a0] sm:$0xff]
          %v1275 = vld [vmem:[#allocation3 + $0x4a8] sm:$0xff]
          %v1276 = vld [vmem:[#allocation3 + $0x4b0] sm:$0xff]
          %v1277 = vld [vmem:[#allocation3 + $0x4b8] sm:$0xff]
          %v1278 = vld [vmem:[#allocation3 + $0x4c0] sm:$0xff]
          %v1279 = vld [vmem:[#allocation3 + $0x4c8] sm:$0xff]
          %v1280 = vld [vmem:[#allocation3 + $0x4d0] sm:$0xff]
          %v1281 = vld [vmem:[#allocation3 + $0x4d8] sm:$0xff]
          %v1282 = vld [vmem:[#allocation3 + $0x4e0] sm:$0xff]
          %v1283 = vld [vmem:[#allocation3 + $0x4e8] sm:$0xff]
          %v1284 = vld [vmem:[#allocation3 + $0x4f0] sm:$0xff]
          %v1285 = vld [vmem:[#allocation3 + $0x4f8] sm:$0xff]
          %v1286 = vld [vmem:[#allocation3 + $0x500] sm:$0xff]
          %v1287 = vld [vmem:[#allocation3 + $0x508] sm:$0xff]
          %v1288 = vld [vmem:[#allocation3 + $0x510] sm:$0xff]
          %v1289 = vld [vmem:[#allocation3 + $0x518] sm:$0xff]
          %v1290 = vld [vmem:[#allocation3 + $0x520] sm:$0xff]
          %v1291 = vld [vmem:[#allocation3 + $0x528] sm:$0xff]
          %v1292 = vld [vmem:[#allocation3 + $0x530] sm:$0xff]
          %v1293 = vld [vmem:[#allocation3 + $0x538] sm:$0xff]
          %v1294 = vld [vmem:[#allocation3 + $0x540] sm:$0xff]
          %v1295 = vld [vmem:[#allocation3 + $0x548] sm:$0xff]
          %v1296 = vld [vmem:[#allocation3 + $0x550] sm:$0xff]
          %v1297 = vld [vmem:[#allocation3 + $0x558] sm:$0xff]
          %v1298 = vld [vmem:[#allocation3 + $0x560] sm:$0xff]
          %v1299 = vld [vmem:[#allocation3 + $0x568] sm:$0xff]
          %v1300 = vld [vmem:[#allocation3 + $0x570] sm:$0xff]
          %v1301 = vld [vmem:[#allocation3 + $0x578] sm:$0xff]
          %v1302 = vld [vmem:[#allocation3 + $0x580] sm:$0xff]
          %v1303 = vld [vmem:[#allocation3 + $0x588] sm:$0xff]
          %v1304 = vld [vmem:[#allocation3 + $0x590] sm:$0xff]
          %v1305 = vld [vmem:[#allocation3 + $0x598] sm:$0xff]
          %v1306 = vld [vmem:[#allocation3 + $0x5a0] sm:$0xff]
          %v1307 = vld [vmem:[#allocation3 + $0x5a8] sm:$0xff]
          %v1308 = vld [vmem:[#allocation3 + $0x5b0] sm:$0xff]
          %v1309 = vld [vmem:[#allocation3 + $0x5b8] sm:$0xff]
          %v1310 = vld [vmem:[#allocation3 + $0x5c0] sm:$0xff]
          %v1311 = vld [vmem:[#allocation3 + $0x5c8] sm:$0xff]
          %v1312 = vld [vmem:[#allocation3 + $0x5d0] sm:$0xff]
          %v1313 = vld [vmem:[#allocation3 + $0x5d8] sm:$0xff]
          %v1314 = vld [vmem:[#allocation3 + $0x5e0] sm:$0xff]
          %v1315 = vld [vmem:[#allocation3 + $0x5e8] sm:$0xff]
          %v1316 = vld [vmem:[#allocation3 + $0x5f0] sm:$0xff]
          %v1317 = vld [vmem:[#allocation3 + $0x5f8] sm:$0xff]
          %v1318 = vld [vmem:[%s8] sm:$0xf]
          %v1320 = vlaneseq
          %v1321 = vshrl.u32 %v1320, 7
          %v1322 = vsub.s32 0, %v1321
          %v1323 = vrot.slane %v1318, %v1322
          %v1324 = vlaneseq
          %v1325 = vshrl.u32 %v1324, 7
          %v1326 = vsub.s32 1, %v1325
          %v1327 = vrot.slane %v1318, %v1326
          %v1328 = vlaneseq
          %v1329 = vshrl.u32 %v1328, 7
          %v1330 = vsub.s32 2, %v1329
          %v1331 = vrot.slane %v1318, %v1330
          %v1332 = vlaneseq
          %v1333 = vshrl.u32 %v1332, 7
          %v1334 = vsub.s32 3, %v1333
          %v1335 = vrot.slane %v1318, %v1334
          %1340 = vmatprep.subr.mxu0 %v1127
          %1341 = vmatpush1.msra.mxu0 %v1126
          %1342 = vmatprep.subr.mxu0 %v1131
          %1343 = vmatpush1.msra.mxu0 %v1130
          %1344 = vmatprep.subr.mxu0 %v1135
          %1345 = vmatpush1.msra.mxu0 %v1134
          %1346 = vmatprep.subr.mxu0 %v1139
          %1347 = vmatpush1.msra.mxu0 %v1138
          %1348 = vmatprep.subr.mxu0 %v1143
          %1349 = vmatpush1.msra.mxu0 %v1142
          %1350 = vmatprep.subr.mxu0 %v1147
          %1351 = vmatpush1.msra.mxu0 %v1146
          %1352 = vmatprep.subr.mxu0 %v1151
          %1353 = vmatpush1.msra.mxu0 %v1150
          %1354 = vmatprep.subr.mxu0 %v1155
          %1355 = vmatpush1.msra.mxu0 %v1154
          %1356 = vmatprep.subr.mxu0 %v1159
          %1357 = vmatpush1.msra.mxu0 %v1158
          %1358 = vmatprep.subr.mxu0 %v1163
          %1359 = vmatpush1.msra.mxu0 %v1162
          %1360 = vmatprep.subr.mxu0 %v1167
          %1361 = vmatpush1.msra.mxu0 %v1166
          %1362 = vmatprep.subr.mxu0 %v1171
          %1363 = vmatpush1.msra.mxu0 %v1170
          %1364 = vmatprep.subr.mxu0 %v1175
          %1365 = vmatpush1.msra.mxu0 %v1174
          %1366 = vmatprep.subr.mxu0 %v1179
          %1367 = vmatpush1.msra.mxu0 %v1178
          %1368 = vmatprep.subr.mxu0 %v1183
          %1369 = vmatpush1.msra.mxu0 %v1182
          %1370 = vmatprep.subr.mxu0 %v1187
          %1371 = vmatpush1.msra.mxu0 %v1186
          %1372 = vmatprep.subr.mxu0 %v1191
          %1373 = vmatpush1.msra.mxu0 %v1190
          %1374 = vmatprep.subr.mxu0 %v1195
          %1375 = vmatpush1.msra.mxu0 %v1194
          %1376 = vmatprep.subr.mxu0 %v1199
          %1377 = vmatpush1.msra.mxu0 %v1198
          %1378 = vmatprep.subr.mxu0 %v1203
          %1379 = vmatpush1.msra.mxu0 %v1202
          %1380 = vmatprep.subr.mxu0 %v1207
          %1381 = vmatpush1.msra.mxu0 %v1206
          %1382 = vmatprep.subr.mxu0 %v1211
          %1383 = vmatpush1.msra.mxu0 %v1210
          %1384 = vmatprep.subr.mxu0 %v1215
          %1385 = vmatpush1.msra.mxu0 %v1214
          %1386 = vmatprep.subr.mxu0 %v1219
          %1387 = vmatpush1.msra.mxu0 %v1218
          %1388 = vmatprep.subr.mxu0 %v1223
          %1389 = vmatpush1.msra.mxu0 %v1222
          %1390 = vmatprep.subr.mxu0 %v1227
          %1391 = vmatpush1.msra.mxu0 %v1226
          %1392 = vmatprep.subr.mxu0 %v1231
          %1393 = vmatpush1.msra.mxu0 %v1230
          %1394 = vmatprep.subr.mxu0 %v1235
          %1395 = vmatpush1.msra.mxu0 %v1234
          %1396 = vmatprep.subr.mxu0 %v1239
          %1397 = vmatpush1.msra.mxu0 %v1238
          %1398 = vmatprep.subr.mxu0 %v1243
          %1399 = vmatpush1.msra.mxu0 %v1242
          %1400 = vmatprep.subr.mxu0 %v1247
          %1401 = vmatpush1.msra.mxu0 %v1246
          %1402 = vmatprep.subr.mxu0 %v1251
          %1403 = vmatpush1.msra.mxu0 %v1250
          %1404 = vmatprep.mubr.f32.mxu0 %v1124
          %1405 = vmatmul.mubr.f32.gmra.mrb[0].mxu0 %v1123
          %v1406 = vpop.f32.mrb[0].mxu0
          %v1407 = vadd.f32 %v1323, %v1406
          %v1408 = vpop.f32.mrb[0].mxu0
          %v1409 = vadd.f32 %v1327, %v1408
          %1410 = vdwg.mxu0
          %1411 = vmatprep.subr.mxu0 %v1255
          %1412 = vmatpush1.msra.mxu0 %v1254
          %1413 = vmatprep.subr.mxu0 %v1259
          %1414 = vmatpush1.msra.mxu0 %v1258
          %1415 = vmatprep.subr.mxu0 %v1263
          %1416 = vmatpush1.msra.mxu0 %v1262
          %1417 = vmatprep.subr.mxu0 %v1267
          %1418 = vmatpush1.msra.mxu0 %v1266
          %1419 = vmatprep.subr.mxu0 %v1271
          %1420 = vmatpush1.msra.mxu0 %v1270
          %1421 = vmatprep.subr.mxu0 %v1275
          %1422 = vmatpush1.msra.mxu0 %v1274
          %1423 = vmatprep.subr.mxu0 %v1279
          %1424 = vmatpush1.msra.mxu0 %v1278
          %1425 = vmatprep.subr.mxu0 %v1283
          %1426 = vmatpush1.msra.mxu0 %v1282
          %1427 = vmatprep.subr.mxu0 %v1287
          %1428 = vmatpush1.msra.mxu0 %v1286
          %1429 = vmatprep.subr.mxu0 %v1291
          %1430 = vmatpush1.msra.mxu0 %v1290
          %1431 = vmatprep.subr.mxu0 %v1295
          %1432 = vmatpush1.msra.mxu0 %v1294
          %1433 = vmatprep.subr.mxu0 %v1299
          %1434 = vmatpush1.msra.mxu0 %v1298
          %1435 = vmatprep.subr.mxu0 %v1303
          %1436 = vmatpush1.msra.mxu0 %v1302
          %1437 = vmatprep.subr.mxu0 %v1307
          %1438 = vmatpush1.msra.mxu0 %v1306
          %1439 = vmatprep.subr.mxu0 %v1311
          %1440 = vmatpush1.msra.mxu0 %v1310
          %1441 = vmatprep.subr.mxu0 %v1315
          %1442 = vmatpush1.msra.mxu0 %v1314
          %1443 = vmatprep.subr.mxu0 0.0
          %1444 = vmatpush1.msra.mxu0 0.0
          %1445 = vmatprep.subr.mxu0 0.0
          %1446 = vmatpush1.msra.mxu0 0.0
          %1447 = vmatprep.subr.mxu0 0.0
          %1448 = vmatpush1.msra.mxu0 0.0
          %1449 = vmatprep.subr.mxu0 0.0
          %1450 = vmatpush1.msra.mxu0 0.0
          %1451 = vmatprep.subr.mxu0 0.0
          %1452 = vmatpush1.msra.mxu0 0.0
          %1453 = vmatprep.subr.mxu0 0.0
          %1454 = vmatpush1.msra.mxu0 0.0
          %1455 = vmatprep.subr.mxu0 0.0
          %1456 = vmatpush1.msra.mxu0 0.0
          %1457 = vmatprep.subr.mxu0 0.0
          %1458 = vmatpush1.msra.mxu0 0.0
          %1459 = vmatprep.subr.mxu0 0.0
          %1460 = vmatpush1.msra.mxu0 0.0
          %1461 = vmatprep.subr.mxu0 0.0
          %1462 = vmatpush1.msra.mxu0 0.0
          %1463 = vmatprep.subr.mxu0 0.0
          %1464 = vmatpush1.msra.mxu0 0.0
          %1465 = vmatprep.subr.mxu0 0.0
          %1466 = vmatpush1.msra.mxu0 0.0
          %1467 = vmatprep.subr.mxu0 0.0
          %1468 = vmatpush1.msra.mxu0 0.0
          %1469 = vmatprep.subr.mxu0 0.0
          %1470 = vmatpush1.msra.mxu0 0.0
          %1471 = vmatprep.subr.mxu0 0.0
          %1472 = vmatpush1.msra.mxu0 0.0
          %1473 = vmatprep.subr.mxu0 0.0
          %1474 = vmatpush1.msra.mxu0 0.0
          %1475 = vmatprep.mubr.f32.mxu0 0.0
          %1476 = vmatmul.mubr.f32.gmra.mrb[0].mxu0 %v1125
          %v1477 = vpop.f32.mrb[0].mxu0
          %v1478 = vadd.f32 %v1407, %v1477
          %v1479 = vpop.f32.mrb[0].mxu0
          %v1480 = vadd.f32 %v1409, %v1479
          %1481 = vdwg.mxu0
          %1482 = vmatprep.subr.mxu0 %v1129
          %1483 = vmatpush1.msra.mxu0 %v1128
          %1484 = vmatprep.subr.mxu0 %v1133
          %1485 = vmatpush1.msra.mxu0 %v1132
          %1486 = vmatprep.subr.mxu0 %v1137
          %1487 = vmatpush1.msra.mxu0 %v1136
          %1488 = vmatprep.subr.mxu0 %v1141
          %1489 = vmatpush1.msra.mxu0 %v1140
          %1490 = vmatprep.subr.mxu0 %v1145
          %1491 = vmatpush1.msra.mxu0 %v1144
          %1492 = vmatprep.subr.mxu0 %v1149
          %1493 = vmatpush1.msra.mxu0 %v1148
          %1494 = vmatprep.subr.mxu0 %v1153
          %1495 = vmatpush1.msra.mxu0 %v1152
          %1496 = vmatprep.subr.mxu0 %v1157
          %1497 = vmatpush1.msra.mxu0 %v1156
          %1498 = vmatprep.subr.mxu0 %v1161
          %1499 = vmatpush1.msra.mxu0 %v1160
          %1500 = vmatprep.subr.mxu0 %v1165
          %1501 = vmatpush1.msra.mxu0 %v1164
          %1502 = vmatprep.subr.mxu0 %v1169
          %1503 = vmatpush1.msra.mxu0 %v1168
          %1504 = vmatprep.subr.mxu0 %v1173
          %1505 = vmatpush1.msra.mxu0 %v1172
          %1506 = vmatprep.subr.mxu0 %v1177
          %1507 = vmatpush1.msra.mxu0 %v1176
          %1508 = vmatprep.subr.mxu0 %v1181
          %1509 = vmatpush1.msra.mxu0 %v1180
          %1510 = vmatprep.subr.mxu0 %v1185
          %1511 = vmatpush1.msra.mxu0 %v1184
          %1512 = vmatprep.subr.mxu0 %v1189
          %1513 = vmatpush1.msra.mxu0 %v1188
          %1514 = vmatprep.subr.mxu0 %v1193
          %1515 = vmatpush1.msra.mxu0 %v1192
          %1516 = vmatprep.subr.mxu0 %v1197
          %1517 = vmatpush1.msra.mxu0 %v1196
          %1518 = vmatprep.subr.mxu0 %v1201
          %1519 = vmatpush1.msra.mxu0 %v1200
          %1520 = vmatprep.subr.mxu0 %v1205
          %1521 = vmatpush1.msra.mxu0 %v1204
          %1522 = vmatprep.subr.mxu0 %v1209
          %1523 = vmatpush1.msra.mxu0 %v1208
          %1524 = vmatprep.subr.mxu0 %v1213
          %1525 = vmatpush1.msra.mxu0 %v1212
          %1526 = vmatprep.subr.mxu0 %v1217
          %1527 = vmatpush1.msra.mxu0 %v1216
          %1528 = vmatprep.subr.mxu0 %v1221
          %1529 = vmatpush1.msra.mxu0 %v1220
          %1530 = vmatprep.subr.mxu0 %v1225
          %1531 = vmatpush1.msra.mxu0 %v1224
          %1532 = vmatprep.subr.mxu0 %v1229
          %1533 = vmatpush1.msra.mxu0 %v1228
          %1534 = vmatprep.subr.mxu0 %v1233
          %1535 = vmatpush1.msra.mxu0 %v1232
          %1536 = vmatprep.subr.mxu0 %v1237
          %1537 = vmatpush1.msra.mxu0 %v1236
          %1538 = vmatprep.subr.mxu0 %v1241
          %1539 = vmatpush1.msra.mxu0 %v1240
          %1540 = vmatprep.subr.mxu0 %v1245
          %1541 = vmatpush1.msra.mxu0 %v1244
          %1542 = vmatprep.subr.mxu0 %v1249
          %1543 = vmatpush1.msra.mxu0 %v1248
          %1544 = vmatprep.subr.mxu0 %v1253
          %1545 = vmatpush1.msra.mxu0 %v1252
          %1546 = vmatprep.mubr.f32.mxu0 %v1124
          %1547 = vmatmul.mubr.f32.gmra.mrb[0].mxu0 %v1123
          %v1548 = vpop.f32.mrb[0].mxu0
          %v1549 = vadd.f32 %v1331, %v1548
          %v1550 = vpop.f32.mrb[0].mxu0
          %v1551 = vadd.f32 %v1335, %v1550
          %1552 = vdwg.mxu0
          %1553 = vmatprep.subr.mxu0 %v1257
          %1554 = vmatpush1.msra.mxu0 %v1256
          %1555 = vmatprep.subr.mxu0 %v1261
          %1556 = vmatpush1.msra.mxu0 %v1260
          %1557 = vmatprep.subr.mxu0 %v1265
          %1558 = vmatpush1.msra.mxu0 %v1264
          %1559 = vmatprep.subr.mxu0 %v1269
          %1560 = vmatpush1.msra.mxu0 %v1268
          %1561 = vmatprep.subr.mxu0 %v1273
          %1562 = vmatpush1.msra.mxu0 %v1272
          %1563 = vmatprep.subr.mxu0 %v1277
          %1564 = vmatpush1.msra.mxu0 %v1276
          %1565 = vmatprep.subr.mxu0 %v1281
          %1566 = vmatpush1.msra.mxu0 %v1280
          %1567 = vmatprep.subr.mxu0 %v1285
          %1568 = vmatpush1.msra.mxu0 %v1284
          %1569 = vmatprep.subr.mxu0 %v1289
          %1570 = vmatpush1.msra.mxu0 %v1288
          %1571 = vmatprep.subr.mxu0 %v1293
          %1572 = vmatpush1.msra.mxu0 %v1292
          %1573 = vmatprep.subr.mxu0 %v1297
          %1574 = vmatpush1.msra.mxu0 %v1296
          %1575 = vmatprep.subr.mxu0 %v1301
          %1576 = vmatpush1.msra.mxu0 %v1300
          %1577 = vmatprep.subr.mxu0 %v1305
          %1578 = vmatpush1.msra.mxu0 %v1304
          %1579 = vmatprep.subr.mxu0 %v1309
          %1580 = vmatpush1.msra.mxu0 %v1308
          %1581 = vmatprep.subr.mxu0 %v1313
          %1582 = vmatpush1.msra.mxu0 %v1312
          %1583 = vmatprep.subr.mxu0 %v1317
          %1584 = vmatpush1.msra.mxu0 %v1316
          %1585 = vmatprep.subr.mxu0 0.0
          %1586 = vmatpush1.msra.mxu0 0.0
          %1587 = vmatprep.subr.mxu0 0.0
          %1588 = vmatpush1.msra.mxu0 0.0
          %1589 = vmatprep.subr.mxu0 0.0
          %1590 = vmatpush1.msra.mxu0 0.0
          %1591 = vmatprep.subr.mxu0 0.0
          %1592 = vmatpush1.msra.mxu0 0.0
          %1593 = vmatprep.subr.mxu0 0.0
          %1594 = vmatpush1.msra.mxu0 0.0
          %1595 = vmatprep.subr.mxu0 0.0
          %1596 = vmatpush1.msra.mxu0 0.0
          %1597 = vmatprep.subr.mxu0 0.0
          %1598 = vmatpush1.msra.mxu0 0.0
          %1599 = vmatprep.subr.mxu0 0.0
          %1600 = vmatpush1.msra.mxu0 0.0
          %1601 = vmatprep.subr.mxu0 0.0
          %1602 = vmatpush1.msra.mxu0 0.0
          %1603 = vmatprep.subr.mxu0 0.0
          %1604 = vmatpush1.msra.mxu0 0.0
          %1605 = vmatprep.subr.mxu0 0.0
          %1606 = vmatpush1.msra.mxu0 0.0
          %1607 = vmatprep.subr.mxu0 0.0
          %1608 = vmatpush1.msra.mxu0 0.0
          %1609 = vmatprep.subr.mxu0 0.0
          %1610 = vmatpush1.msra.mxu0 0.0
          %1611 = vmatprep.subr.mxu0 0.0
          %1612 = vmatpush1.msra.mxu0 0.0
          %1613 = vmatprep.subr.mxu0 0.0
          %1614 = vmatpush1.msra.mxu0 0.0
          %1615 = vmatprep.subr.mxu0 0.0
          %1616 = vmatpush1.msra.mxu0 0.0
          %1617 = vmatprep.mubr.f32.mxu0 0.0
          %1618 = vmatmul.mubr.f32.gmra.mrb[0].mxu0 %v1125
          %v1619 = vpop.f32.mrb[0].mxu0
          %v1620 = vadd.f32 %v1549, %v1619
          %v1621 = vpop.f32.mrb[0].mxu0
          %v1622 = vadd.f32 %v1551, %v1621
          %1623 = vdwg.mxu0
          %v1624 = vld [vmem:[#allocation19] sm:$0xff]
          %v1625 = vxor.u32 %v1478, 2147483648
          %v1626 = vmul.f32 %v1625, 1.442695
          %v1627 = vpow.pop %v1626
          %v1628 = vadd.f32 %v1627, 1.0
          %v1629 = vrcp.pop %v1628
          %v1630 = vmul.f32 1.0, %v1629
          %v1631 = vxor.u32 %v1480, 2147483648
          %v1632 = vmul.f32 %v1631, 1.442695
          %v1633 = vpow.pop %v1632
          %v1634 = vadd.f32 %v1633, 1.0
          %v1635 = vrcp.pop %v1634
          %v1636 = vmul.f32 1.0, %v1635
          %v1637 = vtanh.pop %v1620
          %v1638 = vxor.u32 %v1622, 2147483648
          %v1639 = vmul.f32 %v1638, 1.442695
          %v1640 = vpow.pop %v1639
          %v1641 = vadd.f32 %v1640, 1.0
          %v1642 = vrcp.pop %v1641
          %v1643 = vmul.f32 1.0, %v1642
          %v1644 = vmul.f32 %v1636, %v1624
          %v1645 = vmul.f32 %v1630, %v1637
          %v1646 = vadd.f32 %v1644, %v1645
          %v1647 = vtanh.pop %v1646
          %v1648 = vmul.f32 %v1643, %v1647
          %1649 = vst [vmem:[#allocation24] sm:$0xff] %v1648
          %1650 = vst [vmem:[#allocation26] sm:$0xff] %v1646
          %1651 = vst [vmem:[#allocation6] sm:$0xff] %v1648
          %v1652 = vld [vmem:[%s581] sm:$0xff]
          %1653 = vst [vmem:[#allocation6 + $0x8] sm:$0xff] %v1652
          %s1654 = smul.u32 8, 32
          %s1655 = smul.u32 %s1654, 4
          %s1656 = sshll.u32 %s1655, 4
          %1657 = dma.done %s523, %s1656
          %v1658 = vld [vmem:[#allocation6] sm:$0xff]
          %v1659 = vld [vmem:[#allocation6 + $0x8] sm:$0xff]
          %v1660 = vld [vmem:[#allocation4] sm:$0xff]
          %v1661 = vld [vmem:[#allocation4 + $0x8] sm:$0xff]
          %v1662 = vld [vmem:[#allocation4 + $0x10] sm:$0xff]
          %v1663 = vld [vmem:[#allocation4 + $0x18] sm:$0xff]
          %v1664 = vld [vmem:[#allocation4 + $0x20] sm:$0xff]
          %v1665 = vld [vmem:[#allocation4 + $0x28] sm:$0xff]
          %v1666 = vld [vmem:[#allocation4 + $0x30] sm:$0xff]
          %v1667 = vld [vmem:[#allocation4 + $0x38] sm:$0xff]
          %v1668 = vld [vmem:[#allocation4 + $0x40] sm:$0xff]
          %v1669 = vld [vmem:[#allocation4 + $0x48] sm:$0xff]
          %v1670 = vld [vmem:[#allocation4 + $0x50] sm:$0xff]
          %v1671 = vld [vmem:[#allocation4 + $0x58] sm:$0xff]
          %v1672 = vld [vmem:[#allocation4 + $0x60] sm:$0xff]
          %v1673 = vld [vmem:[#allocation4 + $0x68] sm:$0xff]
          %v1674 = vld [vmem:[#allocation4 + $0x70] sm:$0xff]
          %v1675 = vld [vmem:[#allocation4 + $0x78] sm:$0xff]
          %v1676 = vld [vmem:[#allocation4 + $0x80] sm:$0xff]
          %v1677 = vld [vmem:[#allocation4 + $0x88] sm:$0xff]
          %v1678 = vld [vmem:[#allocation4 + $0x90] sm:$0xff]
          %v1679 = vld [vmem:[#allocation4 + $0x98] sm:$0xff]
          %v1680 = vld [vmem:[#allocation4 + $0xa0] sm:$0xff]
          %v1681 = vld [vmem:[#allocation4 + $0xa8] sm:$0xff]
          %v1682 = vld [vmem:[#allocation4 + $0xb0] sm:$0xff]
          %v1683 = vld [vmem:[#allocation4 + $0xb8] sm:$0xff]
          %v1684 = vld [vmem:[#allocation4 + $0xc0] sm:$0xff]
          %v1685 = vld [vmem:[#allocation4 + $0xc8] sm:$0xff]
          %v1686 = vld [vmem:[#allocation4 + $0xd0] sm:$0xff]
          %v1687 = vld [vmem:[#allocation4 + $0xd8] sm:$0xff]
          %v1688 = vld [vmem:[#allocation4 + $0xe0] sm:$0xff]
          %v1689 = vld [vmem:[#allocation4 + $0xe8] sm:$0xff]
          %v1690 = vld [vmem:[#allocation4 + $0xf0] sm:$0xff]
          %v1691 = vld [vmem:[#allocation4 + $0xf8] sm:$0xff]
          %v1692 = vld [vmem:[#allocation4 + $0x100] sm:$0xff]
          %v1693 = vld [vmem:[#allocation4 + $0x108] sm:$0xff]
          %v1694 = vld [vmem:[#allocation4 + $0x110] sm:$0xff]
          %v1695 = vld [vmem:[#allocation4 + $0x118] sm:$0xff]
          %v1696 = vld [vmem:[#allocation4 + $0x120] sm:$0xff]
          %v1697 = vld [vmem:[#allocation4 + $0x128] sm:$0xff]
          %v1698 = vld [vmem:[#allocation4 + $0x130] sm:$0xff]
          %v1699 = vld [vmem:[#allocation4 + $0x138] sm:$0xff]
          %v1700 = vld [vmem:[#allocation4 + $0x140] sm:$0xff]
          %v1701 = vld [vmem:[#allocation4 + $0x148] sm:$0xff]
          %v1702 = vld [vmem:[#allocation4 + $0x150] sm:$0xff]
          %v1703 = vld [vmem:[#allocation4 + $0x158] sm:$0xff]
          %v1704 = vld [vmem:[#allocation4 + $0x160] sm:$0xff]
          %v1705 = vld [vmem:[#allocation4 + $0x168] sm:$0xff]
          %v1706 = vld [vmem:[#allocation4 + $0x170] sm:$0xff]
          %v1707 = vld [vmem:[#allocation4 + $0x178] sm:$0xff]
          %v1708 = vld [vmem:[#allocation4 + $0x180] sm:$0xff]
          %v1709 = vld [vmem:[#allocation4 + $0x188] sm:$0xff]
          %v1710 = vld [vmem:[#allocation4 + $0x190] sm:$0xff]
          %v1711 = vld [vmem:[#allocation4 + $0x198] sm:$0xff]
          %v1712 = vld [vmem:[#allocation4 + $0x1a0] sm:$0xff]
          %v1713 = vld [vmem:[#allocation4 + $0x1a8] sm:$0xff]
          %v1714 = vld [vmem:[#allocation4 + $0x1b0] sm:$0xff]
          %v1715 = vld [vmem:[#allocation4 + $0x1b8] sm:$0xff]
          %v1716 = vld [vmem:[#allocation4 + $0x1c0] sm:$0xff]
          %v1717 = vld [vmem:[#allocation4 + $0x1c8] sm:$0xff]
          %v1718 = vld [vmem:[#allocation4 + $0x1d0] sm:$0xff]
          %v1719 = vld [vmem:[#allocation4 + $0x1d8] sm:$0xff]
          %v1720 = vld [vmem:[#allocation4 + $0x1e0] sm:$0xff]
          %v1721 = vld [vmem:[#allocation4 + $0x1e8] sm:$0xff]
          %v1722 = vld [vmem:[#allocation4 + $0x1f0] sm:$0xff]
          %v1723 = vld [vmem:[#allocation4 + $0x1f8] sm:$0xff]
          %v1724 = vld [vmem:[#allocation4 + $0x200] sm:$0xff]
          %v1725 = vld [vmem:[#allocation4 + $0x208] sm:$0xff]
          %v1726 = vld [vmem:[#allocation4 + $0x210] sm:$0xff]
          %v1727 = vld [vmem:[#allocation4 + $0x218] sm:$0xff]
          %v1728 = vld [vmem:[#allocation4 + $0x220] sm:$0xff]
          %v1729 = vld [vmem:[#allocation4 + $0x228] sm:$0xff]
          %v1730 = vld [vmem:[#allocation4 + $0x230] sm:$0xff]
          %v1731 = vld [vmem:[#allocation4 + $0x238] sm:$0xff]
          %v1732 = vld [vmem:[#allocation4 + $0x240] sm:$0xff]
          %v1733 = vld [vmem:[#allocation4 + $0x248] sm:$0xff]
          %v1734 = vld [vmem:[#allocation4 + $0x250] sm:$0xff]
          %v1735 = vld [vmem:[#allocation4 + $0x258] sm:$0xff]
          %v1736 = vld [vmem:[#allocation4 + $0x260] sm:$0xff]
          %v1737 = vld [vmem:[#allocation4 + $0x268] sm:$0xff]
          %v1738 = vld [vmem:[#allocation4 + $0x270] sm:$0xff]
          %v1739 = vld [vmem:[#allocation4 + $0x278] sm:$0xff]
          %v1740 = vld [vmem:[#allocation4 + $0x280] sm:$0xff]
          %v1741 = vld [vmem:[#allocation4 + $0x288] sm:$0xff]
          %v1742 = vld [vmem:[#allocation4 + $0x290] sm:$0xff]
          %v1743 = vld [vmem:[#allocation4 + $0x298] sm:$0xff]
          %v1744 = vld [vmem:[#allocation4 + $0x2a0] sm:$0xff]
          %v1745 = vld [vmem:[#allocation4 + $0x2a8] sm:$0xff]
          %v1746 = vld [vmem:[#allocation4 + $0x2b0] sm:$0xff]
          %v1747 = vld [vmem:[#allocation4 + $0x2b8] sm:$0xff]
          %v1748 = vld [vmem:[#allocation4 + $0x2c0] sm:$0xff]
          %v1749 = vld [vmem:[#allocation4 + $0x2c8] sm:$0xff]
          %v1750 = vld [vmem:[#allocation4 + $0x2d0] sm:$0xff]
          %v1751 = vld [vmem:[#allocation4 + $0x2d8] sm:$0xff]
          %v1752 = vld [vmem:[#allocation4 + $0x2e0] sm:$0xff]
          %v1753 = vld [vmem:[#allocation4 + $0x2e8] sm:$0xff]
          %v1754 = vld [vmem:[#allocation4 + $0x2f0] sm:$0xff]
          %v1755 = vld [vmem:[#allocation4 + $0x2f8] sm:$0xff]
          %v1756 = vld [vmem:[#allocation4 + $0x300] sm:$0xff]
          %v1757 = vld [vmem:[#allocation4 + $0x308] sm:$0xff]
          %v1758 = vld [vmem:[#allocation4 + $0x310] sm:$0xff]
          %v1759 = vld [vmem:[#allocation4 + $0x318] sm:$0xff]
          %v1760 = vld [vmem:[#allocation4 + $0x320] sm:$0xff]
          %v1761 = vld [vmem:[#allocation4 + $0x328] sm:$0xff]
          %v1762 = vld [vmem:[#allocation4 + $0x330] sm:$0xff]
          %v1763 = vld [vmem:[#allocation4 + $0x338] sm:$0xff]
          %v1764 = vld [vmem:[#allocation4 + $0x340] sm:$0xff]
          %v1765 = vld [vmem:[#allocation4 + $0x348] sm:$0xff]
          %v1766 = vld [vmem:[#allocation4 + $0x350] sm:$0xff]
          %v1767 = vld [vmem:[#allocation4 + $0x358] sm:$0xff]
          %v1768 = vld [vmem:[#allocation4 + $0x360] sm:$0xff]
          %v1769 = vld [vmem:[#allocation4 + $0x368] sm:$0xff]
          %v1770 = vld [vmem:[#allocation4 + $0x370] sm:$0xff]
          %v1771 = vld [vmem:[#allocation4 + $0x378] sm:$0xff]
          %v1772 = vld [vmem:[#allocation4 + $0x380] sm:$0xff]
          %v1773 = vld [vmem:[#allocation4 + $0x388] sm:$0xff]
          %v1774 = vld [vmem:[#allocation4 + $0x390] sm:$0xff]
          %v1775 = vld [vmem:[#allocation4 + $0x398] sm:$0xff]
          %v1776 = vld [vmem:[#allocation4 + $0x3a0] sm:$0xff]
          %v1777 = vld [vmem:[#allocation4 + $0x3a8] sm:$0xff]
          %v1778 = vld [vmem:[#allocation4 + $0x3b0] sm:$0xff]
          %v1779 = vld [vmem:[#allocation4 + $0x3b8] sm:$0xff]
          %v1780 = vld [vmem:[#allocation4 + $0x3c0] sm:$0xff]
          %v1781 = vld [vmem:[#allocation4 + $0x3c8] sm:$0xff]
          %v1782 = vld [vmem:[#allocation4 + $0x3d0] sm:$0xff]
          %v1783 = vld [vmem:[#allocation4 + $0x3d8] sm:$0xff]
          %v1784 = vld [vmem:[#allocation4 + $0x3e0] sm:$0xff]
          %v1785 = vld [vmem:[#allocation4 + $0x3e8] sm:$0xff]
          %v1786 = vld [vmem:[#allocation4 + $0x3f0] sm:$0xff]
          %v1787 = vld [vmem:[#allocation4 + $0x3f8] sm:$0xff]
          %v1788 = vld [vmem:[%s9] sm:$0xf]
          %v1790 = vlaneseq
          %v1791 = vshrl.u32 %v1790, 7
          %v1792 = vsub.s32 0, %v1791
          %v1793 = vrot.slane %v1788, %v1792
          %v1794 = vlaneseq
          %v1795 = vshrl.u32 %v1794, 7
          %v1796 = vsub.s32 1, %v1795
          %v1797 = vrot.slane %v1788, %v1796
          %v1798 = vlaneseq
          %v1799 = vshrl.u32 %v1798, 7
          %v1800 = vsub.s32 2, %v1799
          %v1801 = vrot.slane %v1788, %v1800
          %v1802 = vlaneseq
          %v1803 = vshrl.u32 %v1802, 7
          %v1804 = vsub.s32 3, %v1803
          %v1805 = vrot.slane %v1788, %v1804
          %1810 = vmatprep.subr.mxu0 %v1661
          %1811 = vmatpush1.msra.mxu0 %v1660
          %1812 = vmatprep.subr.mxu0 %v1665
          %1813 = vmatpush1.msra.mxu0 %v1664
          %1814 = vmatprep.subr.mxu0 %v1669
          %1815 = vmatpush1.msra.mxu0 %v1668
          %1816 = vmatprep.subr.mxu0 %v1673
          %1817 = vmatpush1.msra.mxu0 %v1672
          %1818 = vmatprep.subr.mxu0 %v1677
          %1819 = vmatpush1.msra.mxu0 %v1676
          %1820 = vmatprep.subr.mxu0 %v1681
          %1821 = vmatpush1.msra.mxu0 %v1680
          %1822 = vmatprep.subr.mxu0 %v1685
          %1823 = vmatpush1.msra.mxu0 %v1684
          %1824 = vmatprep.subr.mxu0 %v1689
          %1825 = vmatpush1.msra.mxu0 %v1688
          %1826 = vmatprep.subr.mxu0 %v1693
          %1827 = vmatpush1.msra.mxu0 %v1692
          %1828 = vmatprep.subr.mxu0 %v1697
          %1829 = vmatpush1.msra.mxu0 %v1696
          %1830 = vmatprep.subr.mxu0 %v1701
          %1831 = vmatpush1.msra.mxu0 %v1700
          %1832 = vmatprep.subr.mxu0 %v1705
          %1833 = vmatpush1.msra.mxu0 %v1704
          %1834 = vmatprep.subr.mxu0 %v1709
          %1835 = vmatpush1.msra.mxu0 %v1708
          %1836 = vmatprep.subr.mxu0 %v1713
          %1837 = vmatpush1.msra.mxu0 %v1712
          %1838 = vmatprep.subr.mxu0 %v1717
          %1839 = vmatpush1.msra.mxu0 %v1716
          %1840 = vmatprep.subr.mxu0 %v1721
          %1841 = vmatpush1.msra.mxu0 %v1720
          %1842 = vmatprep.subr.mxu0 %v1725
          %1843 = vmatpush1.msra.mxu0 %v1724
          %1844 = vmatprep.subr.mxu0 %v1729
          %1845 = vmatpush1.msra.mxu0 %v1728
          %1846 = vmatprep.subr.mxu0 %v1733
          %1847 = vmatpush1.msra.mxu0 %v1732
          %1848 = vmatprep.subr.mxu0 %v1737
          %1849 = vmatpush1.msra.mxu0 %v1736
          %1850 = vmatprep.subr.mxu0 %v1741
          %1851 = vmatpush1.msra.mxu0 %v1740
          %1852 = vmatprep.subr.mxu0 %v1745
          %1853 = vmatpush1.msra.mxu0 %v1744
          %1854 = vmatprep.subr.mxu0 %v1749
          %1855 = vmatpush1.msra.mxu0 %v1748
          %1856 = vmatprep.subr.mxu0 %v1753
          %1857 = vmatpush1.msra.mxu0 %v1752
          %1858 = vmatprep.subr.mxu0 %v1757
          %1859 = vmatpush1.msra.mxu0 %v1756
          %1860 = vmatprep.subr.mxu0 %v1761
          %1861 = vmatpush1.msra.mxu0 %v1760
          %1862 = vmatprep.subr.mxu0 %v1765
          %1863 = vmatpush1.msra.mxu0 %v1764
          %1864 = vmatprep.subr.mxu0 %v1769
          %1865 = vmatpush1.msra.mxu0 %v1768
          %1866 = vmatprep.subr.mxu0 %v1773
          %1867 = vmatpush1.msra.mxu0 %v1772
          %1868 = vmatprep.subr.mxu0 %v1777
          %1869 = vmatpush1.msra.mxu0 %v1776
          %1870 = vmatprep.subr.mxu0 %v1781
          %1871 = vmatpush1.msra.mxu0 %v1780
          %1872 = vmatprep.subr.mxu0 %v1785
          %1873 = vmatpush1.msra.mxu0 %v1784
          %1874 = vmatprep.mubr.f32.mxu0 %v1659
          %1875 = vmatmul.mubr.f32.gmra.mrb[0].mxu0 %v1658
          %v1876 = vpop.f32.mrb[0].mxu0
          %v1877 = vadd.f32 %v1793, %v1876
          %v1878 = vpop.f32.mrb[0].mxu0
          %v1879 = vadd.f32 %v1797, %v1878
          %1880 = vdwg.mxu0
          %1881 = vmatprep.subr.mxu0 %v1663
          %1882 = vmatpush1.msra.mxu0 %v1662
          %1883 = vmatprep.subr.mxu0 %v1667
          %1884 = vmatpush1.msra.mxu0 %v1666
          %1885 = vmatprep.subr.mxu0 %v1671
          %1886 = vmatpush1.msra.mxu0 %v1670
          %1887 = vmatprep.subr.mxu0 %v1675
          %1888 = vmatpush1.msra.mxu0 %v1674
          %1889 = vmatprep.subr.mxu0 %v1679
          %1890 = vmatpush1.msra.mxu0 %v1678
          %1891 = vmatprep.subr.mxu0 %v1683
          %1892 = vmatpush1.msra.mxu0 %v1682
          %1893 = vmatprep.subr.mxu0 %v1687
          %1894 = vmatpush1.msra.mxu0 %v1686
          %1895 = vmatprep.subr.mxu0 %v1691
          %1896 = vmatpush1.msra.mxu0 %v1690
          %1897 = vmatprep.subr.mxu0 %v1695
          %1898 = vmatpush1.msra.mxu0 %v1694
          %1899 = vmatprep.subr.mxu0 %v1699
          %1900 = vmatpush1.msra.mxu0 %v1698
          %1901 = vmatprep.subr.mxu0 %v1703
          %1902 = vmatpush1.msra.mxu0 %v1702
          %1903 = vmatprep.subr.mxu0 %v1707
          %1904 = vmatpush1.msra.mxu0 %v1706
          %1905 = vmatprep.subr.mxu0 %v1711
          %1906 = vmatpush1.msra.mxu0 %v1710
          %1907 = vmatprep.subr.mxu0 %v1715
          %1908 = vmatpush1.msra.mxu0 %v1714
          %1909 = vmatprep.subr.mxu0 %v1719
          %1910 = vmatpush1.msra.mxu0 %v1718
          %1911 = vmatprep.subr.mxu0 %v1723
          %1912 = vmatpush1.msra.mxu0 %v1722
          %1913 = vmatprep.subr.mxu0 %v1727
          %1914 = vmatpush1.msra.mxu0 %v1726
          %1915 = vmatprep.subr.mxu0 %v1731
          %1916 = vmatpush1.msra.mxu0 %v1730
          %1917 = vmatprep.subr.mxu0 %v1735
          %1918 = vmatpush1.msra.mxu0 %v1734
          %1919 = vmatprep.subr.mxu0 %v1739
          %1920 = vmatpush1.msra.mxu0 %v1738
          %1921 = vmatprep.subr.mxu0 %v1743
          %1922 = vmatpush1.msra.mxu0 %v1742
          %1923 = vmatprep.subr.mxu0 %v1747
          %1924 = vmatpush1.msra.mxu0 %v1746
          %1925 = vmatprep.subr.mxu0 %v1751
          %1926 = vmatpush1.msra.mxu0 %v1750
          %1927 = vmatprep.subr.mxu0 %v1755
          %1928 = vmatpush1.msra.mxu0 %v1754
          %1929 = vmatprep.subr.mxu0 %v1759
          %1930 = vmatpush1.msra.mxu0 %v1758
          %1931 = vmatprep.subr.mxu0 %v1763
          %1932 = vmatpush1.msra.mxu0 %v1762
          %1933 = vmatprep.subr.mxu0 %v1767
          %1934 = vmatpush1.msra.mxu0 %v1766
          %1935 = vmatprep.subr.mxu0 %v1771
          %1936 = vmatpush1.msra.mxu0 %v1770
          %1937 = vmatprep.subr.mxu0 %v1775
          %1938 = vmatpush1.msra.mxu0 %v1774
          %1939 = vmatprep.subr.mxu0 %v1779
          %1940 = vmatpush1.msra.mxu0 %v1778
          %1941 = vmatprep.subr.mxu0 %v1783
          %1942 = vmatpush1.msra.mxu0 %v1782
          %1943 = vmatprep.subr.mxu0 %v1787
          %1944 = vmatpush1.msra.mxu0 %v1786
          %1945 = vmatprep.mubr.f32.mxu0 %v1659
          %1946 = vmatmul.mubr.f32.gmra.mrb[0].mxu0 %v1658
          %v1947 = vpop.f32.mrb[0].mxu0
          %v1948 = vadd.f32 %v1801, %v1947
          %v1949 = vpop.f32.mrb[0].mxu0
          %v1950 = vadd.f32 %v1805, %v1949
          %1951 = vdwg.mxu0
          %s1952 = scalar_lea.vmem [#allocation19], 8
          %v1953 = vld [vmem:[%s1952] sm:$0xff]
          %v1954 = vxor.u32 %v1877, 2147483648
          %v1955 = vmul.f32 %v1954, 1.442695
          %v1956 = vpow.pop %v1955
          %v1957 = vadd.f32 %v1956, 1.0
          %v1958 = vrcp.pop %v1957
          %v1959 = vmul.f32 1.0, %v1958
          %v1960 = vxor.u32 %v1879, 2147483648
          %v1961 = vmul.f32 %v1960, 1.442695
          %v1962 = vpow.pop %v1961
          %v1963 = vadd.f32 %v1962, 1.0
          %v1964 = vrcp.pop %v1963
          %v1965 = vmul.f32 1.0, %v1964
          %v1966 = vtanh.pop %v1948
          %v1967 = vxor.u32 %v1950, 2147483648
          %v1968 = vmul.f32 %v1967, 1.442695
          %v1969 = vpow.pop %v1968
          %v1970 = vadd.f32 %v1969, 1.0
          %v1971 = vrcp.pop %v1970
          %v1972 = vmul.f32 1.0, %v1971
          %v1973 = vmul.f32 %v1965, %v1953
          %v1974 = vmul.f32 %v1959, %v1966
          %v1975 = vadd.f32 %v1973, %v1974
          %v1976 = vtanh.pop %v1975
          %v1977 = vmul.f32 %v1972, %v1976
          %s1978 = scalar_lea.vmem [#allocation24], 8
          %1979 = vst [vmem:[%s1978] sm:$0xff] %v1977
          %s1980 = scalar_lea.vmem [#allocation26], 8
          %1981 = vst [vmem:[%s1980] sm:$0xff] %v1975
          %v1982 = vpack.c.bf16 %v1977, %v1977
          %1983 = vst [vmem:[#allocation7] sm:$0xf] %v1982
          %v1984 = vpack.c.bf16 %v1039, %v1039
          %v1985 = vpack.c.bf16 %v1046, %v1046
          %v1986 = vpack.c.bf16 %v1053, %v1053
          %v1987 = vpack.c.bf16 %v1060, %v1060
          %v1988 = vpack.c.bf16 %v1067, %v1067
          %v1989 = vpack.c.bf16 %v1074, %v1074
          %v1990 = vpack.c.bf16 %v1081, %v1081
          %v1991 = vpack.c.bf16 %v1088, %v1088
          %v2000 = vunpack.c.l.b16 %v1984
          %v2001 = vunpack.c.l.b16 %v1985
          %v2002 = vunpack.c.l.b16 %v1986
          %v2003 = vunpack.c.l.b16 %v1987
          %v2004 = vunpack.c.l.b16 %v1988
          %v2005 = vunpack.c.l.b16 %v1989
          %v2006 = vunpack.c.l.b16 %v1990
          %v2007 = vunpack.c.l.b16 %v1991
          %v2008 = vpack.c.b16 %v2000, %v2000
          %v2009 = vpack.c.b16 %v2001, %v2001
          %v2010 = vpack.c.b16 %v2002, %v2002
          %v2011 = vpack.c.b16 %v2003, %v2003
          %v2012 = vpack.c.b16 %v2004, %v2004
          %v2013 = vpack.c.b16 %v2005, %v2005
          %v2014 = vpack.c.b16 %v2006, %v2006
          %v2015 = vpack.c.b16 %v2007, %v2007
          %v2016 = vunpack.c.l.b16 %v2008
          %v2017 = vunpack.c.l.b16 %v2009
          %v2018 = vunpack.c.l.b16 %v2010
          %v2019 = vunpack.c.l.b16 %v2011
          %v2020 = vunpack.c.l.b16 %v2012
          %v2021 = vunpack.c.l.b16 %v2013
          %v2022 = vunpack.c.l.b16 %v2014
          %v2023 = vunpack.c.l.b16 %v2015
          %v2024 = vsel %vm900, %v2017, %v2016
          %v2025 = vsel %vm902, %v2018, %v2024
          %v2026 = vsel %vm904, %v2019, %v2025
          %v2027 = vsel %vm906, %v2020, %v2026
          %v2028 = vsel %vm908, %v2021, %v2027
          %v2029 = vsel %vm910, %v2022, %v2028
          %v2030 = vsel %vm912, %v2023, %v2029
          %v2031 = vpack.c.b16 %v2030, %v2030
          %2033 = vst [vmem:[#allocation7 + $0x4] sm:$0xf] %v2031
          %vm2034 = vcmask 7168
          %2035 = vst.msk [vmem:[#allocation8] sm:$0xff] %vm2034, -1e+30
          %2036 = vst.msk [vmem:[#allocation9] sm:$0xff] %vm2034, 0.0
        $region76: #{tpu_custom_call.1} parent=51 // pred_fallthru
          _
        %v2037 = vld [vmem:[#allocation7] sm:$0xff]
        %v2038 = vld [vmem:[%s456] sm:$0xff]
        %v2039 = vld [vmem:[%s456 + $0x8] sm:$0xff]
        %v2040 = vld [vmem:[%s456 + $0x10] sm:$0xff]
        %v2041 = vld [vmem:[%s456 + $0x18] sm:$0xff]
        %v2042 = vld [vmem:[%s456 + $0x20] sm:$0xff]
        %v2043 = vld [vmem:[%s456 + $0x28] sm:$0xff]
        %v2044 = vld [vmem:[%s456 + $0x30] sm:$0xff]
        %v2045 = vld [vmem:[%s456 + $0x38] sm:$0xff]
        %v2046 = vld [vmem:[%s456 + $0x40] sm:$0xff]
        %v2047 = vld [vmem:[%s456 + $0x48] sm:$0xff]
        %v2048 = vld [vmem:[%s456 + $0x50] sm:$0xff]
        %v2049 = vld [vmem:[%s456 + $0x58] sm:$0xff]
        %v2050 = vld [vmem:[%s456 + $0x60] sm:$0xff]
        %v2051 = vld [vmem:[%s456 + $0x68] sm:$0xff]
        %v2052 = vld [vmem:[%s456 + $0x70] sm:$0xff]
        %v2053 = vld [vmem:[%s456 + $0x78] sm:$0xff]
        %v2054 = vld [vmem:[%s456 + $0x80] sm:$0xff]
        %v2055 = vld [vmem:[%s456 + $0x88] sm:$0xff]
        %v2056 = vld [vmem:[%s456 + $0x90] sm:$0xff]
        %v2057 = vld [vmem:[%s456 + $0x98] sm:$0xff]
        %v2058 = vld [vmem:[%s456 + $0xa0] sm:$0xff]
        %v2059 = vld [vmem:[%s456 + $0xa8] sm:$0xff]
        %v2060 = vld [vmem:[%s456 + $0xb0] sm:$0xff]
        %v2061 = vld [vmem:[%s456 + $0xb8] sm:$0xff]
        %v2062 = vld [vmem:[%s456 + $0xc0] sm:$0xff]
        %v2063 = vld [vmem:[%s456 + $0xc8] sm:$0xff]
        %v2064 = vld [vmem:[%s456 + $0xd0] sm:$0xff]
        %v2065 = vld [vmem:[%s456 + $0xd8] sm:$0xff]
        %v2066 = vld [vmem:[%s456 + $0xe0] sm:$0xff]
        %v2067 = vld [vmem:[%s456 + $0xe8] sm:$0xff]
        %v2068 = vld [vmem:[%s456 + $0xf0] sm:$0xff]
        %v2069 = vld [vmem:[%s456 + $0xf8] sm:$0xff]
        %v2070 = vld [vmem:[%s456 + $0x100] sm:$0xff]
        %v2071 = vld [vmem:[%s456 + $0x108] sm:$0xff]
        %v2072 = vld [vmem:[%s456 + $0x110] sm:$0xff]
        %v2073 = vld [vmem:[%s456 + $0x118] sm:$0xff]
        %v2074 = vld [vmem:[%s456 + $0x120] sm:$0xff]
        %v2075 = vld [vmem:[%s456 + $0x128] sm:$0xff]
        %v2076 = vld [vmem:[%s456 + $0x130] sm:$0xff]
        %v2077 = vld [vmem:[%s456 + $0x138] sm:$0xff]
        %v2078 = vld [vmem:[%s456 + $0x140] sm:$0xff]
        %v2079 = vld [vmem:[%s456 + $0x148] sm:$0xff]
        %v2080 = vld [vmem:[%s456 + $0x150] sm:$0xff]
        %v2081 = vld [vmem:[%s456 + $0x158] sm:$0xff]
        %v2082 = vld [vmem:[%s456 + $0x160] sm:$0xff]
        %v2083 = vld [vmem:[%s456 + $0x168] sm:$0xff]
        %v2084 = vld [vmem:[%s456 + $0x170] sm:$0xff]
        %v2085 = vld [vmem:[%s456 + $0x178] sm:$0xff]
        %v2086 = vld [vmem:[%s456 + $0x180] sm:$0xff]
        %v2087 = vld [vmem:[%s456 + $0x188] sm:$0xff]
        %v2088 = vld [vmem:[%s456 + $0x190] sm:$0xff]
        %v2089 = vld [vmem:[%s456 + $0x198] sm:$0xff]
        %v2090 = vld [vmem:[%s456 + $0x1a0] sm:$0xff]
        %v2091 = vld [vmem:[%s456 + $0x1a8] sm:$0xff]
        %v2092 = vld [vmem:[%s456 + $0x1b0] sm:$0xff]
        %v2093 = vld [vmem:[%s456 + $0x1b8] sm:$0xff]
        %v2094 = vld [vmem:[%s456 + $0x1c0] sm:$0xff]
        %v2095 = vld [vmem:[%s456 + $0x1c8] sm:$0xff]
        %v2096 = vld [vmem:[%s456 + $0x1d0] sm:$0xff]
        %v2097 = vld [vmem:[%s456 + $0x1d8] sm:$0xff]
        %v2098 = vld [vmem:[%s456 + $0x1e0] sm:$0xff]
        %v2099 = vld [vmem:[%s456 + $0x1e8] sm:$0xff]
        %v2100 = vld [vmem:[%s456 + $0x1f0] sm:$0xff]
        %v2101 = vld [vmem:[%s456 + $0x1f8] sm:$0xff]
        %v2102 = vld [vmem:[%s505] sm:$0xf]
        %v2104 = vlaneseq
        %v2105 = vshrl.u32 %v2104, 7
        %v2106 = vsub.s32 0, %v2105
        %v2107 = vrot.slane %v2102, %v2106
        %v2108 = vlaneseq
        %v2109 = vshrl.u32 %v2108, 7
        %v2110 = vsub.s32 1, %v2109
        %v2111 = vrot.slane %v2102, %v2110
        %v2112 = vlaneseq
        %v2113 = vshrl.u32 %v2112, 7
        %v2114 = vsub.s32 2, %v2113
        %v2115 = vrot.slane %v2102, %v2114
        %v2116 = vlaneseq
        %v2117 = vshrl.u32 %v2116, 7
        %v2118 = vsub.s32 3, %v2117
        %v2119 = vrot.slane %v2102, %v2118
        %v2125 = vunpack.c.l.b16 %v2037
        %v2126 = vunpack.c.h.b16 %v2037
        %v2127 = vpack.c.b16 %v2125, %v2125
        %v2128 = vpack.c.b16 %v2126, %v2126
        %v2195 = vunpack.c.l.b16 %v2038
        %v2196 = vunpack.c.h.b16 %v2038
        %v2197 = vunpack.c.l.b16 %v2039
        %v2198 = vunpack.c.h.b16 %v2039
        %v2199 = vunpack.c.l.b16 %v2040
        %v2200 = vunpack.c.h.b16 %v2040
        %v2201 = vunpack.c.l.b16 %v2041
        %v2202 = vunpack.c.h.b16 %v2041
        %v2203 = vunpack.c.l.b16 %v2042
        %v2204 = vunpack.c.h.b16 %v2042
        %v2205 = vunpack.c.l.b16 %v2043
        %v2206 = vunpack.c.h.b16 %v2043
        %v2207 = vunpack.c.l.b16 %v2044
        %v2208 = vunpack.c.h.b16 %v2044
        %v2209 = vunpack.c.l.b16 %v2045
        %v2210 = vunpack.c.h.b16 %v2045
        %v2211 = vunpack.c.l.b16 %v2046
        %v2212 = vunpack.c.h.b16 %v2046
        %v2213 = vunpack.c.l.b16 %v2047
        %v2214 = vunpack.c.h.b16 %v2047
        %v2215 = vunpack.c.l.b16 %v2048
        %v2216 = vunpack.c.h.b16 %v2048
        %v2217 = vunpack.c.l.b16 %v2049
        %v2218 = vunpack.c.h.b16 %v2049
        %v2219 = vunpack.c.l.b16 %v2050
        %v2220 = vunpack.c.h.b16 %v2050
        %v2221 = vunpack.c.l.b16 %v2051
        %v2222 = vunpack.c.h.b16 %v2051
        %v2223 = vunpack.c.l.b16 %v2052
        %v2224 = vunpack.c.h.b16 %v2052
        %v2225 = vunpack.c.l.b16 %v2053
        %v2226 = vunpack.c.h.b16 %v2053
        %v2227 = vunpack.c.l.b16 %v2054
        %v2228 = vunpack.c.h.b16 %v2054
        %v2229 = vunpack.c.l.b16 %v2055
        %v2230 = vunpack.c.h.b16 %v2055
        %v2231 = vunpack.c.l.b16 %v2056
        %v2232 = vunpack.c.h.b16 %v2056
        %v2233 = vunpack.c.l.b16 %v2057
        %v2234 = vunpack.c.h.b16 %v2057
        %v2235 = vunpack.c.l.b16 %v2058
        %v2236 = vunpack.c.h.b16 %v2058
        %v2237 = vunpack.c.l.b16 %v2059
        %v2238 = vunpack.c.h.b16 %v2059
        %v2239 = vunpack.c.l.b16 %v2060
        %v2240 = vunpack.c.h.b16 %v2060
        %v2241 = vunpack.c.l.b16 %v2061
        %v2242 = vunpack.c.h.b16 %v2061
        %v2243 = vunpack.c.l.b16 %v2062
        %v2244 = vunpack.c.h.b16 %v2062
        %v2245 = vunpack.c.l.b16 %v2063
        %v2246 = vunpack.c.h.b16 %v2063
        %v2247 = vunpack.c.l.b16 %v2064
        %v2248 = vunpack.c.h.b16 %v2064
        %v2249 = vunpack.c.l.b16 %v2065
        %v2250 = vunpack.c.h.b16 %v2065
        %v2251 = vunpack.c.l.b16 %v2066
        %v2252 = vunpack.c.h.b16 %v2066
        %v2253 = vunpack.c.l.b16 %v2067
        %v2254 = vunpack.c.h.b16 %v2067
        %v2255 = vunpack.c.l.b16 %v2068
        %v2256 = vunpack.c.h.b16 %v2068
        %v2257 = vunpack.c.l.b16 %v2069
        %v2258 = vunpack.c.h.b16 %v2069
        %v2259 = vunpack.c.l.b16 %v2070
        %v2260 = vunpack.c.h.b16 %v2070
        %v2261 = vunpack.c.l.b16 %v2071
        %v2262 = vunpack.c.h.b16 %v2071
        %v2263 = vunpack.c.l.b16 %v2072
        %v2264 = vunpack.c.h.b16 %v2072
        %v2265 = vunpack.c.l.b16 %v2073
        %v2266 = vunpack.c.h.b16 %v2073
        %v2267 = vunpack.c.l.b16 %v2074
        %v2268 = vunpack.c.h.b16 %v2074
        %v2269 = vunpack.c.l.b16 %v2075
        %v2270 = vunpack.c.h.b16 %v2075
        %v2271 = vunpack.c.l.b16 %v2076
        %v2272 = vunpack.c.h.b16 %v2076
        %v2273 = vunpack.c.l.b16 %v2077
        %v2274 = vunpack.c.h.b16 %v2077
        %v2275 = vunpack.c.l.b16 %v2078
        %v2276 = vunpack.c.h.b16 %v2078
        %v2277 = vunpack.c.l.b16 %v2079
        %v2278 = vunpack.c.h.b16 %v2079
        %v2279 = vunpack.c.l.b16 %v2080
        %v2280 = vunpack.c.h.b16 %v2080
        %v2281 = vunpack.c.l.b16 %v2081
        %v2282 = vunpack.c.h.b16 %v2081
        %v2283 = vunpack.c.l.b16 %v2082
        %v2284 = vunpack.c.h.b16 %v2082
        %v2285 = vunpack.c.l.b16 %v2083
        %v2286 = vunpack.c.h.b16 %v2083
        %v2287 = vunpack.c.l.b16 %v2084
        %v2288 = vunpack.c.h.b16 %v2084
        %v2289 = vunpack.c.l.b16 %v2085
        %v2290 = vunpack.c.h.b16 %v2085
        %v2291 = vunpack.c.l.b16 %v2086
        %v2292 = vunpack.c.h.b16 %v2086
        %v2293 = vunpack.c.l.b16 %v2087
        %v2294 = vunpack.c.h.b16 %v2087
        %v2295 = vunpack.c.l.b16 %v2088
        %v2296 = vunpack.c.h.b16 %v2088
        %v2297 = vunpack.c.l.b16 %v2089
        %v2298 = vunpack.c.h.b16 %v2089
        %v2299 = vunpack.c.l.b16 %v2090
        %v2300 = vunpack.c.h.b16 %v2090
        %v2301 = vunpack.c.l.b16 %v2091
        %v2302 = vunpack.c.h.b16 %v2091
        %v2303 = vunpack.c.l.b16 %v2092
        %v2304 = vunpack.c.h.b16 %v2092
        %v2305 = vunpack.c.l.b16 %v2093
        %v2306 = vunpack.c.h.b16 %v2093
        %v2307 = vunpack.c.l.b16 %v2094
        %v2308 = vunpack.c.h.b16 %v2094
        %v2309 = vunpack.c.l.b16 %v2095
        %v2310 = vunpack.c.h.b16 %v2095
        %v2311 = vunpack.c.l.b16 %v2096
        %v2312 = vunpack.c.h.b16 %v2096
        %v2313 = vunpack.c.l.b16 %v2097
        %v2314 = vunpack.c.h.b16 %v2097
        %v2315 = vunpack.c.l.b16 %v2098
        %v2316 = vunpack.c.h.b16 %v2098
        %v2317 = vunpack.c.l.b16 %v2099
        %v2318 = vunpack.c.h.b16 %v2099
        %v2319 = vunpack.c.l.b16 %v2100
        %v2320 = vunpack.c.h.b16 %v2100
        %v2321 = vunpack.c.l.b16 %v2101
        %v2322 = vunpack.c.h.b16 %v2101
        %v2323 = vpack.c.b16 %v2199, %v2195
        %v2324 = vpack.c.b16 %v2200, %v2196
        %v2325 = vpack.c.b16 %v2201, %v2197
        %v2326 = vpack.c.b16 %v2202, %v2198
        %v2327 = vpack.c.b16 %v2207, %v2203
        %v2328 = vpack.c.b16 %v2208, %v2204
        %v2329 = vpack.c.b16 %v2209, %v2205
        %v2330 = vpack.c.b16 %v2210, %v2206
        %v2331 = vpack.c.b16 %v2215, %v2211
        %v2332 = vpack.c.b16 %v2216, %v2212
        %v2333 = vpack.c.b16 %v2217, %v2213
        %v2334 = vpack.c.b16 %v2218, %v2214
        %v2335 = vpack.c.b16 %v2223, %v2219
        %v2336 = vpack.c.b16 %v2224, %v2220
        %v2337 = vpack.c.b16 %v2225, %v2221
        %v2338 = vpack.c.b16 %v2226, %v2222
        %v2339 = vpack.c.b16 %v2231, %v2227
        %v2340 = vpack.c.b16 %v2232, %v2228
        %v2341 = vpack.c.b16 %v2233, %v2229
        %v2342 = vpack.c.b16 %v2234, %v2230
        %v2343 = vpack.c.b16 %v2239, %v2235
        %v2344 = vpack.c.b16 %v2240, %v2236
        %v2345 = vpack.c.b16 %v2241, %v2237
        %v2346 = vpack.c.b16 %v2242, %v2238
        %v2347 = vpack.c.b16 %v2247, %v2243
        %v2348 = vpack.c.b16 %v2248, %v2244
        %v2349 = vpack.c.b16 %v2249, %v2245
        %v2350 = vpack.c.b16 %v2250, %v2246
        %v2351 = vpack.c.b16 %v2255, %v2251
        %v2352 = vpack.c.b16 %v2256, %v2252
        %v2353 = vpack.c.b16 %v2257, %v2253
        %v2354 = vpack.c.b16 %v2258, %v2254
        %v2355 = vpack.c.b16 %v2263, %v2259
        %v2356 = vpack.c.b16 %v2264, %v2260
        %v2357 = vpack.c.b16 %v2265, %v2261
        %v2358 = vpack.c.b16 %v2266, %v2262
        %v2359 = vpack.c.b16 %v2271, %v2267
        %v2360 = vpack.c.b16 %v2272, %v2268
        %v2361 = vpack.c.b16 %v2273, %v2269
        %v2362 = vpack.c.b16 %v2274, %v2270
        %v2363 = vpack.c.b16 %v2279, %v2275
        %v2364 = vpack.c.b16 %v2280, %v2276
        %v2365 = vpack.c.b16 %v2281, %v2277
        %v2366 = vpack.c.b16 %v2282, %v2278
        %v2367 = vpack.c.b16 %v2287, %v2283
        %v2368 = vpack.c.b16 %v2288, %v2284
        %v2369 = vpack.c.b16 %v2289, %v2285
        %v2370 = vpack.c.b16 %v2290, %v2286
        %v2371 = vpack.c.b16 %v2295, %v2291
        %v2372 = vpack.c.b16 %v2296, %v2292
        %v2373 = vpack.c.b16 %v2297, %v2293
        %v2374 = vpack.c.b16 %v2298, %v2294
        %v2375 = vpack.c.b16 %v2303, %v2299
        %v2376 = vpack.c.b16 %v2304, %v2300
        %v2377 = vpack.c.b16 %v2305, %v2301
        %v2378 = vpack.c.b16 %v2306, %v2302
        %v2379 = vpack.c.b16 %v2311, %v2307
        %v2380 = vpack.c.b16 %v2312, %v2308
        %v2381 = vpack.c.b16 %v2313, %v2309
        %v2382 = vpack.c.b16 %v2314, %v2310
        %v2383 = vpack.c.b16 %v2319, %v2315
        %v2384 = vpack.c.b16 %v2320, %v2316
        %v2385 = vpack.c.b16 %v2321, %v2317
        %v2386 = vpack.c.b16 %v2322, %v2318
        %2451 = vmatprep.subr.bf16.mxu0 %v2324
        %2452 = vmatpush1.bf16.msra.mxu0 %v2323
        %2453 = vmatprep.subr.bf16.mxu0 %v2328
        %2454 = vmatpush1.bf16.msra.mxu0 %v2327
        %2455 = vmatprep.subr.bf16.mxu0 %v2332
        %2456 = vmatpush1.bf16.msra.mxu0 %v2331
        %2457 = vmatprep.subr.bf16.mxu0 %v2336
        %2458 = vmatpush1.bf16.msra.mxu0 %v2335
        %2459 = vmatprep.subr.bf16.mxu0 %v2340
        %2460 = vmatpush1.bf16.msra.mxu0 %v2339
        %2461 = vmatprep.subr.bf16.mxu0 %v2344
        %2462 = vmatpush1.bf16.msra.mxu0 %v2343
        %2463 = vmatprep.subr.bf16.mxu0 %v2348
        %2464 = vmatpush1.bf16.msra.mxu0 %v2347
        %2465 = vmatprep.subr.bf16.mxu0 %v2352
        %2466 = vmatpush1.bf16.msra.mxu0 %v2351
        %2467 = vmatprep.subr.bf16.mxu0 %v2356
        %2468 = vmatpush1.bf16.msra.mxu0 %v2355
        %2469 = vmatprep.subr.bf16.mxu0 %v2360
        %2470 = vmatpush1.bf16.msra.mxu0 %v2359
        %2471 = vmatprep.subr.bf16.mxu0 %v2364
        %2472 = vmatpush1.bf16.msra.mxu0 %v2363
        %2473 = vmatprep.subr.bf16.mxu0 %v2368
        %2474 = vmatpush1.bf16.msra.mxu0 %v2367
        %2475 = vmatprep.subr.bf16.mxu0 %v2372
        %2476 = vmatpush1.bf16.msra.mxu0 %v2371
        %2477 = vmatprep.subr.bf16.mxu0 %v2376
        %2478 = vmatpush1.bf16.msra.mxu0 %v2375
        %2479 = vmatprep.subr.bf16.mxu0 %v2380
        %2480 = vmatpush1.bf16.msra.mxu0 %v2379
        %2481 = vmatprep.subr.bf16.mxu0 %v2384
        %2482 = vmatpush1.bf16.msra.mxu0 %v2383
        %2483 = vmatprep.mubr.bf16.mxu0 %v2128
        %2484 = vmatmul.mubr.bf16.gmra.mrb[0].mxu0 %v2127
        %v2485 = vpop.f32.mrb[0].mxu0
        %v2486 = vadd.f32 %v2107, %v2485
        %v2487 = vpop.f32.mrb[0].mxu0
        %v2488 = vadd.f32 %v2111, %v2487
        %v2489 = vpop.f32.mrb[0].mxu0
        %v2490 = vpop.f32.mrb[0].mxu0
        %2491 = vdwg.mxu0
        %2492 = vmatprep.subr.bf16.mxu0 %v2326
        %2493 = vmatpush1.bf16.msra.mxu0 %v2325
        %2494 = vmatprep.subr.bf16.mxu0 %v2330
        %2495 = vmatpush1.bf16.msra.mxu0 %v2329
        %2496 = vmatprep.subr.bf16.mxu0 %v2334
        %2497 = vmatpush1.bf16.msra.mxu0 %v2333
        %2498 = vmatprep.subr.bf16.mxu0 %v2338
        %2499 = vmatpush1.bf16.msra.mxu0 %v2337
        %2500 = vmatprep.subr.bf16.mxu0 %v2342
        %2501 = vmatpush1.bf16.msra.mxu0 %v2341
        %2502 = vmatprep.subr.bf16.mxu0 %v2346
        %2503 = vmatpush1.bf16.msra.mxu0 %v2345
        %2504 = vmatprep.subr.bf16.mxu0 %v2350
        %2505 = vmatpush1.bf16.msra.mxu0 %v2349
        %2506 = vmatprep.subr.bf16.mxu0 %v2354
        %2507 = vmatpush1.bf16.msra.mxu0 %v2353
        %2508 = vmatprep.subr.bf16.mxu0 %v2358
        %2509 = vmatpush1.bf16.msra.mxu0 %v2357
        %2510 = vmatprep.subr.bf16.mxu0 %v2362
        %2511 = vmatpush1.bf16.msra.mxu0 %v2361
        %2512 = vmatprep.subr.bf16.mxu0 %v2366
        %2513 = vmatpush1.bf16.msra.mxu0 %v2365
        %2514 = vmatprep.subr.bf16.mxu0 %v2370
        %2515 = vmatpush1.bf16.msra.mxu0 %v2369
        %2516 = vmatprep.subr.bf16.mxu0 %v2374
        %2517 = vmatpush1.bf16.msra.mxu0 %v2373
        %2518 = vmatprep.subr.bf16.mxu0 %v2378
        %2519 = vmatpush1.bf16.msra.mxu0 %v2377
        %2520 = vmatprep.subr.bf16.mxu0 %v2382
        %2521 = vmatpush1.bf16.msra.mxu0 %v2381
        %2522 = vmatprep.subr.bf16.mxu0 %v2386
        %2523 = vmatpush1.bf16.msra.mxu0 %v2385
        %2524 = vmatprep.mubr.bf16.mxu0 %v2128
        %2525 = vmatmul.mubr.bf16.gmra.mrb[0].mxu0 %v2127
        %v2526 = vpop.f32.mrb[0].mxu0
        %v2527 = vadd.f32 %v2115, %v2526
        %v2528 = vpop.f32.mrb[0].mxu0
        %v2529 = vadd.f32 %v2119, %v2528
        %v2530 = vpop.f32.mrb[0].mxu0
        %v2531 = vpop.f32.mrb[0].mxu0
        %2532 = vdwg.mxu0
        %s2533 = smul.u32 %s40, 512
        %v2534 = vlaneseq
        %v2535 = vand.u32 %v2534, 127
        %v2536 = vadd.s32 %v2535, 128
        %v2537 = vadd.s32 %v2535, 256
        %v2538 = vadd.s32 %v2535, 384
        %v2539 = vstv %s2533
        %v2540 = vadd.s32 %v2539, %v2535
        %v2541 = vadd.s32 %v2539, %v2536
        %v2542 = vadd.s32 %v2539, %v2537
        %v2543 = vadd.s32 %v2539, %v2538
        %vm2544 = vcmp.lt.s32.totalorder %v2540, 600
        %vm2545 = vcmp.lt.s32.totalorder %v2541, 600
        %vm2546 = vcmp.lt.s32.totalorder %v2542, 600
        %vm2547 = vcmp.lt.s32.totalorder %v2543, 600
        %v2548 = vsel %vm2544, %v2486, -1e+30
        %v2549 = vsel %vm2545, %v2488, -1e+30
        %v2550 = vsel %vm2546, %v2527, -1e+30
        %v2551 = vsel %vm2547, %v2529, -1e+30
        %2552 = vst [vmem:[%s492] sm:$0xff] %v2548
        %2553 = vst [vmem:[%s492 + $0x8] sm:$0xff] %v2549
        %2554 = vst [vmem:[%s492 + $0x10] sm:$0xff] %v2550
        %2555 = vst [vmem:[%s492 + $0x18] sm:$0xff] %v2551
        %v2556 = vmax.f32 %v2548, %v2549
        %v2557 = vmax.f32 %v2550, %v2551
        %v2558 = vmax.f32 %v2556, %v2557
        %2559 = vmax.xlane.f32.xlu0 %v2558
        %v2560 = vpop.xlane.xlu0 %2559
        %v2561 = vld [vmem:[#allocation8] sm:$0xff]
        %v2562 = vmax.f32 %v2561, %v2560
        %v2563 = vld [vmem:[#allocation9] sm:$0xff]
        %v2564 = vsub.f32 %v2561, %v2562
        %v2565 = vmul.f32 %v2564, 1.442695
        %v2566 = vpow.pop %v2565
        %v2567 = vmul.f32 %v2563, %v2566
        %2569 = vset.pattern.permute.xlu0 0
        %2570 = vperm.xlu0 %2569, %v2562
        %v2571 = vpop.permute.xlu0 %2570
        %v2573 = vsub.f32 %v2548, %v2571
        %v2574 = vsub.f32 %v2549, %v2571
        %v2575 = vsub.f32 %v2550, %v2571
        %v2576 = vsub.f32 %v2551, %v2571
        %v2577 = vmul.f32 %v2573, 1.442695
        %v2578 = vpow.pop %v2577
        %v2579 = vmul.f32 %v2574, 1.442695
        %v2580 = vpow.pop %v2579
        %v2581 = vmul.f32 %v2575, 1.442695
        %v2582 = vpow.pop %v2581
        %v2583 = vmul.f32 %v2576, 1.442695
        %v2584 = vpow.pop %v2583
        %v2585 = vadd.f32 %v2578, %v2580
        %v2586 = vadd.f32 %v2585, %v2582
        %v2587 = vadd.f32 %v2586, %v2584
        %2588 = vadd.xlane.f32.xlu0 %v2587
        %v2589 = vpop.xlane.xlu0 %2588
        %v2590 = vadd.f32 %v2567, %v2589
        %vm2591 = vcmask 7168
        %2592 = vst.msk [vmem:[#allocation9] sm:$0xff] %vm2591, %v2590
        %2593 = vst.msk [vmem:[#allocation8] sm:$0xff] %vm2591, %v2562
        %p2594 = scmp.eq.s32.totalorder %s40, 1
        // Predicated region
        $region93: #{tpu_custom_call.1} parent=51 // pred_check
          %p2595 = pneg %p2594
        $region94: #{tpu_custom_call.1} parent=51 // pred_check_branch
          %2597 = sbr.rel (%p2595) target = $region96
        $region95: #{tpu_custom_call.1} parent=51 // pred_region
          %v2598 = vld [vmem:[#allocation8] sm:$0xff]
          %v2599 = vld [vmem:[#allocation9] sm:$0xff]
          %v2600 = vlog2.pop %v2599
          %v2601 = vmul.f32 %v2600, 0.6931472
          %v2602 = vadd.f32 %v2598, %v2601
          %2603 = vst.msk [vmem:[%s13] sm:$0xff] %vm2591, %v2602
        $region96: #{tpu_custom_call.1} parent=51 // pred_fallthru
          _
        %s2604 = sand.u32 %s226, 1
        %s2605 = scalar_lea.sflag [#allocation16], %s2604
        %s2606 = sand.u32 %s226, 1
        %s2607 = smul.addr %s2606, 32
        %s2608 = scalar_lea.vmem [#allocation23], %s2607
        // Predicated region
        $region97: #{tpu_custom_call.1} parent=51 // pred_check
          %p2609 = pneg %p236
        $region98: #{tpu_custom_call.1} parent=51 // pred_check_branch
          %2611 = sbr.rel (%p2609) target = $region100
        $region99: #{tpu_custom_call.1} parent=51 // pred_region
          %s2612 = smul.u32 4, %s40
          %s2614 = ssub.s32 512, 512
          %2615 = vsyncadd %s2605, %s2614
          %s2616 = smul.addr %s2612, 128
          %s2617 = scalar_lea.hbm %s12, %s2616
          %s2619 = sshll.u32 %s2608, 4
          %s2620 = int_to_ptr.vmem [resolvable:$true] %s2619
          %2622 = dma.vmem_to_hbm [thread:$0]  %s2620, 512, %s2617, %s2605
        $region100: #{tpu_custom_call.1} parent=51 // pred_fallthru
          _
        // Predicated region
        $region101: #{tpu_custom_call.1} parent=51 // pred_check
          %p2623 = pneg %p257
        $region102: #{tpu_custom_call.1} parent=51 // pred_check_branch
          %2625 = sbr.rel (%p2623) target = $region104
        $region103: #{tpu_custom_call.1} parent=51 // pred_region
          _
        $region104: #{tpu_custom_call.1} parent=51 // pred_fallthru
          _
        // Predicated region
        $region105: #{tpu_custom_call.1} parent=51 // pred_check
          %p2626 = pneg %p278
        $region106: #{tpu_custom_call.1} parent=51 // pred_check_branch
          %2628 = sbr.rel (%p2626) target = $region108
        $region107: #{tpu_custom_call.1} parent=51 // pred_region
          %s2630 = ssub.s32 256, 256
          %2631 = vsyncadd [#allocation25], %s2630
          %s2632 = sshll.u32 [#allocation24], 4
          %s2633 = int_to_ptr.vmem [resolvable:$true] %s2632
          %2638 = dma.vmem_to_hbm [thread:$0]  %s2633, 256, %s14, [#allocation25], 128, 128, 8
        $region108: #{tpu_custom_call.1} parent=51 // pred_fallthru
          _
        // Predicated region
        $region109: #{tpu_custom_call.1} parent=51 // pred_check
          %p2639 = pneg %p299
        $region110: #{tpu_custom_call.1} parent=51 // pred_check_branch
          %2641 = sbr.rel (%p2639) target = $region112
        $region111: #{tpu_custom_call.1} parent=51 // pred_region
          %s2643 = ssub.s32 256, 256
          %2644 = vsyncadd [#allocation25], %s2643
          %s2645 = sshll.u32 [#allocation26], 4
          %s2646 = int_to_ptr.vmem [resolvable:$true] %s2645
          %2651 = dma.vmem_to_hbm [thread:$0]  %s2646, 256, %s15, [#allocation25], 128, 128, 8
        $region112: #{tpu_custom_call.1} parent=51 // pred_fallthru
          _
        // Predicated region
        $region113: #{tpu_custom_call.1} parent=51 // pred_check
          %p2652 = pneg %p320
        $region114: #{tpu_custom_call.1} parent=51 // pred_check_branch
          %2654 = sbr.rel (%p2652) target = $region116
        $region115: #{tpu_custom_call.1} parent=51 // pred_region
          %s2656 = ssub.s32 128, 128
          %2657 = vsyncadd [#allocation28], %s2656
          %s2659 = sshll.u32 [#allocation27], 4
          %s2660 = int_to_ptr.vmem [resolvable:$true] %s2659
          %2662 = dma.vmem_to_hbm [thread:$0]  %s2660, 128, %s16, [#allocation28]
        $region116: #{tpu_custom_call.1} parent=51 // pred_fallthru
          _
        // Predicated region
        $region117: #{tpu_custom_call.1} parent=51 // pred_check
          %p2663 = pneg %p257
        $region118: #{tpu_custom_call.1} parent=51 // pred_check_branch
          %2665 = sbr.rel (%p2663) target = $region120
        $region119: #{tpu_custom_call.1} parent=51 // pred_region
          _
        $region120: #{tpu_custom_call.1} parent=51 // pred_fallthru
          _
        // Predicated region
        $region121: #{tpu_custom_call.1} parent=51 // pred_check
          %p2666 = pneg %p278
        $region122: #{tpu_custom_call.1} parent=51 // pred_check_branch
          %2668 = sbr.rel (%p2666) target = $region124
        $region123: #{tpu_custom_call.1} parent=51 // pred_region
          %2669 = dma.done [#allocation25], 256
        $region124: #{tpu_custom_call.1} parent=51 // pred_fallthru
          _
        // Predicated region
        $region125: #{tpu_custom_call.1} parent=51 // pred_check
          %p2670 = pneg %p299
        $region126: #{tpu_custom_call.1} parent=51 // pred_check_branch
          %2672 = sbr.rel (%p2670) target = $region128
        $region127: #{tpu_custom_call.1} parent=51 // pred_region
          %2673 = dma.done [#allocation25], 256
        $region128: #{tpu_custom_call.1} parent=51 // pred_fallthru
          _
        // Predicated region
        $region129: #{tpu_custom_call.1} parent=51 // pred_check
          %p2674 = pneg %p320
        $region130: #{tpu_custom_call.1} parent=51 // pred_check_branch
          %2676 = sbr.rel (%p2674) target = $region132
        $region131: #{tpu_custom_call.1} parent=51 // pred_region
          %2677 = dma.done [#allocation28], 128
        $region132: #{tpu_custom_call.1} parent=51 // pred_fallthru
          _
      $region52: #{tpu_custom_call.1} parent=5 // pred_fallthru
        _
      %p2678 = scmp.le.s32.totalorder 2, %s35
      // Predicated region
      $region133: #{tpu_custom_call.1} parent=5 // pred_check
        %p2679 = pneg %p2678
      $region134: #{tpu_custom_call.1} parent=5 // pred_check_branch
        %2681 = sbr.rel (%p2679) target = $region136
      $region135: #{tpu_custom_call.1} parent=5 // pred_region
        %s2682 = ssub.s32 %s35, 2
        // Predicated region
        $region137: #{tpu_custom_call.1} parent=135 // pred_check
          %p2683 = pneg %p242
        $region138: #{tpu_custom_call.1} parent=135 // pred_check_branch
          %2685 = sbr.rel (%p2683) target = $region140
        $region139: #{tpu_custom_call.1} parent=135 // pred_region
          %s2686 = sand.u32 %s227, 1
          %s2687 = scalar_lea.sflag [#allocation16], %s2686
          %s2688 = sand.u32 %s227, 1
          %s2689 = smul.addr %s2688, 32
          %s2690 = scalar_lea.vmem [#allocation23], %s2689
          %2691 = dma.done %s2687, 512
        $region140: #{tpu_custom_call.1} parent=135 // pred_fallthru
          _
      $region136: #{tpu_custom_call.1} parent=5 // pred_fallthru
        _
    $region6: #{tpu_custom_call.1} parent=1 // loop_footer
      %s39 = sadd.s32 1, %s35
    $region7: #{tpu_custom_call.1} parent=1 // loop_footer_branch
      %34 = sbr.rel target = $region3
    $region8: #{tpu_custom_call.1} parent=1 // loop_exit
      _
    %2692 = vsyncpa [#allocation15], 1
    %s2693 = scalar_lea.sflag [#allocation15], 1
    %2694 = vsyncpa %s2693, 1
    %2695 = vsyncpa [#allocation18], 1
    %2696 = vsyncpa [#allocation21], 1
    %2697 = vsyncpa [#allocation16], 1
    %s2698 = scalar_lea.sflag [#allocation16], 1
    %2699 = vsyncpa %s2698, 1
    %2700 = vsyncpa [#allocation25], 1
    %2701 = vsyncpa [#allocation28], 1
  %2702 = vsyncmov [#allocation10]
  %s2703 = vpop.sfrf %2702
  %p2704 = scmp.eq.s32.totalorder %s2703, 0
  %p2705 = pneg %p2704
  %2707 = shalt.err (%p2705)
  %s2708 = scalar_lea.sflag [#allocation10], 1
  %2709 = vsyncmov %s2708
  %s2710 = vpop.sfrf %2709
  %p2711 = scmp.eq.s32.totalorder %s2710, 0
  %p2712 = pneg %p2711
  %2714 = shalt.err (%p2712)
  %2715 = vsyncmov [#allocation11]
  %s2716 = vpop.sfrf %2715
  %p2717 = scmp.eq.s32.totalorder %s2716, 0
  %p2718 = pneg %p2717
  %2720 = shalt.err (%p2718)
  %s2721 = scalar_lea.sflag [#allocation11], 1
  %2722 = vsyncmov %s2721
  %s2723 = vpop.sfrf %2722
  %p2724 = scmp.eq.s32.totalorder %s2723, 0
  %p2725 = pneg %p2724
  %2727 = shalt.err (%p2725)

</llo_original>
